<compile_context>
chip_gen: v7x
topology: tpu7x:2x2x1
jax: 0.10.0
libtpu: 0.0.40
codegen_flags: <defaults>
</compile_context>

<pallas_src>
import functools

import jax
import jax.numpy as jnp
from jax import lax
from jax.experimental import pallas as pl
from jax.experimental.pallas import tpu as pltpu


# ----------------------------------------------------------------------------
# The fused Pallas kernel
# ----------------------------------------------------------------------------
def _sigmoid(x):
    # sigmoid(x) = 0.5*(tanh(x/2)+1): a single EUP op instead of exp + divide.
    return 0.5 * jnp.tanh(0.5 * x) + 0.5


def _lenet_kernel(p1_ref, w1_ref, b1_ref, w2_ref, b2_ref,
                  w1fc_ref, b1fc_ref, w2fc_ref, b2fc_ref, w3fc_ref, b3fc_ref,
                  out_ref, p2_ref, p3_ref, *, batch):
    n = batch
    m2 = 64 * n            # conv2-offset (k) slab width inside a1 (lanes)
    m3 = 16 * n            # pool2-corner slab width inside y2 (lanes)
    bf = jnp.bfloat16

    # ---- conv1: 4 per-pool1-corner matmuls with a running max (pool before
    #      bias+sigmoid).  acc stays (8, 1600n) f32 (~25n vregs, no spills). ----
    w1 = w1_ref[...]                                           # (8, 25) bf16
    acc = jnp.dot(w1, p1_ref[0], preferred_element_type=jnp.float32)
    for q in range(1, 4):
        acc = jnp.maximum(
            acc, jnp.dot(w1, p1_ref[q], preferred_element_type=jnp.float32))
    a1 = _sigmoid(acc + b1_ref[...]).astype(bf)                # (8, 1600n) bf16
    # columns of a1: (conv2-offset k, pool2-corner q2, i2, j2, batch)

    # ---- assemble conv2 im2col (200, 64n): 25 aligned 8-row slab stores ----
    for k in range(25):
        p2_ref[k * 8:(k + 1) * 8, :] = a1[:, k * m2:(k + 1) * m2]

    # ---- conv2 (one bf16 MXU matmul) -> pool2 -> bias -> sigmoid ----
    y2 = jnp.dot(w2_ref[...], p2_ref[...], preferred_element_type=jnp.float32)
    a2 = jnp.maximum(jnp.maximum(y2[:, 0:m3], y2[:, m3:2 * m3]),
                     jnp.maximum(y2[:, 2 * m3:3 * m3], y2[:, 3 * m3:4 * m3]))
    a2 = _sigmoid(a2 + b2_ref[...]).astype(bf)                 # (16, 16n) bf16
    # columns of a2: (spatial s = i2*4+j2, batch)

    # ---- "flatten": 16 sublane-aligned slab copies into the (256, n) feature
    #      matrix (rows ordered (s, c); fc1 weight rows are pre-permuted to
    #      match, so no in-kernel transpose/relayout is needed). ----
    for s in range(16):
        p3_ref[s * 16:(s + 1) * 16, :] = a2[:, s * n:(s + 1) * n]

    # ---- fc1 -> sigmoid -> fc2 -> sigmoid -> fc3 (transposed orientation:
    #      features/neurons on sublanes, batch on lanes; bf16 operands) ----
    h = jnp.dot(w1fc_ref[...], p3_ref[...], preferred_element_type=jnp.float32)
    h = _sigmoid(h + b1fc_ref[...]).astype(bf)                 # (128, n)
    h = jnp.dot(w2fc_ref[...], h, preferred_element_type=jnp.float32)
    h = _sigmoid(h + b2fc_ref[...]).astype(bf)                 # (128, n)
    out_ref[...] = (jnp.dot(w3fc_ref[...], h, preferred_element_type=jnp.float32)
                    + b3fc_ref[...])                           # (128, n) f32


# ----------------------------------------------------------------------------
# Input-side im2col (pure layout plumbing on the network input, done by XLA)
# ----------------------------------------------------------------------------
def _build_patches(x):
    """x: (N, 1, 28, 28) f32 -> conv1 patch tensor (4, 25, 1600*N) bf16.

    Axis 0 is the pool1 corner (so the kernel runs one matmul per corner and a
    running max).  Axis 1 is the conv1 5x5 patch offset.  The column order
    within each corner is (conv2-offset k, pool2-corner q2, i2, j2, batch) so
    that conv2-im2col assembly, pool2 and the FC flatten are all contiguous,
    aligned lane/row slabs inside the kernel.  Everything is bf16 from the
    start to halve the XLA-side im2col HBM traffic.
    """
    n = x.shape[0]
    img = x[:, 0].astype(jnp.bfloat16)                            # (N, 28, 28)
    corners = ((0, 0), (0, 1), (1, 0), (1, 1))
    # conv1 5x5 patch offsets                       -> (25, N, 24, 24)
    x1 = jnp.stack([img[:, r:r + 24, c:c + 24]
                    for r in range(5) for c in range(5)], axis=0)
    # pool1 window corners                          -> (4, 25, N, 12, 12)
    x2 = jnp.stack([x1[..., a::2, b::2] for a, b in corners], axis=0)
    # conv2 5x5 patch offsets                       -> (25, 4, 25, N, 8, 8)
    x3 = jnp.stack([x2[..., r:r + 8, c:c + 8]
                    for r in range(5) for c in range(5)], axis=0)
    # pool2 window corners                          -> (4, 25, 4, 25, N, 4, 4)
    x4 = jnp.stack([x3[..., e::2, f::2] for e, f in corners], axis=0)
    # axes (q2, k, q1, rc, n, i2, j2) -> (q1, rc, k, q2, i2, j2, n)
    p = x4.transpose(2, 3, 1, 0, 5, 6, 4)
    return p.reshape(4, 25, 1600 * n)


# ----------------------------------------------------------------------------
# Parameter prep (reshape / permute / zero padding, done once outside)
# ----------------------------------------------------------------------------
def _pad2d(a, rows, cols, dtype):
    out = jnp.zeros((rows, cols), dtype)
    return out.at[:a.shape[0], :a.shape[1]].set(a.astype(dtype))


def _prepare_params(params):
    # conv1: (6,1,5,5) -> (8,25) bf16 (rows 6,7 zero), bias (8,1) f32.
    w1 = _pad2d(params["conv1_w"].reshape(6, 25), 8, 25, jnp.bfloat16)
    b1 = _pad2d(params["conv1_b"].reshape(6, 1), 8, 1, jnp.float32)
    # conv2: (16,6,5,5) -> (16, dh, dw, cin) with cin padded 6->8 -> (16, 200);
    # zero columns at k*8+6 / k*8+7 keep the padded conv1 channels inert.
    w2 = jnp.zeros((16, 5, 5, 8), jnp.float32)
    w2 = w2.at[:, :, :, :6].set(params["conv2_w"].transpose(0, 2, 3, 1))
    w2 = w2.reshape(16, 200).astype(jnp.bfloat16)
    b2 = params["conv2_b"].reshape(16, 1).astype(jnp.float32)
    # fc1: permute input-feature order from PyTorch (c, s) to the kernel's
    # (s, c), pad output dim 120 -> 128.  (128, 256) bf16, bias (128,1) f32.
    w1fc = (params["fc1_w"].reshape(120, 16, 16).transpose(0, 2, 1)
            .reshape(120, 256))
    w1fc = _pad2d(w1fc, 128, 256, jnp.bfloat16)
    b1fc = _pad2d(params["fc1_b"].reshape(-1, 1), 128, 1, jnp.float32)
    # fc2 / fc3: zero-padded to (128,128); padded *columns* are zero so the
    # 0.5-valued padded rows of the previous activation never contaminate.
    w2fc = _pad2d(params["fc2_w"], 128, 128, jnp.bfloat16)      # (84,120)
    b2fc = _pad2d(params["fc2_b"].reshape(-1, 1), 128, 1, jnp.float32)
    w3fc = _pad2d(params["fc3_w"], 128, 128, jnp.bfloat16)      # (10, 84)
    b3fc = _pad2d(params["fc3_b"].reshape(-1, 1), 128, 1, jnp.float32)
    return (w1, b1, w2, b2, w1fc, b1fc, w2fc, b2fc, w3fc, b3fc)


def _full_spec(shape):
    return pl.BlockSpec(shape, lambda i: (0,) * len(shape))


# ----------------------------------------------------------------------------
# Forward pass
# ----------------------------------------------------------------------------
def lenet_forward(x, params):
    """x: (N, 1, 28, 28) float32 NCHW -> logits (N, 10)."""
    n = x.shape[0]
    p1 = _build_patches(x)
    kp = _prepare_params(params)
    kernel = functools.partial(_lenet_kernel, batch=n)

    flops = 2 * n * (8 * 25 * 6400 + 16 * 200 * 64 + 128 * 256 + 2 * 128 * 128)
    transcendentals = n * (8 * 1600 + 16 * 16 + 2 * 128)
    bytes_accessed = int(p1.size * p1.dtype.itemsize
                         + sum(a.size * a.dtype.itemsize for a in kp)
                         + 128 * n * 4)

    out = pl.pallas_call(
        kernel,
        out_shape=jax.ShapeDtypeStruct((128, n), jnp.float32),
        grid=(1,),
        in_specs=[_full_spec(a.shape) for a in (p1, *kp)],
        out_specs=_full_spec((128, n)),
        scratch_shapes=[
            pltpu.VMEM((200, 64 * n), jnp.bfloat16),   # conv2 im2col matrix
            pltpu.VMEM((256, n), jnp.bfloat16),        # flattened feature cols
        ],
        compiler_params=pltpu.CompilerParams(dimension_semantics=("arbitrary",)),
        cost_estimate=pl.CostEstimate(flops=int(flops),
                                      transcendentals=int(transcendentals),
                                      bytes_accessed=bytes_accessed),
    )(p1, *kp)
    # Kernel output is transposed (neurons on sublanes, batch on lanes).
    return out[:10, :].T


# ----------------------------------------------------------------------------
# Pure-JAX reference (mirrors the PyTorch module) + parameter init
# ----------------------------------------------------------------------------
def lenet_reference(x, params):
    def conv(x, w, b):
        dn = lax.conv_dimension_numbers(x.shape, w.shape, ("NCHW", "OIHW", "NCHW"))
        y = lax.conv_general_dilated(x, w, (1, 1), "VALID", dimension_numbers=dn)
        return y + b.reshape(1, -1, 1, 1)

    def pool(x):
        return lax.reduce_window(x, -jnp.inf, lax.max,
                                 (1, 1, 2, 2), (1, 1, 2, 2), "VALID")

    y = pool(jax.nn.sigmoid(conv(x, params["conv1_w"], params["conv1_b"])))
    y = pool(jax.nn.sigmoid(conv(y, params["conv2_w"], params["conv2_b"])))
    flat = y.reshape(x.shape[0], -1)
    h = jax.nn.sigmoid(flat @ params["fc1_w"].T + params["fc1_b"])
    h = jax.nn.sigmoid(h @ params["fc2_w"].T + params["fc2_b"])
    return h @ params["fc3_w"].T + params["fc3_b"]


def init_lenet_params(key):
    def _uniform(k, shape, fan_in):
        bound = 1.0 / jnp.sqrt(float(fan_in))
        return jax.random.uniform(k, shape, jnp.float32, -bound, bound)

    ks = jax.random.split(key, 10)
    return {
        "conv1_w": _uniform(ks[0], (6, 1, 5, 5), 1 * 5 * 5),
        "conv1_b": _uniform(ks[1], (6,), 1 * 5 * 5),
        "conv2_w": _uniform(ks[2], (16, 6, 5, 5), 6 * 5 * 5),
        "conv2_b": _uniform(ks[3], (16,), 6 * 5 * 5),
        "fc1_w": _uniform(ks[4], (120, 256), 256),
        "fc1_b": _uniform(ks[5], (120,), 256),
        "fc2_w": _uniform(ks[6], (84, 120), 120),
        "fc2_b": _uniform(ks[7], (84,), 120),
        "fc3_w": _uniform(ks[8], (10, 84), 84),
        "fc3_b": _uniform(ks[9], (10,), 84),
    }


if __name__ == "__main__":
    key = jax.random.PRNGKey(0)
    k_x, k_p = jax.random.split(key)
    # LeNet's fc block requires 28x28 input (16*4*4 = 256 features).
    x = jax.random.normal(k_x, (2, 1, 28, 28), jnp.float32)
    params = init_lenet_params(k_p)

    logits = jax.jit(lenet_forward)(x, params)
    logits = jax.block_until_ready(logits)
    assert logits.shape == (2, 10) and logits.dtype == jnp.float32

    ref = lenet_reference(x, params)
    err = float(jnp.max(jnp.abs(logits - ref)))
    # bf16 MXU operands (conv + fc) => small numerical delta vs f32 reference.
    assert err < 1e-1, f"max |kernel - reference| = {err}"
    print("KERNEL_OK")
</pallas_src>

<mosaic_0001>
module attributes {stable_mosaic.version = 11 : i64} {
  func.func @_lenet_kernel(%arg0: i32, %arg1: memref<4x25x3200xbf16, #tpu.memory_space<vmem>>, %arg2: memref<8x25xbf16, #tpu.memory_space<vmem>>, %arg3: memref<8x1xf32, #tpu.memory_space<vmem>>, %arg4: memref<16x200xbf16, #tpu.memory_space<vmem>>, %arg5: memref<16x1xf32, #tpu.memory_space<vmem>>, %arg6: memref<128x256xbf16, #tpu.memory_space<vmem>>, %arg7: memref<128x1xf32, #tpu.memory_space<vmem>>, %arg8: memref<128x128xbf16, #tpu.memory_space<vmem>>, %arg9: memref<128x1xf32, #tpu.memory_space<vmem>>, %arg10: memref<128x128xbf16, #tpu.memory_space<vmem>>, %arg11: memref<128x1xf32, #tpu.memory_space<vmem>>, %arg12: memref<128x2xf32, #tpu.memory_space<vmem>>, %arg13: memref<200x128xbf16, #tpu.memory_space<vmem>>, %arg14: memref<256x2xbf16, #tpu.memory_space<vmem>>) attributes {dimension_semantics = [#tpu.dimension_semantics<arbitrary>], iteration_bounds = array<i64: 1>, scalar_prefetch = 0 : i64, scratch_operands = 2 : i64, tpu.core_type = #tpu.core_type<tc>, window_params = [{pipeline_mode = #tpu.pipeline_mode<synchronous>, transform_indices = @transform_0, window_bounds = array<i64: 4, 25, 3200>}, {pipeline_mode = #tpu.pipeline_mode<synchronous>, transform_indices = @transform_1, window_bounds = array<i64: 8, 25>}, {pipeline_mode = #tpu.pipeline_mode<synchronous>, transform_indices = @transform_2, window_bounds = array<i64: 8, 1>}, {pipeline_mode = #tpu.pipeline_mode<synchronous>, transform_indices = @transform_3, window_bounds = array<i64: 16, 200>}, {pipeline_mode = #tpu.pipeline_mode<synchronous>, transform_indices = @transform_4, window_bounds = array<i64: 16, 1>}, {pipeline_mode = #tpu.pipeline_mode<synchronous>, transform_indices = @transform_5, window_bounds = array<i64: 128, 256>}, {pipeline_mode = #tpu.pipeline_mode<synchronous>, transform_indices = @transform_6, window_bounds = array<i64: 128, 1>}, {pipeline_mode = #tpu.pipeline_mode<synchronous>, transform_indices = @transform_7, window_bounds = array<i64: 128, 128>}, {pipeline_mode = #tpu.pipeline_mode<synchronous>, transform_indices = @transform_8, window_bounds = array<i64: 128, 1>}, {pipeline_mode = #tpu.pipeline_mode<synchronous>, transform_indices = @transform_9, window_bounds = array<i64: 128, 128>}, {pipeline_mode = #tpu.pipeline_mode<synchronous>, transform_indices = @transform_10, window_bounds = array<i64: 128, 1>}, {pipeline_mode = #tpu.pipeline_mode<synchronous>, transform_indices = @transform_11, window_bounds = array<i64: 128, 2>}]} {
    %c0 = arith.constant 0 : index
    %c0_0 = arith.constant 0 : index
    %0 = vector.load %arg2[%c0, %c0_0] : memref<8x25xbf16, #tpu.memory_space<vmem>>, vector<8x25xbf16>
    %c0_1 = arith.constant 0 : index
    %c0_2 = arith.constant 0 : index
    %c0_3 = arith.constant 0 : index
    %1 = vector.load %arg1[%c0_1, %c0_2, %c0_3] : memref<4x25x3200xbf16, #tpu.memory_space<vmem>>, vector<1x25x3200xbf16>
    %2 = vector.shape_cast %1 : vector<1x25x3200xbf16> to vector<25x3200xbf16>
    %cst = arith.constant dense<0.000000e+00> : vector<8x3200xf32>
    %3 = tpu.matmul %0, %2, %cst {dimension_numbers = #tpu.dot_dimension_numbers<[1], [0], [0], [1], [0, 0, 1, 1], [], []>} : vector<8x25xbf16>, vector<25x3200xbf16>, vector<8x3200xf32> -> vector<8x3200xf32>
    %c1 = arith.constant 1 : index
    %c0_4 = arith.constant 0 : index
    %c0_5 = arith.constant 0 : index
    %4 = vector.load %arg1[%c1, %c0_4, %c0_5] : memref<4x25x3200xbf16, #tpu.memory_space<vmem>>, vector<1x25x3200xbf16>
    %5 = vector.shape_cast %4 : vector<1x25x3200xbf16> to vector<25x3200xbf16>
    %cst_6 = arith.constant dense<0.000000e+00> : vector<8x3200xf32>
    %6 = tpu.matmul %0, %5, %cst_6 {dimension_numbers = #tpu.dot_dimension_numbers<[1], [0], [0], [1], [0, 0, 1, 1], [], []>} : vector<8x25xbf16>, vector<25x3200xbf16>, vector<8x3200xf32> -> vector<8x3200xf32>
    %7 = arith.maximumf %3, %6 : vector<8x3200xf32>
    %c2 = arith.constant 2 : index
    %c0_7 = arith.constant 0 : index
    %c0_8 = arith.constant 0 : index
    %8 = vector.load %arg1[%c2, %c0_7, %c0_8] : memref<4x25x3200xbf16, #tpu.memory_space<vmem>>, vector<1x25x3200xbf16>
    %9 = vector.shape_cast %8 : vector<1x25x3200xbf16> to vector<25x3200xbf16>
    %cst_9 = arith.constant dense<0.000000e+00> : vector<8x3200xf32>
    %10 = tpu.matmul %0, %9, %cst_9 {dimension_numbers = #tpu.dot_dimension_numbers<[1], [0], [0], [1], [0, 0, 1, 1], [], []>} : vector<8x25xbf16>, vector<25x3200xbf16>, vector<8x3200xf32> -> vector<8x3200xf32>
    %11 = arith.maximumf %7, %10 : vector<8x3200xf32>
    %c3 = arith.constant 3 : index
    %c0_10 = arith.constant 0 : index
    %c0_11 = arith.constant 0 : index
    %12 = vector.load %arg1[%c3, %c0_10, %c0_11] : memref<4x25x3200xbf16, #tpu.memory_space<vmem>>, vector<1x25x3200xbf16>
    %13 = vector.shape_cast %12 : vector<1x25x3200xbf16> to vector<25x3200xbf16>
    %cst_12 = arith.constant dense<0.000000e+00> : vector<8x3200xf32>
    %14 = tpu.matmul %0, %13, %cst_12 {dimension_numbers = #tpu.dot_dimension_numbers<[1], [0], [0], [1], [0, 0, 1, 1], [], []>} : vector<8x25xbf16>, vector<25x3200xbf16>, vector<8x3200xf32> -> vector<8x3200xf32>
    %15 = arith.maximumf %11, %14 : vector<8x3200xf32>
    %c0_13 = arith.constant 0 : index
    %c0_14 = arith.constant 0 : index
    %16 = vector.load %arg3[%c0_13, %c0_14] : memref<8x1xf32, #tpu.memory_space<vmem>>, vector<8x1xf32>
    %17 = vector.broadcast %16 : vector<8x1xf32> to vector<8x3200xf32>
    %18 = arith.addf %15, %17 : vector<8x3200xf32>
    %cst_15 = arith.constant 5.000000e-01 : f32
    %19 = vector.broadcast %cst_15 : f32 to vector<8x3200xf32>
    %20 = arith.mulf %19, %18 : vector<8x3200xf32>
    %21 = math.tanh %20 : vector<8x3200xf32>
    %cst_16 = arith.constant 5.000000e-01 : f32
    %22 = vector.broadcast %cst_16 : f32 to vector<8x3200xf32>
    %23 = arith.mulf %22, %21 : vector<8x3200xf32>
    %cst_17 = arith.constant 5.000000e-01 : f32
    %24 = vector.broadcast %cst_17 : f32 to vector<8x3200xf32>
    %25 = arith.addf %23, %24 : vector<8x3200xf32>
    %26 = arith.truncf %25 : vector<8x3200xf32> to vector<8x3200xbf16>
    %27 = vector.extract_strided_slice %26 {offsets = [0, 0], sizes = [8, 128], strides = [1, 1]} : vector<8x3200xbf16> to vector<8x128xbf16>
    %c0_18 = arith.constant 0 : index
    %c0_19 = arith.constant 0 : index
    %28 = vector.load %arg13[%c0_18, %c0_19] : memref<200x128xbf16, #tpu.memory_space<vmem>>, vector<8x128xbf16>
    tpu.vector_store %arg13[%c0_18, %c0_19], %27 {strides = array<i32>} : memref<200x128xbf16, #tpu.memory_space<vmem>>, vector<8x128xbf16>,
    %29 = vector.extract_strided_slice %26 {offsets = [0, 128], sizes = [8, 128], strides = [1, 1]} : vector<8x3200xbf16> to vector<8x128xbf16>
    %c8 = arith.constant 8 : index
    %c0_20 = arith.constant 0 : index
    %30 = vector.load %arg13[%c8, %c0_20] : memref<200x128xbf16, #tpu.memory_space<vmem>>, vector<8x128xbf16>
    tpu.vector_store %arg13[%c8, %c0_20], %29 {strides = array<i32>} : memref<200x128xbf16, #tpu.memory_space<vmem>>, vector<8x128xbf16>,
    %31 = vector.extract_strided_slice %26 {offsets = [0, 256], sizes = [8, 128], strides = [1, 1]} : vector<8x3200xbf16> to vector<8x128xbf16>
    %c16 = arith.constant 16 : index
    %c0_21 = arith.constant 0 : index
    %32 = vector.load %arg13[%c16, %c0_21] : memref<200x128xbf16, #tpu.memory_space<vmem>>, vector<8x128xbf16>
    tpu.vector_store %arg13[%c16, %c0_21], %31 {strides = array<i32>} : memref<200x128xbf16, #tpu.memory_space<vmem>>, vector<8x128xbf16>,
    %33 = vector.extract_strided_slice %26 {offsets = [0, 384], sizes = [8, 128], strides = [1, 1]} : vector<8x3200xbf16> to vector<8x128xbf16>
    %c24 = arith.constant 24 : index
    %c0_22 = arith.constant 0 : index
    %34 = vector.load %arg13[%c24, %c0_22] : memref<200x128xbf16, #tpu.memory_space<vmem>>, vector<8x128xbf16>
    tpu.vector_store %arg13[%c24, %c0_22], %33 {strides = array<i32>} : memref<200x128xbf16, #tpu.memory_space<vmem>>, vector<8x128xbf16>,
    %35 = vector.extract_strided_slice %26 {offsets = [0, 512], sizes = [8, 128], strides = [1, 1]} : vector<8x3200xbf16> to vector<8x128xbf16>
    %c32 = arith.constant 32 : index
    %c0_23 = arith.constant 0 : index
    %36 = vector.load %arg13[%c32, %c0_23] : memref<200x128xbf16, #tpu.memory_space<vmem>>, vector<8x128xbf16>
    tpu.vector_store %arg13[%c32, %c0_23], %35 {strides = array<i32>} : memref<200x128xbf16, #tpu.memory_space<vmem>>, vector<8x128xbf16>,
    %37 = vector.extract_strided_slice %26 {offsets = [0, 640], sizes = [8, 128], strides = [1, 1]} : vector<8x3200xbf16> to vector<8x128xbf16>
    %c40 = arith.constant 40 : index
    %c0_24 = arith.constant 0 : index
    %38 = vector.load %arg13[%c40, %c0_24] : memref<200x128xbf16, #tpu.memory_space<vmem>>, vector<8x128xbf16>
    tpu.vector_store %arg13[%c40, %c0_24], %37 {strides = array<i32>} : memref<200x128xbf16, #tpu.memory_space<vmem>>, vector<8x128xbf16>,
    %39 = vector.extract_strided_slice %26 {offsets = [0, 768], sizes = [8, 128], strides = [1, 1]} : vector<8x3200xbf16> to vector<8x128xbf16>
    %c48 = arith.constant 48 : index
    %c0_25 = arith.constant 0 : index
    %40 = vector.load %arg13[%c48, %c0_25] : memref<200x128xbf16, #tpu.memory_space<vmem>>, vector<8x128xbf16>
    tpu.vector_store %arg13[%c48, %c0_25], %39 {strides = array<i32>} : memref<200x128xbf16, #tpu.memory_space<vmem>>, vector<8x128xbf16>,
    %41 = vector.extract_strided_slice %26 {offsets = [0, 896], sizes = [8, 128], strides = [1, 1]} : vector<8x3200xbf16> to vector<8x128xbf16>
    %c56 = arith.constant 56 : index
    %c0_26 = arith.constant 0 : index
    %42 = vector.load %arg13[%c56, %c0_26] : memref<200x128xbf16, #tpu.memory_space<vmem>>, vector<8x128xbf16>
    tpu.vector_store %arg13[%c56, %c0_26], %41 {strides = array<i32>} : memref<200x128xbf16, #tpu.memory_space<vmem>>, vector<8x128xbf16>,
    %43 = vector.extract_strided_slice %26 {offsets = [0, 1024], sizes = [8, 128], strides = [1, 1]} : vector<8x3200xbf16> to vector<8x128xbf16>
    %c64 = arith.constant 64 : index
    %c0_27 = arith.constant 0 : index
    %44 = vector.load %arg13[%c64, %c0_27] : memref<200x128xbf16, #tpu.memory_space<vmem>>, vector<8x128xbf16>
    tpu.vector_store %arg13[%c64, %c0_27], %43 {strides = array<i32>} : memref<200x128xbf16, #tpu.memory_space<vmem>>, vector<8x128xbf16>,
    %45 = vector.extract_strided_slice %26 {offsets = [0, 1152], sizes = [8, 128], strides = [1, 1]} : vector<8x3200xbf16> to vector<8x128xbf16>
    %c72 = arith.constant 72 : index
    %c0_28 = arith.constant 0 : index
    %46 = vector.load %arg13[%c72, %c0_28] : memref<200x128xbf16, #tpu.memory_space<vmem>>, vector<8x128xbf16>
    tpu.vector_store %arg13[%c72, %c0_28], %45 {strides = array<i32>} : memref<200x128xbf16, #tpu.memory_space<vmem>>, vector<8x128xbf16>,
    %47 = vector.extract_strided_slice %26 {offsets = [0, 1280], sizes = [8, 128], strides = [1, 1]} : vector<8x3200xbf16> to vector<8x128xbf16>
    %c80 = arith.constant 80 : index
    %c0_29 = arith.constant 0 : index
    %48 = vector.load %arg13[%c80, %c0_29] : memref<200x128xbf16, #tpu.memory_space<vmem>>, vector<8x128xbf16>
    tpu.vector_store %arg13[%c80, %c0_29], %47 {strides = array<i32>} : memref<200x128xbf16, #tpu.memory_space<vmem>>, vector<8x128xbf16>,
    %49 = vector.extract_strided_slice %26 {offsets = [0, 1408], sizes = [8, 128], strides = [1, 1]} : vector<8x3200xbf16> to vector<8x128xbf16>
    %c88 = arith.constant 88 : index
    %c0_30 = arith.constant 0 : index
    %50 = vector.load %arg13[%c88, %c0_30] : memref<200x128xbf16, #tpu.memory_space<vmem>>, vector<8x128xbf16>
    tpu.vector_store %arg13[%c88, %c0_30], %49 {strides = array<i32>} : memref<200x128xbf16, #tpu.memory_space<vmem>>, vector<8x128xbf16>,
    %51 = vector.extract_strided_slice %26 {offsets = [0, 1536], sizes = [8, 128], strides = [1, 1]} : vector<8x3200xbf16> to vector<8x128xbf16>
    %c96 = arith.constant 96 : index
    %c0_31 = arith.constant 0 : index
    %52 = vector.load %arg13[%c96, %c0_31] : memref<200x128xbf16, #tpu.memory_space<vmem>>, vector<8x128xbf16>
    tpu.vector_store %arg13[%c96, %c0_31], %51 {strides = array<i32>} : memref<200x128xbf16, #tpu.memory_space<vmem>>, vector<8x128xbf16>,
    %53 = vector.extract_strided_slice %26 {offsets = [0, 1664], sizes = [8, 128], strides = [1, 1]} : vector<8x3200xbf16> to vector<8x128xbf16>
    %c104 = arith.constant 104 : index
    %c0_32 = arith.constant 0 : index
    %54 = vector.load %arg13[%c104, %c0_32] : memref<200x128xbf16, #tpu.memory_space<vmem>>, vector<8x128xbf16>
    tpu.vector_store %arg13[%c104, %c0_32], %53 {strides = array<i32>} : memref<200x128xbf16, #tpu.memory_space<vmem>>, vector<8x128xbf16>,
    %55 = vector.extract_strided_slice %26 {offsets = [0, 1792], sizes = [8, 128], strides = [1, 1]} : vector<8x3200xbf16> to vector<8x128xbf16>
    %c112 = arith.constant 112 : index
    %c0_33 = arith.constant 0 : index
    %56 = vector.load %arg13[%c112, %c0_33] : memref<200x128xbf16, #tpu.memory_space<vmem>>, vector<8x128xbf16>
    tpu.vector_store %arg13[%c112, %c0_33], %55 {strides = array<i32>} : memref<200x128xbf16, #tpu.memory_space<vmem>>, vector<8x128xbf16>,
    %57 = vector.extract_strided_slice %26 {offsets = [0, 1920], sizes = [8, 128], strides = [1, 1]} : vector<8x3200xbf16> to vector<8x128xbf16>
    %c120 = arith.constant 120 : index
    %c0_34 = arith.constant 0 : index
    %58 = vector.load %arg13[%c120, %c0_34] : memref<200x128xbf16, #tpu.memory_space<vmem>>, vector<8x128xbf16>
    tpu.vector_store %arg13[%c120, %c0_34], %57 {strides = array<i32>} : memref<200x128xbf16, #tpu.memory_space<vmem>>, vector<8x128xbf16>,
    %59 = vector.extract_strided_slice %26 {offsets = [0, 2048], sizes = [8, 128], strides = [1, 1]} : vector<8x3200xbf16> to vector<8x128xbf16>
    %c128 = arith.constant 128 : index
    %c0_35 = arith.constant 0 : index
    %60 = vector.load %arg13[%c128, %c0_35] : memref<200x128xbf16, #tpu.memory_space<vmem>>, vector<8x128xbf16>
    tpu.vector_store %arg13[%c128, %c0_35], %59 {strides = array<i32>} : memref<200x128xbf16, #tpu.memory_space<vmem>>, vector<8x128xbf16>,
    %61 = vector.extract_strided_slice %26 {offsets = [0, 2176], sizes = [8, 128], strides = [1, 1]} : vector<8x3200xbf16> to vector<8x128xbf16>
    %c136 = arith.constant 136 : index
    %c0_36 = arith.constant 0 : index
    %62 = vector.load %arg13[%c136, %c0_36] : memref<200x128xbf16, #tpu.memory_space<vmem>>, vector<8x128xbf16>
    tpu.vector_store %arg13[%c136, %c0_36], %61 {strides = array<i32>} : memref<200x128xbf16, #tpu.memory_space<vmem>>, vector<8x128xbf16>,
    %63 = vector.extract_strided_slice %26 {offsets = [0, 2304], sizes = [8, 128], strides = [1, 1]} : vector<8x3200xbf16> to vector<8x128xbf16>
    %c144 = arith.constant 144 : index
    %c0_37 = arith.constant 0 : index
    %64 = vector.load %arg13[%c144, %c0_37] : memref<200x128xbf16, #tpu.memory_space<vmem>>, vector<8x128xbf16>
    tpu.vector_store %arg13[%c144, %c0_37], %63 {strides = array<i32>} : memref<200x128xbf16, #tpu.memory_space<vmem>>, vector<8x128xbf16>,
    %65 = vector.extract_strided_slice %26 {offsets = [0, 2432], sizes = [8, 128], strides = [1, 1]} : vector<8x3200xbf16> to vector<8x128xbf16>
    %c152 = arith.constant 152 : index
    %c0_38 = arith.constant 0 : index
    %66 = vector.load %arg13[%c152, %c0_38] : memref<200x128xbf16, #tpu.memory_space<vmem>>, vector<8x128xbf16>
    tpu.vector_store %arg13[%c152, %c0_38], %65 {strides = array<i32>} : memref<200x128xbf16, #tpu.memory_space<vmem>>, vector<8x128xbf16>,
    %67 = vector.extract_strided_slice %26 {offsets = [0, 2560], sizes = [8, 128], strides = [1, 1]} : vector<8x3200xbf16> to vector<8x128xbf16>
    %c160 = arith.constant 160 : index
    %c0_39 = arith.constant 0 : index
    %68 = vector.load %arg13[%c160, %c0_39] : memref<200x128xbf16, #tpu.memory_space<vmem>>, vector<8x128xbf16>
    tpu.vector_store %arg13[%c160, %c0_39], %67 {strides = array<i32>} : memref<200x128xbf16, #tpu.memory_space<vmem>>, vector<8x128xbf16>,
    %69 = vector.extract_strided_slice %26 {offsets = [0, 2688], sizes = [8, 128], strides = [1, 1]} : vector<8x3200xbf16> to vector<8x128xbf16>
    %c168 = arith.constant 168 : index
    %c0_40 = arith.constant 0 : index
    %70 = vector.load %arg13[%c168, %c0_40] : memref<200x128xbf16, #tpu.memory_space<vmem>>, vector<8x128xbf16>
    tpu.vector_store %arg13[%c168, %c0_40], %69 {strides = array<i32>} : memref<200x128xbf16, #tpu.memory_space<vmem>>, vector<8x128xbf16>,
    %71 = vector.extract_strided_slice %26 {offsets = [0, 2816], sizes = [8, 128], strides = [1, 1]} : vector<8x3200xbf16> to vector<8x128xbf16>
    %c176 = arith.constant 176 : index
    %c0_41 = arith.constant 0 : index
    %72 = vector.load %arg13[%c176, %c0_41] : memref<200x128xbf16, #tpu.memory_space<vmem>>, vector<8x128xbf16>
    tpu.vector_store %arg13[%c176, %c0_41], %71 {strides = array<i32>} : memref<200x128xbf16, #tpu.memory_space<vmem>>, vector<8x128xbf16>,
    %73 = vector.extract_strided_slice %26 {offsets = [0, 2944], sizes = [8, 128], strides = [1, 1]} : vector<8x3200xbf16> to vector<8x128xbf16>
    %c184 = arith.constant 184 : index
    %c0_42 = arith.constant 0 : index
    %74 = vector.load %arg13[%c184, %c0_42] : memref<200x128xbf16, #tpu.memory_space<vmem>>, vector<8x128xbf16>
    tpu.vector_store %arg13[%c184, %c0_42], %73 {strides = array<i32>} : memref<200x128xbf16, #tpu.memory_space<vmem>>, vector<8x128xbf16>,
    %75 = vector.extract_strided_slice %26 {offsets = [0, 3072], sizes = [8, 128], strides = [1, 1]} : vector<8x3200xbf16> to vector<8x128xbf16>
    %c192 = arith.constant 192 : index
    %c0_43 = arith.constant 0 : index
    %76 = vector.load %arg13[%c192, %c0_43] : memref<200x128xbf16, #tpu.memory_space<vmem>>, vector<8x128xbf16>
    tpu.vector_store %arg13[%c192, %c0_43], %75 {strides = array<i32>} : memref<200x128xbf16, #tpu.memory_space<vmem>>, vector<8x128xbf16>,
    %c0_44 = arith.constant 0 : index
    %c0_45 = arith.constant 0 : index
    %77 = vector.load %arg4[%c0_44, %c0_45] : memref<16x200xbf16, #tpu.memory_space<vmem>>, vector<16x200xbf16>
    %c0_46 = arith.constant 0 : index
    %c0_47 = arith.constant 0 : index
    %78 = vector.load %arg13[%c0_46, %c0_47] : memref<200x128xbf16, #tpu.memory_space<vmem>>, vector<200x128xbf16>
    %cst_48 = arith.constant dense<0.000000e+00> : vector<16x128xf32>
    %79 = tpu.matmul %77, %78, %cst_48 {dimension_numbers = #tpu.dot_dimension_numbers<[1], [0], [0], [1], [0, 0, 1, 1], [], []>} : vector<16x200xbf16>, vector<200x128xbf16>, vector<16x128xf32> -> vector<16x128xf32>
    %80 = vector.extract_strided_slice %79 {offsets = [0, 0], sizes = [16, 32], strides = [1, 1]} : vector<16x128xf32> to vector<16x32xf32>
    %81 = vector.extract_strided_slice %79 {offsets = [0, 32], sizes = [16, 32], strides = [1, 1]} : vector<16x128xf32> to vector<16x32xf32>
    %82 = arith.maximumf %80, %81 : vector<16x32xf32>
    %83 = vector.extract_strided_slice %79 {offsets = [0, 64], sizes = [16, 32], strides = [1, 1]} : vector<16x128xf32> to vector<16x32xf32>
    %84 = vector.extract_strided_slice %79 {offsets = [0, 96], sizes = [16, 32], strides = [1, 1]} : vector<16x128xf32> to vector<16x32xf32>
    %85 = arith.maximumf %83, %84 : vector<16x32xf32>
    %86 = arith.maximumf %82, %85 : vector<16x32xf32>
    %c0_49 = arith.constant 0 : index
    %c0_50 = arith.constant 0 : index
    %87 = vector.load %arg5[%c0_49, %c0_50] : memref<16x1xf32, #tpu.memory_space<vmem>>, vector<16x1xf32>
    %88 = vector.broadcast %87 : vector<16x1xf32> to vector<16x32xf32>
    %89 = arith.addf %86, %88 : vector<16x32xf32>
    %cst_51 = arith.constant 5.000000e-01 : f32
    %90 = vector.broadcast %cst_51 : f32 to vector<16x32xf32>
    %91 = arith.mulf %90, %89 : vector<16x32xf32>
    %92 = math.tanh %91 : vector<16x32xf32>
    %cst_52 = arith.constant 5.000000e-01 : f32
    %93 = vector.broadcast %cst_52 : f32 to vector<16x32xf32>
    %94 = arith.mulf %93, %92 : vector<16x32xf32>
    %cst_53 = arith.constant 5.000000e-01 : f32
    %95 = vector.broadcast %cst_53 : f32 to vector<16x32xf32>
    %96 = arith.addf %94, %95 : vector<16x32xf32>
    %97 = arith.truncf %96 : vector<16x32xf32> to vector<16x32xbf16>
    %98 = vector.extract_strided_slice %97 {offsets = [0, 0], sizes = [16, 2], strides = [1, 1]} : vector<16x32xbf16> to vector<16x2xbf16>
    %c0_54 = arith.constant 0 : index
    %c0_55 = arith.constant 0 : index
    %99 = vector.load %arg14[%c0_54, %c0_55] : memref<256x2xbf16, #tpu.memory_space<vmem>>, vector<16x2xbf16>
    tpu.vector_store %arg14[%c0_54, %c0_55], %98 {strides = array<i32>} : memref<256x2xbf16, #tpu.memory_space<vmem>>, vector<16x2xbf16>,
    %100 = vector.extract_strided_slice %97 {offsets = [0, 2], sizes = [16, 2], strides = [1, 1]} : vector<16x32xbf16> to vector<16x2xbf16>
    %c16_56 = arith.constant 16 : index
    %c0_57 = arith.constant 0 : index
    %101 = vector.load %arg14[%c16_56, %c0_57] : memref<256x2xbf16, #tpu.memory_space<vmem>>, vector<16x2xbf16>
    tpu.vector_store %arg14[%c16_56, %c0_57], %100 {strides = array<i32>} : memref<256x2xbf16, #tpu.memory_space<vmem>>, vector<16x2xbf16>,
    %102 = vector.extract_strided_slice %97 {offsets = [0, 4], sizes = [16, 2], strides = [1, 1]} : vector<16x32xbf16> to vector<16x2xbf16>
    %c32_58 = arith.constant 32 : index
    %c0_59 = arith.constant 0 : index
    %103 = vector.load %arg14[%c32_58, %c0_59] : memref<256x2xbf16, #tpu.memory_space<vmem>>, vector<16x2xbf16>
    tpu.vector_store %arg14[%c32_58, %c0_59], %102 {strides = array<i32>} : memref<256x2xbf16, #tpu.memory_space<vmem>>, vector<16x2xbf16>,
    %104 = vector.extract_strided_slice %97 {offsets = [0, 6], sizes = [16, 2], strides = [1, 1]} : vector<16x32xbf16> to vector<16x2xbf16>
    %c48_60 = arith.constant 48 : index
    %c0_61 = arith.constant 0 : index
    %105 = vector.load %arg14[%c48_60, %c0_61] : memref<256x2xbf16, #tpu.memory_space<vmem>>, vector<16x2xbf16>
    tpu.vector_store %arg14[%c48_60, %c0_61], %104 {strides = array<i32>} : memref<256x2xbf16, #tpu.memory_space<vmem>>, vector<16x2xbf16>,
    %106 = vector.extract_strided_slice %97 {offsets = [0, 8], sizes = [16, 2], strides = [1, 1]} : vector<16x32xbf16> to vector<16x2xbf16>
    %c64_62 = arith.constant 64 : index
    %c0_63 = arith.constant 0 : index
    %107 = vector.load %arg14[%c64_62, %c0_63] : memref<256x2xbf16, #tpu.memory_space<vmem>>, vector<16x2xbf16>
    tpu.vector_store %arg14[%c64_62, %c0_63], %106 {strides = array<i32>} : memref<256x2xbf16, #tpu.memory_space<vmem>>, vector<16x2xbf16>,
    %108 = vector.extract_strided_slice %97 {offsets = [0, 10], sizes = [16, 2], strides = [1, 1]} : vector<16x32xbf16> to vector<16x2xbf16>
    %c80_64 = arith.constant 80 : index
    %c0_65 = arith.constant 0 : index
    %109 = vector.load %arg14[%c80_64, %c0_65] : memref<256x2xbf16, #tpu.memory_space<vmem>>, vector<16x2xbf16>
    tpu.vector_store %arg14[%c80_64, %c0_65], %108 {strides = array<i32>} : memref<256x2xbf16, #tpu.memory_space<vmem>>, vector<16x2xbf16>,
    %110 = vector.extract_strided_slice %97 {offsets = [0, 12], sizes = [16, 2], strides = [1, 1]} : vector<16x32xbf16> to vector<16x2xbf16>
    %c96_66 = arith.constant 96 : index
    %c0_67 = arith.constant 0 : index
    %111 = vector.load %arg14[%c96_66, %c0_67] : memref<256x2xbf16, #tpu.memory_space<vmem>>, vector<16x2xbf16>
    tpu.vector_store %arg14[%c96_66, %c0_67], %110 {strides = array<i32>} : memref<256x2xbf16, #tpu.memory_space<vmem>>, vector<16x2xbf16>,
    %112 = vector.extract_strided_slice %97 {offsets = [0, 14], sizes = [16, 2], strides = [1, 1]} : vector<16x32xbf16> to vector<16x2xbf16>
    %c112_68 = arith.constant 112 : index
    %c0_69 = arith.constant 0 : index
    %113 = vector.load %arg14[%c112_68, %c0_69] : memref<256x2xbf16, #tpu.memory_space<vmem>>, vector<16x2xbf16>
    tpu.vector_store %arg14[%c112_68, %c0_69], %112 {strides = array<i32>} : memref<256x2xbf16, #tpu.memory_space<vmem>>, vector<16x2xbf16>,
    %114 = vector.extract_strided_slice %97 {offsets = [0, 16], sizes = [16, 2], strides = [1, 1]} : vector<16x32xbf16> to vector<16x2xbf16>
    %c128_70 = arith.constant 128 : index
    %c0_71 = arith.constant 0 : index
    %115 = vector.load %arg14[%c128_70, %c0_71] : memref<256x2xbf16, #tpu.memory_space<vmem>>, vector<16x2xbf16>
    tpu.vector_store %arg14[%c128_70, %c0_71], %114 {strides = array<i32>} : memref<256x2xbf16, #tpu.memory_space<vmem>>, vector<16x2xbf16>,
    %116 = vector.extract_strided_slice %97 {offsets = [0, 18], sizes = [16, 2], strides = [1, 1]} : vector<16x32xbf16> to vector<16x2xbf16>
    %c144_72 = arith.constant 144 : index
    %c0_73 = arith.constant 0 : index
    %117 = vector.load %arg14[%c144_72, %c0_73] : memref<256x2xbf16, #tpu.memory_space<vmem>>, vector<16x2xbf16>
    tpu.vector_store %arg14[%c144_72, %c0_73], %116 {strides = array<i32>} : memref<256x2xbf16, #tpu.memory_space<vmem>>, vector<16x2xbf16>,
    %118 = vector.extract_strided_slice %97 {offsets = [0, 20], sizes = [16, 2], strides = [1, 1]} : vector<16x32xbf16> to vector<16x2xbf16>
    %c160_74 = arith.constant 160 : index
    %c0_75 = arith.constant 0 : index
    %119 = vector.load %arg14[%c160_74, %c0_75] : memref<256x2xbf16, #tpu.memory_space<vmem>>, vector<16x2xbf16>
    tpu.vector_store %arg14[%c160_74, %c0_75], %118 {strides = array<i32>} : memref<256x2xbf16, #tpu.memory_space<vmem>>, vector<16x2xbf16>,
    %120 = vector.extract_strided_slice %97 {offsets = [0, 22], sizes = [16, 2], strides = [1, 1]} : vector<16x32xbf16> to vector<16x2xbf16>
    %c176_76 = arith.constant 176 : index
    %c0_77 = arith.constant 0 : index
    %121 = vector.load %arg14[%c176_76, %c0_77] : memref<256x2xbf16, #tpu.memory_space<vmem>>, vector<16x2xbf16>
    tpu.vector_store %arg14[%c176_76, %c0_77], %120 {strides = array<i32>} : memref<256x2xbf16, #tpu.memory_space<vmem>>, vector<16x2xbf16>,
    %122 = vector.extract_strided_slice %97 {offsets = [0, 24], sizes = [16, 2], strides = [1, 1]} : vector<16x32xbf16> to vector<16x2xbf16>
    %c192_78 = arith.constant 192 : index
    %c0_79 = arith.constant 0 : index
    %123 = vector.load %arg14[%c192_78, %c0_79] : memref<256x2xbf16, #tpu.memory_space<vmem>>, vector<16x2xbf16>
    tpu.vector_store %arg14[%c192_78, %c0_79], %122 {strides = array<i32>} : memref<256x2xbf16, #tpu.memory_space<vmem>>, vector<16x2xbf16>,
    %124 = vector.extract_strided_slice %97 {offsets = [0, 26], sizes = [16, 2], strides = [1, 1]} : vector<16x32xbf16> to vector<16x2xbf16>
    %c208 = arith.constant 208 : index
    %c0_80 = arith.constant 0 : index
    %125 = vector.load %arg14[%c208, %c0_80] : memref<256x2xbf16, #tpu.memory_space<vmem>>, vector<16x2xbf16>
    tpu.vector_store %arg14[%c208, %c0_80], %124 {strides = array<i32>} : memref<256x2xbf16, #tpu.memory_space<vmem>>, vector<16x2xbf16>,
    %126 = vector.extract_strided_slice %97 {offsets = [0, 28], sizes = [16, 2], strides = [1, 1]} : vector<16x32xbf16> to vector<16x2xbf16>
    %c224 = arith.constant 224 : index
    %c0_81 = arith.constant 0 : index
    %127 = vector.load %arg14[%c224, %c0_81] : memref<256x2xbf16, #tpu.memory_space<vmem>>, vector<16x2xbf16>
    tpu.vector_store %arg14[%c224, %c0_81], %126 {strides = array<i32>} : memref<256x2xbf16, #tpu.memory_space<vmem>>, vector<16x2xbf16>,
    %128 = vector.extract_strided_slice %97 {offsets = [0, 30], sizes = [16, 2], strides = [1, 1]} : vector<16x32xbf16> to vector<16x2xbf16>
    %c240 = arith.constant 240 : index
    %c0_82 = arith.constant 0 : index
    %129 = vector.load %arg14[%c240, %c0_82] : memref<256x2xbf16, #tpu.memory_space<vmem>>, vector<16x2xbf16>
    tpu.vector_store %arg14[%c240, %c0_82], %128 {strides = array<i32>} : memref<256x2xbf16, #tpu.memory_space<vmem>>, vector<16x2xbf16>,
    %c0_83 = arith.constant 0 : index
    %c0_84 = arith.constant 0 : index
    %130 = vector.load %arg6[%c0_83, %c0_84] : memref<128x256xbf16, #tpu.memory_space<vmem>>, vector<128x256xbf16>
    %c0_85 = arith.constant 0 : index
    %c0_86 = arith.constant 0 : index
    %131 = vector.load %arg14[%c0_85, %c0_86] : memref<256x2xbf16, #tpu.memory_space<vmem>>, vector<256x2xbf16>
    %cst_87 = arith.constant dense<0.000000e+00> : vector<128x2xf32>
    %132 = tpu.matmul %130, %131, %cst_87 {dimension_numbers = #tpu.dot_dimension_numbers<[1], [0], [0], [1], [0, 0, 1, 1], [], []>} : vector<128x256xbf16>, vector<256x2xbf16>, vector<128x2xf32> -> vector<128x2xf32>
    %c0_88 = arith.constant 0 : index
    %c0_89 = arith.constant 0 : index
    %133 = vector.load %arg7[%c0_88, %c0_89] : memref<128x1xf32, #tpu.memory_space<vmem>>, vector<128x1xf32>
    %134 = vector.broadcast %133 : vector<128x1xf32> to vector<128x2xf32>
    %135 = arith.addf %132, %134 : vector<128x2xf32>
    %cst_90 = arith.constant 5.000000e-01 : f32
    %136 = vector.broadcast %cst_90 : f32 to vector<128x2xf32>
    %137 = arith.mulf %136, %135 : vector<128x2xf32>
    %138 = math.tanh %137 : vector<128x2xf32>
    %cst_91 = arith.constant 5.000000e-01 : f32
    %139 = vector.broadcast %cst_91 : f32 to vector<128x2xf32>
    %140 = arith.mulf %139, %138 : vector<128x2xf32>
    %cst_92 = arith.constant 5.000000e-01 : f32
    %141 = vector.broadcast %cst_92 : f32 to vector<128x2xf32>
    %142 = arith.addf %140, %141 : vector<128x2xf32>
    %143 = arith.truncf %142 : vector<128x2xf32> to vector<128x2xbf16>
    %c0_93 = arith.constant 0 : index
    %c0_94 = arith.constant 0 : index
    %144 = vector.load %arg8[%c0_93, %c0_94] : memref<128x128xbf16, #tpu.memory_space<vmem>>, vector<128x128xbf16>
    %cst_95 = arith.constant dense<0.000000e+00> : vector<128x2xf32>
    %145 = tpu.matmul %144, %143, %cst_95 {dimension_numbers = #tpu.dot_dimension_numbers<[1], [0], [0], [1], [0, 0, 1, 1], [], []>} : vector<128x128xbf16>, vector<128x2xbf16>, vector<128x2xf32> -> vector<128x2xf32>
    %c0_96 = arith.constant 0 : index
    %c0_97 = arith.constant 0 : index
    %146 = vector.load %arg9[%c0_96, %c0_97] : memref<128x1xf32, #tpu.memory_space<vmem>>, vector<128x1xf32>
    %147 = vector.broadcast %146 : vector<128x1xf32> to vector<128x2xf32>
    %148 = arith.addf %145, %147 : vector<128x2xf32>
    %cst_98 = arith.constant 5.000000e-01 : f32
    %149 = vector.broadcast %cst_98 : f32 to vector<128x2xf32>
    %150 = arith.mulf %149, %148 : vector<128x2xf32>
    %151 = math.tanh %150 : vector<128x2xf32>
    %cst_99 = arith.constant 5.000000e-01 : f32
    %152 = vector.broadcast %cst_99 : f32 to vector<128x2xf32>
    %153 = arith.mulf %152, %151 : vector<128x2xf32>
    %cst_100 = arith.constant 5.000000e-01 : f32
    %154 = vector.broadcast %cst_100 : f32 to vector<128x2xf32>
    %155 = arith.addf %153, %154 : vector<128x2xf32>
    %156 = arith.truncf %155 : vector<128x2xf32> to vector<128x2xbf16>
    %c0_101 = arith.constant 0 : index
    %c0_102 = arith.constant 0 : index
    %157 = vector.load %arg10[%c0_101, %c0_102] : memref<128x128xbf16, #tpu.memory_space<vmem>>, vector<128x128xbf16>
    %cst_103 = arith.constant dense<0.000000e+00> : vector<128x2xf32>
    %158 = tpu.matmul %157, %156, %cst_103 {dimension_numbers = #tpu.dot_dimension_numbers<[1], [0], [0], [1], [0, 0, 1, 1], [], []>} : vector<128x128xbf16>, vector<128x2xbf16>, vector<128x2xf32> -> vector<128x2xf32>
    %c0_104 = arith.constant 0 : index
    %c0_105 = arith.constant 0 : index
    %159 = vector.load %arg11[%c0_104, %c0_105] : memref<128x1xf32, #tpu.memory_space<vmem>>, vector<128x1xf32>
    %160 = vector.broadcast %159 : vector<128x1xf32> to vector<128x2xf32>
    %161 = arith.addf %158, %160 : vector<128x2xf32>
    %c0_106 = arith.constant 0 : index
    %c0_107 = arith.constant 0 : index
    %162 = vector.load %arg12[%c0_106, %c0_107] : memref<128x2xf32, #tpu.memory_space<vmem>>, vector<128x2xf32>
    tpu.vector_store %arg12[%c0_106, %c0_107], %161 {strides = array<i32>} : memref<128x2xf32, #tpu.memory_space<vmem>>, vector<128x2xf32>,
    return
  }
  func.func @transform_0(%arg0: i32) -> (i32, i32, i32) {
    %c0_i32 = arith.constant 0 : i32
    %c0_i32_0 = arith.constant 0 : i32
    %c0_i32_1 = arith.constant 0 : i32
    %c0_i32_2 = arith.constant 0 : i32
    return %c0_i32, %c0_i32_0, %c0_i32_1 : i32, i32, i32
  }
  func.func @transform_1(%arg0: i32) -> (i32, i32) {
    %c0_i32 = arith.constant 0 : i32
    %c0_i32_0 = arith.constant 0 : i32
    %c0_i32_1 = arith.constant 0 : i32
    return %c0_i32, %c0_i32_0 : i32, i32
  }
  func.func @transform_2(%arg0: i32) -> (i32, i32) {
    %c0_i32 = arith.constant 0 : i32
    %c0_i32_0 = arith.constant 0 : i32
    %c0_i32_1 = arith.constant 0 : i32
    return %c0_i32, %c0_i32_0 : i32, i32
  }
  func.func @transform_3(%arg0: i32) -> (i32, i32) {
    %c0_i32 = arith.constant 0 : i32
    %c0_i32_0 = arith.constant 0 : i32
    %c0_i32_1 = arith.constant 0 : i32
    return %c0_i32, %c0_i32_0 : i32, i32
  }
  func.func @transform_4(%arg0: i32) -> (i32, i32) {
    %c0_i32 = arith.constant 0 : i32
    %c0_i32_0 = arith.constant 0 : i32
    %c0_i32_1 = arith.constant 0 : i32
    return %c0_i32, %c0_i32_0 : i32, i32
  }
  func.func @transform_5(%arg0: i32) -> (i32, i32) {
    %c0_i32 = arith.constant 0 : i32
    %c0_i32_0 = arith.constant 0 : i32
    %c0_i32_1 = arith.constant 0 : i32
    return %c0_i32, %c0_i32_0 : i32, i32
  }
  func.func @transform_6(%arg0: i32) -> (i32, i32) {
    %c0_i32 = arith.constant 0 : i32
    %c0_i32_0 = arith.constant 0 : i32
    %c0_i32_1 = arith.constant 0 : i32
    return %c0_i32, %c0_i32_0 : i32, i32
  }
  func.func @transform_7(%arg0: i32) -> (i32, i32) {
    %c0_i32 = arith.constant 0 : i32
    %c0_i32_0 = arith.constant 0 : i32
    %c0_i32_1 = arith.constant 0 : i32
    return %c0_i32, %c0_i32_0 : i32, i32
  }
  func.func @transform_8(%arg0: i32) -> (i32, i32) {
    %c0_i32 = arith.constant 0 : i32
    %c0_i32_0 = arith.constant 0 : i32
    %c0_i32_1 = arith.constant 0 : i32
    return %c0_i32, %c0_i32_0 : i32, i32
  }
  func.func @transform_9(%arg0: i32) -> (i32, i32) {
    %c0_i32 = arith.constant 0 : i32
    %c0_i32_0 = arith.constant 0 : i32
    %c0_i32_1 = arith.constant 0 : i32
    return %c0_i32, %c0_i32_0 : i32, i32
  }
  func.func @transform_10(%arg0: i32) -> (i32, i32) {
    %c0_i32 = arith.constant 0 : i32
    %c0_i32_0 = arith.constant 0 : i32
    %c0_i32_1 = arith.constant 0 : i32
    return %c0_i32, %c0_i32_0 : i32, i32
  }
  func.func @transform_11(%arg0: i32) -> (i32, i32) {
    %c0_i32 = arith.constant 0 : i32
    %c0_i32_0 = arith.constant 0 : i32
    %c0_i32_1 = arith.constant 0 : i32
    return %c0_i32, %c0_i32_0 : i32, i32
  }
}

</mosaic_0001>

<llo_original>
// kernel: lenet_forward.1
$region0: #{lenet_forward.1}
  #allocation0 [shape = 'u32[]', space=smem, size = 0x4, offset = 0x4, fixed_abs, tag = 'smem constant byte address 0x4 - core index']
  #allocation1 [shape = 'u32[144,128]{1,0:T(1,128)}', space=vmem, size = 0x12000, scoped, tag = 'internal scratch']
  #allocation2 [shape = 'bf16[200,128]{1,0:T(8,128)(2,1)}', space=vmem, size = 0xc800, scoped, tag = 'scratch operand']
  #allocation3 [shape = 'bf16[256,2]{1,0:T(16,128)(2,1)}', space=vmem, size = 0x10000, scoped, tag = 'scratch operand']
  %s0 = inlined_call_operand.vmem [shape: bf16[4,25,3200], index: 0, kind: input, shape index: {}]
  %s1 = inlined_call_operand.vmem [shape: bf16[8,25], index: 1, kind: input, shape index: {}]
  %s2 = inlined_call_operand.vmem [shape: f32[8,1], index: 2, kind: input, shape index: {}]
  %s3 = inlined_call_operand.vmem [shape: bf16[16,200], index: 3, kind: input, shape index: {}]
  %s4 = inlined_call_operand.vmem [shape: f32[16,1], index: 4, kind: input, shape index: {}]
  %s5 = inlined_call_operand.vmem [shape: bf16[128,256], index: 5, kind: input, shape index: {}]
  %s6 = inlined_call_operand.vmem [shape: f32[128,1], index: 6, kind: input, shape index: {}]
  %s7 = inlined_call_operand.vmem [shape: bf16[128,128], index: 7, kind: input, shape index: {}]
  %s8 = inlined_call_operand.vmem [shape: f32[128,1], index: 8, kind: input, shape index: {}]
  %s9 = inlined_call_operand.vmem [shape: bf16[128,128], index: 9, kind: input, shape index: {}]
  %s10 = inlined_call_operand.vmem [shape: f32[128,1], index: 10, kind: input, shape index: {}]
  %s11 = inlined_call_operand.vmem [shape: f32[128,2], index: 11, kind: output, shape index: {}]
  %s12 = sld [smem:[#allocation0]]
  $region54: #{lenet_forward.1} parent=0
    _
  %s14 = ssub.s32 1, %s12
  %s15 = scalar_select 0, %s14, %s12
  // Predicated region
  $region2: #{lenet_forward.1} parent=0 // pred_check
    _
  $region3: #{lenet_forward.1} parent=0 // pred_check_branch
    %17 = sbr.rel (0) target = $region5
  $region4: #{lenet_forward.1} parent=0 // pred_region
    _
  $region5: #{lenet_forward.1} parent=0 // pred_fallthru
    _
  // Predicated region
  $region6: #{lenet_forward.1} parent=0 // pred_check
    _
  $region7: #{lenet_forward.1} parent=0 // pred_check_branch
    %19 = sbr.rel (0) target = $region9
  $region8: #{lenet_forward.1} parent=0 // pred_region
    _
  $region9: #{lenet_forward.1} parent=0 // pred_fallthru
    _
  // Predicated region
  $region10: #{lenet_forward.1} parent=0 // pred_check
    _
  $region11: #{lenet_forward.1} parent=0 // pred_check_branch
    %21 = sbr.rel (0) target = $region13
  $region12: #{lenet_forward.1} parent=0 // pred_region
    _
  $region13: #{lenet_forward.1} parent=0 // pred_fallthru
    _
  // Predicated region
  $region14: #{lenet_forward.1} parent=0 // pred_check
    _
  $region15: #{lenet_forward.1} parent=0 // pred_check_branch
    %23 = sbr.rel (0) target = $region17
  $region16: #{lenet_forward.1} parent=0 // pred_region
    _
  $region17: #{lenet_forward.1} parent=0 // pred_fallthru
    _
  // Predicated region
  $region18: #{lenet_forward.1} parent=0 // pred_check
    _
  $region19: #{lenet_forward.1} parent=0 // pred_check_branch
    %25 = sbr.rel (0) target = $region21
  $region20: #{lenet_forward.1} parent=0 // pred_region
    _
  $region21: #{lenet_forward.1} parent=0 // pred_fallthru
    _
  // Predicated region
  $region22: #{lenet_forward.1} parent=0 // pred_check
    _
  $region23: #{lenet_forward.1} parent=0 // pred_check_branch
    %27 = sbr.rel (0) target = $region25
  $region24: #{lenet_forward.1} parent=0 // pred_region
    _
  $region25: #{lenet_forward.1} parent=0 // pred_fallthru
    _
  // Predicated region
  $region26: #{lenet_forward.1} parent=0 // pred_check
    _
  $region27: #{lenet_forward.1} parent=0 // pred_check_branch
    %29 = sbr.rel (0) target = $region29
  $region28: #{lenet_forward.1} parent=0 // pred_region
    _
  $region29: #{lenet_forward.1} parent=0 // pred_fallthru
    _
  // Predicated region
  $region30: #{lenet_forward.1} parent=0 // pred_check
    _
  $region31: #{lenet_forward.1} parent=0 // pred_check_branch
    %31 = sbr.rel (0) target = $region33
  $region32: #{lenet_forward.1} parent=0 // pred_region
    _
  $region33: #{lenet_forward.1} parent=0 // pred_fallthru
    _
  // Predicated region
  $region34: #{lenet_forward.1} parent=0 // pred_check
    _
  $region35: #{lenet_forward.1} parent=0 // pred_check_branch
    %33 = sbr.rel (0) target = $region37
  $region36: #{lenet_forward.1} parent=0 // pred_region
    _
  $region37: #{lenet_forward.1} parent=0 // pred_fallthru
    _
  // Predicated region
  $region38: #{lenet_forward.1} parent=0 // pred_check
    _
  $region39: #{lenet_forward.1} parent=0 // pred_check_branch
    %35 = sbr.rel (0) target = $region41
  $region40: #{lenet_forward.1} parent=0 // pred_region
    _
  $region41: #{lenet_forward.1} parent=0 // pred_fallthru
    _
  // Predicated region
  $region42: #{lenet_forward.1} parent=0 // pred_check
    _
  $region43: #{lenet_forward.1} parent=0 // pred_check_branch
    %37 = sbr.rel (0) target = $region45
  $region44: #{lenet_forward.1} parent=0 // pred_region
    _
  $region45: #{lenet_forward.1} parent=0 // pred_fallthru
    _
  %v39 = vld [vmem:[%s1] sm:$0xf]
  %v40 = vld [vmem:[%s0] sm:$0xff]
  %v41 = vld [vmem:[%s0 + $0x8] sm:$0xff]
  %v42 = vld [vmem:[%s0 + $0x10] sm:$0xff]
  %v43 = vld [vmem:[%s0 + $0x18] sm:$0xff]
  %v44 = vld [vmem:[%s0 + $0x20] sm:$0xff]
  %v45 = vld [vmem:[%s0 + $0x28] sm:$0xff]
  %v46 = vld [vmem:[%s0 + $0x30] sm:$0xff]
  %v47 = vld [vmem:[%s0 + $0x38] sm:$0xff]
  %v48 = vld [vmem:[%s0 + $0x40] sm:$0xff]
  %v49 = vld [vmem:[%s0 + $0x48] sm:$0xff]
  %v50 = vld [vmem:[%s0 + $0x50] sm:$0xff]
  %v51 = vld [vmem:[%s0 + $0x58] sm:$0xff]
  %v52 = vld [vmem:[%s0 + $0x60] sm:$0xf]
  %v53 = vld [vmem:[%s0 + $0x64] sm:$0xff]
  %v54 = vld [vmem:[%s0 + $0x6c] sm:$0xff]
  %v55 = vld [vmem:[%s0 + $0x74] sm:$0xff]
  %v56 = vld [vmem:[%s0 + $0x7c] sm:$0xff]
  %v57 = vld [vmem:[%s0 + $0x84] sm:$0xff]
  %v58 = vld [vmem:[%s0 + $0x8c] sm:$0xff]
  %v59 = vld [vmem:[%s0 + $0x94] sm:$0xff]
  %v60 = vld [vmem:[%s0 + $0x9c] sm:$0xff]
  %v61 = vld [vmem:[%s0 + $0xa4] sm:$0xff]
  %v62 = vld [vmem:[%s0 + $0xac] sm:$0xff]
  %v63 = vld [vmem:[%s0 + $0xb4] sm:$0xff]
  %v64 = vld [vmem:[%s0 + $0xbc] sm:$0xff]
  %v65 = vld [vmem:[%s0 + $0xc4] sm:$0xf]
  %v66 = vld [vmem:[%s0 + $0xc8] sm:$0xff]
  %v67 = vld [vmem:[%s0 + $0xd0] sm:$0xff]
  %v68 = vld [vmem:[%s0 + $0xd8] sm:$0xff]
  %v69 = vld [vmem:[%s0 + $0xe0] sm:$0xff]
  %v70 = vld [vmem:[%s0 + $0xe8] sm:$0xff]
  %v71 = vld [vmem:[%s0 + $0xf0] sm:$0xff]
  %v72 = vld [vmem:[%s0 + $0xf8] sm:$0xff]
  %v73 = vld [vmem:[%s0 + $0x100] sm:$0xff]
  %v74 = vld [vmem:[%s0 + $0x108] sm:$0xff]
  %v75 = vld [vmem:[%s0 + $0x110] sm:$0xff]
  %v76 = vld [vmem:[%s0 + $0x118] sm:$0xff]
  %v77 = vld [vmem:[%s0 + $0x120] sm:$0xff]
  %v78 = vld [vmem:[%s0 + $0x128] sm:$0xf]
  %v79 = vld [vmem:[%s0 + $0x12c] sm:$0x11]
  %v80 = vld [vmem:[%s0 + $0x134] sm:$0x11]
  %v81 = vld [vmem:[%s0 + $0x13c] sm:$0x11]
  %v82 = vld [vmem:[%s0 + $0x144] sm:$0x11]
  %v83 = vld [vmem:[%s0 + $0x14c] sm:$0x11]
  %v84 = vld [vmem:[%s0 + $0x154] sm:$0x11]
  %v85 = vld [vmem:[%s0 + $0x15c] sm:$0x11]
  %v86 = vld [vmem:[%s0 + $0x164] sm:$0x11]
  %v87 = vld [vmem:[%s0 + $0x16c] sm:$0x11]
  %v88 = vld [vmem:[%s0 + $0x174] sm:$0x11]
  %v89 = vld [vmem:[%s0 + $0x17c] sm:$0x11]
  %v90 = vld [vmem:[%s0 + $0x184] sm:$0x11]
  %v91 = vld [vmem:[%s0 + $0x18c] sm:$0x1]
  %v144 = vunpack.c.l.b16 %v40
  %v145 = vunpack.c.h.b16 %v40
  %v146 = vunpack.c.l.b16 %v41
  %v147 = vunpack.c.h.b16 %v41
  %v148 = vunpack.c.l.b16 %v42
  %v149 = vunpack.c.h.b16 %v42
  %v150 = vunpack.c.l.b16 %v43
  %v151 = vunpack.c.h.b16 %v43
  %v152 = vunpack.c.l.b16 %v44
  %v153 = vunpack.c.h.b16 %v44
  %v154 = vunpack.c.l.b16 %v45
  %v155 = vunpack.c.h.b16 %v45
  %v156 = vunpack.c.l.b16 %v46
  %v157 = vunpack.c.h.b16 %v46
  %v158 = vunpack.c.l.b16 %v47
  %v159 = vunpack.c.h.b16 %v47
  %v160 = vunpack.c.l.b16 %v48
  %v161 = vunpack.c.h.b16 %v48
  %v162 = vunpack.c.l.b16 %v49
  %v163 = vunpack.c.h.b16 %v49
  %v164 = vunpack.c.l.b16 %v50
  %v165 = vunpack.c.h.b16 %v50
  %v166 = vunpack.c.l.b16 %v51
  %v167 = vunpack.c.h.b16 %v51
  %v168 = vunpack.c.l.b16 %v52
  %v169 = vunpack.c.l.b16 %v53
  %v170 = vunpack.c.h.b16 %v53
  %v171 = vunpack.c.l.b16 %v54
  %v172 = vunpack.c.h.b16 %v54
  %v173 = vunpack.c.l.b16 %v55
  %v174 = vunpack.c.h.b16 %v55
  %v175 = vunpack.c.l.b16 %v56
  %v176 = vunpack.c.h.b16 %v56
  %v177 = vunpack.c.l.b16 %v57
  %v178 = vunpack.c.h.b16 %v57
  %v179 = vunpack.c.l.b16 %v58
  %v180 = vunpack.c.h.b16 %v58
  %v181 = vunpack.c.l.b16 %v59
  %v182 = vunpack.c.h.b16 %v59
  %v183 = vunpack.c.l.b16 %v60
  %v184 = vunpack.c.h.b16 %v60
  %v185 = vunpack.c.l.b16 %v61
  %v186 = vunpack.c.h.b16 %v61
  %v187 = vunpack.c.l.b16 %v62
  %v188 = vunpack.c.h.b16 %v62
  %v189 = vunpack.c.l.b16 %v63
  %v190 = vunpack.c.h.b16 %v63
  %v191 = vunpack.c.l.b16 %v64
  %v192 = vunpack.c.h.b16 %v64
  %v193 = vunpack.c.l.b16 %v65
  %v194 = vunpack.c.l.b16 %v66
  %v195 = vunpack.c.h.b16 %v66
  %v196 = vunpack.c.l.b16 %v67
  %v197 = vunpack.c.h.b16 %v67
  %v198 = vunpack.c.l.b16 %v68
  %v199 = vunpack.c.h.b16 %v68
  %v200 = vunpack.c.l.b16 %v69
  %v201 = vunpack.c.h.b16 %v69
  %v202 = vunpack.c.l.b16 %v70
  %v203 = vunpack.c.h.b16 %v70
  %v204 = vunpack.c.l.b16 %v71
  %v205 = vunpack.c.h.b16 %v71
  %v206 = vunpack.c.l.b16 %v72
  %v207 = vunpack.c.h.b16 %v72
  %v208 = vunpack.c.l.b16 %v73
  %v209 = vunpack.c.h.b16 %v73
  %v210 = vunpack.c.l.b16 %v74
  %v211 = vunpack.c.h.b16 %v74
  %v212 = vunpack.c.l.b16 %v75
  %v213 = vunpack.c.h.b16 %v75
  %v214 = vunpack.c.l.b16 %v76
  %v215 = vunpack.c.h.b16 %v76
  %v216 = vunpack.c.l.b16 %v77
  %v217 = vunpack.c.h.b16 %v77
  %v218 = vunpack.c.l.b16 %v78
  %v219 = vunpack.c.l.b16 %v79
  %v220 = vunpack.c.h.b16 %v79
  %v221 = vunpack.c.l.b16 %v80
  %v222 = vunpack.c.h.b16 %v80
  %v223 = vunpack.c.l.b16 %v81
  %v224 = vunpack.c.h.b16 %v81
  %v225 = vunpack.c.l.b16 %v82
  %v226 = vunpack.c.h.b16 %v82
  %v227 = vunpack.c.l.b16 %v83
  %v228 = vunpack.c.h.b16 %v83
  %v229 = vunpack.c.l.b16 %v84
  %v230 = vunpack.c.h.b16 %v84
  %v231 = vunpack.c.l.b16 %v85
  %v232 = vunpack.c.h.b16 %v85
  %v233 = vunpack.c.l.b16 %v86
  %v234 = vunpack.c.h.b16 %v86
  %v235 = vunpack.c.l.b16 %v87
  %v236 = vunpack.c.h.b16 %v87
  %v237 = vunpack.c.l.b16 %v88
  %v238 = vunpack.c.h.b16 %v88
  %v239 = vunpack.c.l.b16 %v89
  %v240 = vunpack.c.h.b16 %v89
  %v241 = vunpack.c.l.b16 %v90
  %v242 = vunpack.c.h.b16 %v90
  %v243 = vunpack.c.l.b16 %v91
  %v244 = vpack.c.b16 %v169, %v144
  %v245 = vpack.c.b16 %v170, %v145
  %v246 = vpack.c.b16 %v171, %v146
  %v247 = vpack.c.b16 %v172, %v147
  %v248 = vpack.c.b16 %v173, %v148
  %v249 = vpack.c.b16 %v174, %v149
  %v250 = vpack.c.b16 %v175, %v150
  %v251 = vpack.c.b16 %v176, %v151
  %v252 = vpack.c.b16 %v177, %v152
  %v253 = vpack.c.b16 %v178, %v153
  %v254 = vpack.c.b16 %v179, %v154
  %v255 = vpack.c.b16 %v180, %v155
  %v256 = vpack.c.b16 %v181, %v156
  %v257 = vpack.c.b16 %v182, %v157
  %v258 = vpack.c.b16 %v183, %v158
  %v259 = vpack.c.b16 %v184, %v159
  %v260 = vpack.c.b16 %v185, %v160
  %v261 = vpack.c.b16 %v186, %v161
  %v262 = vpack.c.b16 %v187, %v162
  %v263 = vpack.c.b16 %v188, %v163
  %v264 = vpack.c.b16 %v189, %v164
  %v265 = vpack.c.b16 %v190, %v165
  %v266 = vpack.c.b16 %v191, %v166
  %v267 = vpack.c.b16 %v192, %v167
  %v268 = vpack.c.b16 %v193, %v168
  %v269 = vpack.c.b16 %v219, %v194
  %v270 = vpack.c.b16 %v220, %v195
  %v271 = vpack.c.b16 %v221, %v196
  %v272 = vpack.c.b16 %v222, %v197
  %v273 = vpack.c.b16 %v223, %v198
  %v274 = vpack.c.b16 %v224, %v199
  %v275 = vpack.c.b16 %v225, %v200
  %v276 = vpack.c.b16 %v226, %v201
  %v277 = vpack.c.b16 %v227, %v202
  %v278 = vpack.c.b16 %v228, %v203
  %v279 = vpack.c.b16 %v229, %v204
  %v280 = vpack.c.b16 %v230, %v205
  %v281 = vpack.c.b16 %v231, %v206
  %v282 = vpack.c.b16 %v232, %v207
  %v283 = vpack.c.b16 %v233, %v208
  %v284 = vpack.c.b16 %v234, %v209
  %v285 = vpack.c.b16 %v235, %v210
  %v286 = vpack.c.b16 %v236, %v211
  %v287 = vpack.c.b16 %v237, %v212
  %v288 = vpack.c.b16 %v238, %v213
  %v289 = vpack.c.b16 %v239, %v214
  %v290 = vpack.c.b16 %v240, %v215
  %v291 = vpack.c.b16 %v241, %v216
  %v292 = vpack.c.b16 %v242, %v217
  %v293 = vpack.c.b16 %v243, %v218
  %vm319 = vcmask 203776
  %v321 = vsel %vm319, %v39, 0
  %vm323 = vcmask 1043456
  %vm324 = vcmask 1044480
  %v325 = vsel %vm323, 4294967295, 65535
  %v326 = vsel %vm324, %v325, 0
  %v328 = vand.u32 %v269, %v326
  %v331 = vand.u32 %v270, %v326
  %v334 = vand.u32 %v271, %v326
  %v337 = vand.u32 %v272, %v326
  %v340 = vand.u32 %v273, %v326
  %v343 = vand.u32 %v274, %v326
  %v346 = vand.u32 %v275, %v326
  %v349 = vand.u32 %v276, %v326
  %v352 = vand.u32 %v277, %v326
  %v355 = vand.u32 %v278, %v326
  %v358 = vand.u32 %v279, %v326
  %v361 = vand.u32 %v280, %v326
  %v364 = vand.u32 %v281, %v326
  %v367 = vand.u32 %v282, %v326
  %v370 = vand.u32 %v283, %v326
  %v373 = vand.u32 %v284, %v326
  %v376 = vand.u32 %v285, %v326
  %v379 = vand.u32 %v286, %v326
  %v382 = vand.u32 %v287, %v326
  %v385 = vand.u32 %v288, %v326
  %v388 = vand.u32 %v289, %v326
  %v391 = vand.u32 %v290, %v326
  %v394 = vand.u32 %v291, %v326
  %v397 = vand.u32 %v292, %v326
  %v400 = vand.u32 %v293, %v326
  %402 = vmatprep.subr.bf16.mxu0 %v245
  %403 = vmatpush1.bf16.msra.mxu0 %v244
  %404 = vmatprep.subr.bf16.mxu0 %v331
  %405 = vmatpush1.bf16.msra.mxu0 %v328
  %406 = vmatprep.subr.bf16.mxu0 0
  %407 = vmatpush1.bf16.msra.mxu0 0
  %408 = vmatprep.subr.bf16.mxu0 0
  %409 = vmatpush1.bf16.msra.mxu0 0
  %410 = vmatprep.subr.bf16.mxu0 0
  %411 = vmatpush1.bf16.msra.mxu0 0
  %412 = vmatprep.subr.bf16.mxu0 0
  %413 = vmatpush1.bf16.msra.mxu0 0
  %414 = vmatprep.subr.bf16.mxu0 0
  %415 = vmatpush1.bf16.msra.mxu0 0
  %416 = vmatprep.subr.bf16.mxu0 0
  %417 = vmatpush1.bf16.msra.mxu0 0
  %418 = vmatprep.subr.bf16.mxu0 0
  %419 = vmatpush1.bf16.msra.mxu0 0
  %420 = vmatprep.subr.bf16.mxu0 0
  %421 = vmatpush1.bf16.msra.mxu0 0
  %422 = vmatprep.subr.bf16.mxu0 0
  %423 = vmatpush1.bf16.msra.mxu0 0
  %424 = vmatprep.subr.bf16.mxu0 0
  %425 = vmatpush1.bf16.msra.mxu0 0
  %426 = vmatprep.subr.bf16.mxu0 0
  %427 = vmatpush1.bf16.msra.mxu0 0
  %428 = vmatprep.subr.bf16.mxu0 0
  %429 = vmatpush1.bf16.msra.mxu0 0
  %430 = vmatprep.subr.bf16.mxu0 0
  %431 = vmatpush1.bf16.msra.mxu0 0
  %432 = vmatprep.subr.bf16.mxu0 0
  %433 = vmatpush1.bf16.msra.mxu0 0
  %434 = vmatprep.mubr.bf16.mxu0 0
  %435 = vmatmul.mubr.bf16.gmra.mrb[0].mxu0 %v321
  %v436 = vpop.f32.mrb[0].mxu0
  %v437 = vadd.f32 0.0, %v436
  %v438 = vpop.f32.mrb[0].mxu0
  %v439 = vadd.f32 0.0, %v438
  %v440 = vpop.f32.mrb[0].mxu0
  %v441 = vpop.f32.mrb[0].mxu0
  %442 = vdwg.mxu0
  %443 = vmatprep.subr.bf16.mxu0 %v247
  %444 = vmatpush1.bf16.msra.mxu0 %v246
  %445 = vmatprep.subr.bf16.mxu0 %v337
  %446 = vmatpush1.bf16.msra.mxu0 %v334
  %447 = vmatprep.subr.bf16.mxu0 0
  %448 = vmatpush1.bf16.msra.mxu0 0
  %449 = vmatprep.subr.bf16.mxu0 0
  %450 = vmatpush1.bf16.msra.mxu0 0
  %451 = vmatprep.subr.bf16.mxu0 0
  %452 = vmatpush1.bf16.msra.mxu0 0
  %453 = vmatprep.subr.bf16.mxu0 0
  %454 = vmatpush1.bf16.msra.mxu0 0
  %455 = vmatprep.subr.bf16.mxu0 0
  %456 = vmatpush1.bf16.msra.mxu0 0
  %457 = vmatprep.subr.bf16.mxu0 0
  %458 = vmatpush1.bf16.msra.mxu0 0
  %459 = vmatprep.subr.bf16.mxu0 0
  %460 = vmatpush1.bf16.msra.mxu0 0
  %461 = vmatprep.subr.bf16.mxu0 0
  %462 = vmatpush1.bf16.msra.mxu0 0
  %463 = vmatprep.subr.bf16.mxu0 0
  %464 = vmatpush1.bf16.msra.mxu0 0
  %465 = vmatprep.subr.bf16.mxu0 0
  %466 = vmatpush1.bf16.msra.mxu0 0
  %467 = vmatprep.subr.bf16.mxu0 0
  %468 = vmatpush1.bf16.msra.mxu0 0
  %469 = vmatprep.subr.bf16.mxu0 0
  %470 = vmatpush1.bf16.msra.mxu0 0
  %471 = vmatprep.subr.bf16.mxu0 0
  %472 = vmatpush1.bf16.msra.mxu0 0
  %473 = vmatprep.subr.bf16.mxu0 0
  %474 = vmatpush1.bf16.msra.mxu0 0
  %475 = vmatprep.mubr.bf16.mxu0 0
  %476 = vmatmul.mubr.bf16.gmra.mrb[0].mxu0 %v321
  %v477 = vpop.f32.mrb[0].mxu0
  %v478 = vadd.f32 0.0, %v477
  %v479 = vpop.f32.mrb[0].mxu0
  %v480 = vadd.f32 0.0, %v479
  %v481 = vpop.f32.mrb[0].mxu0
  %v482 = vpop.f32.mrb[0].mxu0
  %483 = vdwg.mxu0
  %484 = vmatprep.subr.bf16.mxu0 %v249
  %485 = vmatpush1.bf16.msra.mxu0 %v248
  %486 = vmatprep.subr.bf16.mxu0 %v343
  %487 = vmatpush1.bf16.msra.mxu0 %v340
  %488 = vmatprep.subr.bf16.mxu0 0
  %489 = vmatpush1.bf16.msra.mxu0 0
  %490 = vmatprep.subr.bf16.mxu0 0
  %491 = vmatpush1.bf16.msra.mxu0 0
  %492 = vmatprep.subr.bf16.mxu0 0
  %493 = vmatpush1.bf16.msra.mxu0 0
  %494 = vmatprep.subr.bf16.mxu0 0
  %495 = vmatpush1.bf16.msra.mxu0 0
  %496 = vmatprep.subr.bf16.mxu0 0
  %497 = vmatpush1.bf16.msra.mxu0 0
  %498 = vmatprep.subr.bf16.mxu0 0
  %499 = vmatpush1.bf16.msra.mxu0 0
  %500 = vmatprep.subr.bf16.mxu0 0
  %501 = vmatpush1.bf16.msra.mxu0 0
  %502 = vmatprep.subr.bf16.mxu0 0
  %503 = vmatpush1.bf16.msra.mxu0 0
  %504 = vmatprep.subr.bf16.mxu0 0
  %505 = vmatpush1.bf16.msra.mxu0 0
  %506 = vmatprep.subr.bf16.mxu0 0
  %507 = vmatpush1.bf16.msra.mxu0 0
  %508 = vmatprep.subr.bf16.mxu0 0
  %509 = vmatpush1.bf16.msra.mxu0 0
  %510 = vmatprep.subr.bf16.mxu0 0
  %511 = vmatpush1.bf16.msra.mxu0 0
  %512 = vmatprep.subr.bf16.mxu0 0
  %513 = vmatpush1.bf16.msra.mxu0 0
  %514 = vmatprep.subr.bf16.mxu0 0
  %515 = vmatpush1.bf16.msra.mxu0 0
  %516 = vmatprep.mubr.bf16.mxu0 0
  %517 = vmatmul.mubr.bf16.gmra.mrb[0].mxu0 %v321
  %v518 = vpop.f32.mrb[0].mxu0
  %v519 = vadd.f32 0.0, %v518
  %v520 = vpop.f32.mrb[0].mxu0
  %v521 = vadd.f32 0.0, %v520
  %v522 = vpop.f32.mrb[0].mxu0
  %v523 = vpop.f32.mrb[0].mxu0
  %524 = vdwg.mxu0
  %525 = vmatprep.subr.bf16.mxu0 %v251
  %526 = vmatpush1.bf16.msra.mxu0 %v250
  %527 = vmatprep.subr.bf16.mxu0 %v349
  %528 = vmatpush1.bf16.msra.mxu0 %v346
  %529 = vmatprep.subr.bf16.mxu0 0
  %530 = vmatpush1.bf16.msra.mxu0 0
  %531 = vmatprep.subr.bf16.mxu0 0
  %532 = vmatpush1.bf16.msra.mxu0 0
  %533 = vmatprep.subr.bf16.mxu0 0
  %534 = vmatpush1.bf16.msra.mxu0 0
  %535 = vmatprep.subr.bf16.mxu0 0
  %536 = vmatpush1.bf16.msra.mxu0 0
  %537 = vmatprep.subr.bf16.mxu0 0
  %538 = vmatpush1.bf16.msra.mxu0 0
  %539 = vmatprep.subr.bf16.mxu0 0
  %540 = vmatpush1.bf16.msra.mxu0 0
  %541 = vmatprep.subr.bf16.mxu0 0
  %542 = vmatpush1.bf16.msra.mxu0 0
  %543 = vmatprep.subr.bf16.mxu0 0
  %544 = vmatpush1.bf16.msra.mxu0 0
  %545 = vmatprep.subr.bf16.mxu0 0
  %546 = vmatpush1.bf16.msra.mxu0 0
  %547 = vmatprep.subr.bf16.mxu0 0
  %548 = vmatpush1.bf16.msra.mxu0 0
  %549 = vmatprep.subr.bf16.mxu0 0
  %550 = vmatpush1.bf16.msra.mxu0 0
  %551 = vmatprep.subr.bf16.mxu0 0
  %552 = vmatpush1.bf16.msra.mxu0 0
  %553 = vmatprep.subr.bf16.mxu0 0
  %554 = vmatpush1.bf16.msra.mxu0 0
  %555 = vmatprep.subr.bf16.mxu0 0
  %556 = vmatpush1.bf16.msra.mxu0 0
  %557 = vmatprep.mubr.bf16.mxu0 0
  %558 = vmatmul.mubr.bf16.gmra.mrb[0].mxu0 %v321
  %v559 = vpop.f32.mrb[0].mxu0
  %v560 = vadd.f32 0.0, %v559
  %v561 = vpop.f32.mrb[0].mxu0
  %v562 = vadd.f32 0.0, %v561
  %v563 = vpop.f32.mrb[0].mxu0
  %v564 = vpop.f32.mrb[0].mxu0
  %565 = vdwg.mxu0
  %566 = vmatprep.subr.bf16.mxu0 %v253
  %567 = vmatpush1.bf16.msra.mxu0 %v252
  %568 = vmatprep.subr.bf16.mxu0 %v355
  %569 = vmatpush1.bf16.msra.mxu0 %v352
  %570 = vmatprep.subr.bf16.mxu0 0
  %571 = vmatpush1.bf16.msra.mxu0 0
  %572 = vmatprep.subr.bf16.mxu0 0
  %573 = vmatpush1.bf16.msra.mxu0 0
  %574 = vmatprep.subr.bf16.mxu0 0
  %575 = vmatpush1.bf16.msra.mxu0 0
  %576 = vmatprep.subr.bf16.mxu0 0
  %577 = vmatpush1.bf16.msra.mxu0 0
  %578 = vmatprep.subr.bf16.mxu0 0
  %579 = vmatpush1.bf16.msra.mxu0 0
  %580 = vmatprep.subr.bf16.mxu0 0
  %581 = vmatpush1.bf16.msra.mxu0 0
  %582 = vmatprep.subr.bf16.mxu0 0
  %583 = vmatpush1.bf16.msra.mxu0 0
  %584 = vmatprep.subr.bf16.mxu0 0
  %585 = vmatpush1.bf16.msra.mxu0 0
  %586 = vmatprep.subr.bf16.mxu0 0
  %587 = vmatpush1.bf16.msra.mxu0 0
  %588 = vmatprep.subr.bf16.mxu0 0
  %589 = vmatpush1.bf16.msra.mxu0 0
  %590 = vmatprep.subr.bf16.mxu0 0
  %591 = vmatpush1.bf16.msra.mxu0 0
  %592 = vmatprep.subr.bf16.mxu0 0
  %593 = vmatpush1.bf16.msra.mxu0 0
  %594 = vmatprep.subr.bf16.mxu0 0
  %595 = vmatpush1.bf16.msra.mxu0 0
  %596 = vmatprep.subr.bf16.mxu0 0
  %597 = vmatpush1.bf16.msra.mxu0 0
  %598 = vmatprep.mubr.bf16.mxu0 0
  %599 = vmatmul.mubr.bf16.gmra.mrb[0].mxu0 %v321
  %v600 = vpop.f32.mrb[0].mxu0
  %v601 = vadd.f32 0.0, %v600
  %v602 = vpop.f32.mrb[0].mxu0
  %v603 = vadd.f32 0.0, %v602
  %v604 = vpop.f32.mrb[0].mxu0
  %v605 = vpop.f32.mrb[0].mxu0
  %606 = vdwg.mxu0
  %607 = vmatprep.subr.bf16.mxu0 %v255
  %608 = vmatpush1.bf16.msra.mxu0 %v254
  %609 = vmatprep.subr.bf16.mxu0 %v361
  %610 = vmatpush1.bf16.msra.mxu0 %v358
  %611 = vmatprep.subr.bf16.mxu0 0
  %612 = vmatpush1.bf16.msra.mxu0 0
  %613 = vmatprep.subr.bf16.mxu0 0
  %614 = vmatpush1.bf16.msra.mxu0 0
  %615 = vmatprep.subr.bf16.mxu0 0
  %616 = vmatpush1.bf16.msra.mxu0 0
  %617 = vmatprep.subr.bf16.mxu0 0
  %618 = vmatpush1.bf16.msra.mxu0 0
  %619 = vmatprep.subr.bf16.mxu0 0
  %620 = vmatpush1.bf16.msra.mxu0 0
  %621 = vmatprep.subr.bf16.mxu0 0
  %622 = vmatpush1.bf16.msra.mxu0 0
  %623 = vmatprep.subr.bf16.mxu0 0
  %624 = vmatpush1.bf16.msra.mxu0 0
  %625 = vmatprep.subr.bf16.mxu0 0
  %626 = vmatpush1.bf16.msra.mxu0 0
  %627 = vmatprep.subr.bf16.mxu0 0
  %628 = vmatpush1.bf16.msra.mxu0 0
  %629 = vmatprep.subr.bf16.mxu0 0
  %630 = vmatpush1.bf16.msra.mxu0 0
  %631 = vmatprep.subr.bf16.mxu0 0
  %632 = vmatpush1.bf16.msra.mxu0 0
  %633 = vmatprep.subr.bf16.mxu0 0
  %634 = vmatpush1.bf16.msra.mxu0 0
  %635 = vmatprep.subr.bf16.mxu0 0
  %636 = vmatpush1.bf16.msra.mxu0 0
  %637 = vmatprep.subr.bf16.mxu0 0
  %638 = vmatpush1.bf16.msra.mxu0 0
  %639 = vmatprep.mubr.bf16.mxu0 0
  %640 = vmatmul.mubr.bf16.gmra.mrb[0].mxu0 %v321
  %v641 = vpop.f32.mrb[0].mxu0
  %v642 = vadd.f32 0.0, %v641
  %v643 = vpop.f32.mrb[0].mxu0
  %v644 = vadd.f32 0.0, %v643
  %v645 = vpop.f32.mrb[0].mxu0
  %v646 = vpop.f32.mrb[0].mxu0
  %647 = vdwg.mxu0
  %648 = vmatprep.subr.bf16.mxu0 %v257
  %649 = vmatpush1.bf16.msra.mxu0 %v256
  %650 = vmatprep.subr.bf16.mxu0 %v367
  %651 = vmatpush1.bf16.msra.mxu0 %v364
  %652 = vmatprep.subr.bf16.mxu0 0
  %653 = vmatpush1.bf16.msra.mxu0 0
  %654 = vmatprep.subr.bf16.mxu0 0
  %655 = vmatpush1.bf16.msra.mxu0 0
  %656 = vmatprep.subr.bf16.mxu0 0
  %657 = vmatpush1.bf16.msra.mxu0 0
  %658 = vmatprep.subr.bf16.mxu0 0
  %659 = vmatpush1.bf16.msra.mxu0 0
  %660 = vmatprep.subr.bf16.mxu0 0
  %661 = vmatpush1.bf16.msra.mxu0 0
  %662 = vmatprep.subr.bf16.mxu0 0
  %663 = vmatpush1.bf16.msra.mxu0 0
  %664 = vmatprep.subr.bf16.mxu0 0
  %665 = vmatpush1.bf16.msra.mxu0 0
  %666 = vmatprep.subr.bf16.mxu0 0
  %667 = vmatpush1.bf16.msra.mxu0 0
  %668 = vmatprep.subr.bf16.mxu0 0
  %669 = vmatpush1.bf16.msra.mxu0 0
  %670 = vmatprep.subr.bf16.mxu0 0
  %671 = vmatpush1.bf16.msra.mxu0 0
  %672 = vmatprep.subr.bf16.mxu0 0
  %673 = vmatpush1.bf16.msra.mxu0 0
  %674 = vmatprep.subr.bf16.mxu0 0
  %675 = vmatpush1.bf16.msra.mxu0 0
  %676 = vmatprep.subr.bf16.mxu0 0
  %677 = vmatpush1.bf16.msra.mxu0 0
  %678 = vmatprep.subr.bf16.mxu0 0
  %679 = vmatpush1.bf16.msra.mxu0 0
  %680 = vmatprep.mubr.bf16.mxu0 0
  %681 = vmatmul.mubr.bf16.gmra.mrb[0].mxu0 %v321
  %v682 = vpop.f32.mrb[0].mxu0
  %v683 = vadd.f32 0.0, %v682
  %v684 = vpop.f32.mrb[0].mxu0
  %v685 = vadd.f32 0.0, %v684
  %v686 = vpop.f32.mrb[0].mxu0
  %v687 = vpop.f32.mrb[0].mxu0
  %688 = vdwg.mxu0
  %689 = vmatprep.subr.bf16.mxu0 %v259
  %690 = vmatpush1.bf16.msra.mxu0 %v258
  %691 = vmatprep.subr.bf16.mxu0 %v373
  %692 = vmatpush1.bf16.msra.mxu0 %v370
  %693 = vmatprep.subr.bf16.mxu0 0
  %694 = vmatpush1.bf16.msra.mxu0 0
  %695 = vmatprep.subr.bf16.mxu0 0
  %696 = vmatpush1.bf16.msra.mxu0 0
  %697 = vmatprep.subr.bf16.mxu0 0
  %698 = vmatpush1.bf16.msra.mxu0 0
  %699 = vmatprep.subr.bf16.mxu0 0
  %700 = vmatpush1.bf16.msra.mxu0 0
  %701 = vmatprep.subr.bf16.mxu0 0
  %702 = vmatpush1.bf16.msra.mxu0 0
  %703 = vmatprep.subr.bf16.mxu0 0
  %704 = vmatpush1.bf16.msra.mxu0 0
  %705 = vmatprep.subr.bf16.mxu0 0
  %706 = vmatpush1.bf16.msra.mxu0 0
  %707 = vmatprep.subr.bf16.mxu0 0
  %708 = vmatpush1.bf16.msra.mxu0 0
  %709 = vmatprep.subr.bf16.mxu0 0
  %710 = vmatpush1.bf16.msra.mxu0 0
  %711 = vmatprep.subr.bf16.mxu0 0
  %712 = vmatpush1.bf16.msra.mxu0 0
  %713 = vmatprep.subr.bf16.mxu0 0
  %714 = vmatpush1.bf16.msra.mxu0 0
  %715 = vmatprep.subr.bf16.mxu0 0
  %716 = vmatpush1.bf16.msra.mxu0 0
  %717 = vmatprep.subr.bf16.mxu0 0
  %718 = vmatpush1.bf16.msra.mxu0 0
  %719 = vmatprep.subr.bf16.mxu0 0
  %720 = vmatpush1.bf16.msra.mxu0 0
  %721 = vmatprep.mubr.bf16.mxu0 0
  %722 = vmatmul.mubr.bf16.gmra.mrb[0].mxu0 %v321
  %v723 = vpop.f32.mrb[0].mxu0
  %v724 = vadd.f32 0.0, %v723
  %v725 = vpop.f32.mrb[0].mxu0
  %v726 = vadd.f32 0.0, %v725
  %v727 = vpop.f32.mrb[0].mxu0
  %v728 = vpop.f32.mrb[0].mxu0
  %729 = vdwg.mxu0
  %730 = vmatprep.subr.bf16.mxu0 %v261
  %731 = vmatpush1.bf16.msra.mxu0 %v260
  %732 = vmatprep.subr.bf16.mxu0 %v379
  %733 = vmatpush1.bf16.msra.mxu0 %v376
  %734 = vmatprep.subr.bf16.mxu0 0
  %735 = vmatpush1.bf16.msra.mxu0 0
  %736 = vmatprep.subr.bf16.mxu0 0
  %737 = vmatpush1.bf16.msra.mxu0 0
  %738 = vmatprep.subr.bf16.mxu0 0
  %739 = vmatpush1.bf16.msra.mxu0 0
  %740 = vmatprep.subr.bf16.mxu0 0
  %741 = vmatpush1.bf16.msra.mxu0 0
  %742 = vmatprep.subr.bf16.mxu0 0
  %743 = vmatpush1.bf16.msra.mxu0 0
  %744 = vmatprep.subr.bf16.mxu0 0
  %745 = vmatpush1.bf16.msra.mxu0 0
  %746 = vmatprep.subr.bf16.mxu0 0
  %747 = vmatpush1.bf16.msra.mxu0 0
  %748 = vmatprep.subr.bf16.mxu0 0
  %749 = vmatpush1.bf16.msra.mxu0 0
  %750 = vmatprep.subr.bf16.mxu0 0
  %751 = vmatpush1.bf16.msra.mxu0 0
  %752 = vmatprep.subr.bf16.mxu0 0
  %753 = vmatpush1.bf16.msra.mxu0 0
  %754 = vmatprep.subr.bf16.mxu0 0
  %755 = vmatpush1.bf16.msra.mxu0 0
  %756 = vmatprep.subr.bf16.mxu0 0
  %757 = vmatpush1.bf16.msra.mxu0 0
  %758 = vmatprep.subr.bf16.mxu0 0
  %759 = vmatpush1.bf16.msra.mxu0 0
  %760 = vmatprep.subr.bf16.mxu0 0
  %761 = vmatpush1.bf16.msra.mxu0 0
  %762 = vmatprep.mubr.bf16.mxu0 0
  %763 = vmatmul.mubr.bf16.gmra.mrb[0].mxu0 %v321
  %v764 = vpop.f32.mrb[0].mxu0
  %v765 = vadd.f32 0.0, %v764
  %v766 = vpop.f32.mrb[0].mxu0
  %v767 = vadd.f32 0.0, %v766
  %v768 = vpop.f32.mrb[0].mxu0
  %v769 = vpop.f32.mrb[0].mxu0
  %770 = vdwg.mxu0
  %771 = vmatprep.subr.bf16.mxu0 %v263
  %772 = vmatpush1.bf16.msra.mxu0 %v262
  %773 = vmatprep.subr.bf16.mxu0 %v385
  %774 = vmatpush1.bf16.msra.mxu0 %v382
  %775 = vmatprep.subr.bf16.mxu0 0
  %776 = vmatpush1.bf16.msra.mxu0 0
  %777 = vmatprep.subr.bf16.mxu0 0
  %778 = vmatpush1.bf16.msra.mxu0 0
  %779 = vmatprep.subr.bf16.mxu0 0
  %780 = vmatpush1.bf16.msra.mxu0 0
  %781 = vmatprep.subr.bf16.mxu0 0
  %782 = vmatpush1.bf16.msra.mxu0 0
  %783 = vmatprep.subr.bf16.mxu0 0
  %784 = vmatpush1.bf16.msra.mxu0 0
  %785 = vmatprep.subr.bf16.mxu0 0
  %786 = vmatpush1.bf16.msra.mxu0 0
  %787 = vmatprep.subr.bf16.mxu0 0
  %788 = vmatpush1.bf16.msra.mxu0 0
  %789 = vmatprep.subr.bf16.mxu0 0
  %790 = vmatpush1.bf16.msra.mxu0 0
  %791 = vmatprep.subr.bf16.mxu0 0
  %792 = vmatpush1.bf16.msra.mxu0 0
  %793 = vmatprep.subr.bf16.mxu0 0
  %794 = vmatpush1.bf16.msra.mxu0 0
  %795 = vmatprep.subr.bf16.mxu0 0
  %796 = vmatpush1.bf16.msra.mxu0 0
  %797 = vmatprep.subr.bf16.mxu0 0
  %798 = vmatpush1.bf16.msra.mxu0 0
  %799 = vmatprep.subr.bf16.mxu0 0
  %800 = vmatpush1.bf16.msra.mxu0 0
  %801 = vmatprep.subr.bf16.mxu0 0
  %802 = vmatpush1.bf16.msra.mxu0 0
  %803 = vmatprep.mubr.bf16.mxu0 0
  %804 = vmatmul.mubr.bf16.gmra.mrb[0].mxu0 %v321
  %v805 = vpop.f32.mrb[0].mxu0
  %v806 = vadd.f32 0.0, %v805
  %v807 = vpop.f32.mrb[0].mxu0
  %v808 = vadd.f32 0.0, %v807
  %v809 = vpop.f32.mrb[0].mxu0
  %v810 = vpop.f32.mrb[0].mxu0
  %811 = vdwg.mxu0
  %812 = vmatprep.subr.bf16.mxu0 %v265
  %813 = vmatpush1.bf16.msra.mxu0 %v264
  %814 = vmatprep.subr.bf16.mxu0 %v391
  %815 = vmatpush1.bf16.msra.mxu0 %v388
  %816 = vmatprep.subr.bf16.mxu0 0
  %817 = vmatpush1.bf16.msra.mxu0 0
  %818 = vmatprep.subr.bf16.mxu0 0
  %819 = vmatpush1.bf16.msra.mxu0 0
  %820 = vmatprep.subr.bf16.mxu0 0
  %821 = vmatpush1.bf16.msra.mxu0 0
  %822 = vmatprep.subr.bf16.mxu0 0
  %823 = vmatpush1.bf16.msra.mxu0 0
  %824 = vmatprep.subr.bf16.mxu0 0
  %825 = vmatpush1.bf16.msra.mxu0 0
  %826 = vmatprep.subr.bf16.mxu0 0
  %827 = vmatpush1.bf16.msra.mxu0 0
  %828 = vmatprep.subr.bf16.mxu0 0
  %829 = vmatpush1.bf16.msra.mxu0 0
  %830 = vmatprep.subr.bf16.mxu0 0
  %831 = vmatpush1.bf16.msra.mxu0 0
  %832 = vmatprep.subr.bf16.mxu0 0
  %833 = vmatpush1.bf16.msra.mxu0 0
  %834 = vmatprep.subr.bf16.mxu0 0
  %835 = vmatpush1.bf16.msra.mxu0 0
  %836 = vmatprep.subr.bf16.mxu0 0
  %837 = vmatpush1.bf16.msra.mxu0 0
  %838 = vmatprep.subr.bf16.mxu0 0
  %839 = vmatpush1.bf16.msra.mxu0 0
  %840 = vmatprep.subr.bf16.mxu0 0
  %841 = vmatpush1.bf16.msra.mxu0 0
  %842 = vmatprep.subr.bf16.mxu0 0
  %843 = vmatpush1.bf16.msra.mxu0 0
  %844 = vmatprep.mubr.bf16.mxu0 0
  %845 = vmatmul.mubr.bf16.gmra.mrb[0].mxu0 %v321
  %v846 = vpop.f32.mrb[0].mxu0
  %v847 = vadd.f32 0.0, %v846
  %v848 = vpop.f32.mrb[0].mxu0
  %v849 = vadd.f32 0.0, %v848
  %v850 = vpop.f32.mrb[0].mxu0
  %v851 = vpop.f32.mrb[0].mxu0
  %852 = vdwg.mxu0
  %853 = vmatprep.subr.bf16.mxu0 %v267
  %854 = vmatpush1.bf16.msra.mxu0 %v266
  %855 = vmatprep.subr.bf16.mxu0 %v397
  %856 = vmatpush1.bf16.msra.mxu0 %v394
  %857 = vmatprep.subr.bf16.mxu0 0
  %858 = vmatpush1.bf16.msra.mxu0 0
  %859 = vmatprep.subr.bf16.mxu0 0
  %860 = vmatpush1.bf16.msra.mxu0 0
  %861 = vmatprep.subr.bf16.mxu0 0
  %862 = vmatpush1.bf16.msra.mxu0 0
  %863 = vmatprep.subr.bf16.mxu0 0
  %864 = vmatpush1.bf16.msra.mxu0 0
  %865 = vmatprep.subr.bf16.mxu0 0
  %866 = vmatpush1.bf16.msra.mxu0 0
  %867 = vmatprep.subr.bf16.mxu0 0
  %868 = vmatpush1.bf16.msra.mxu0 0
  %869 = vmatprep.subr.bf16.mxu0 0
  %870 = vmatpush1.bf16.msra.mxu0 0
  %871 = vmatprep.subr.bf16.mxu0 0
  %872 = vmatpush1.bf16.msra.mxu0 0
  %873 = vmatprep.subr.bf16.mxu0 0
  %874 = vmatpush1.bf16.msra.mxu0 0
  %875 = vmatprep.subr.bf16.mxu0 0
  %876 = vmatpush1.bf16.msra.mxu0 0
  %877 = vmatprep.subr.bf16.mxu0 0
  %878 = vmatpush1.bf16.msra.mxu0 0
  %879 = vmatprep.subr.bf16.mxu0 0
  %880 = vmatpush1.bf16.msra.mxu0 0
  %881 = vmatprep.subr.bf16.mxu0 0
  %882 = vmatpush1.bf16.msra.mxu0 0
  %883 = vmatprep.subr.bf16.mxu0 0
  %884 = vmatpush1.bf16.msra.mxu0 0
  %885 = vmatprep.mubr.bf16.mxu0 0
  %886 = vmatmul.mubr.bf16.gmra.mrb[0].mxu0 %v321
  %v887 = vpop.f32.mrb[0].mxu0
  %v888 = vadd.f32 0.0, %v887
  %v889 = vpop.f32.mrb[0].mxu0
  %v890 = vadd.f32 0.0, %v889
  %v891 = vpop.f32.mrb[0].mxu0
  %v892 = vpop.f32.mrb[0].mxu0
  %893 = vdwg.mxu0
  %894 = vmatprep.subr.bf16.mxu0 0
  %895 = vmatpush1.bf16.msra.mxu0 %v268
  %896 = vmatprep.subr.bf16.mxu0 0
  %897 = vmatpush1.bf16.msra.mxu0 %v400
  %898 = vmatprep.subr.bf16.mxu0 0
  %899 = vmatpush1.bf16.msra.mxu0 0
  %900 = vmatprep.subr.bf16.mxu0 0
  %901 = vmatpush1.bf16.msra.mxu0 0
  %902 = vmatprep.subr.bf16.mxu0 0
  %903 = vmatpush1.bf16.msra.mxu0 0
  %904 = vmatprep.subr.bf16.mxu0 0
  %905 = vmatpush1.bf16.msra.mxu0 0
  %906 = vmatprep.subr.bf16.mxu0 0
  %907 = vmatpush1.bf16.msra.mxu0 0
  %908 = vmatprep.subr.bf16.mxu0 0
  %909 = vmatpush1.bf16.msra.mxu0 0
  %910 = vmatprep.subr.bf16.mxu0 0
  %911 = vmatpush1.bf16.msra.mxu0 0
  %912 = vmatprep.subr.bf16.mxu0 0
  %913 = vmatpush1.bf16.msra.mxu0 0
  %914 = vmatprep.subr.bf16.mxu0 0
  %915 = vmatpush1.bf16.msra.mxu0 0
  %916 = vmatprep.subr.bf16.mxu0 0
  %917 = vmatpush1.bf16.msra.mxu0 0
  %918 = vmatprep.subr.bf16.mxu0 0
  %919 = vmatpush1.bf16.msra.mxu0 0
  %920 = vmatprep.subr.bf16.mxu0 0
  %921 = vmatpush1.bf16.msra.mxu0 0
  %922 = vmatprep.subr.bf16.mxu0 0
  %923 = vmatpush1.bf16.msra.mxu0 0
  %924 = vmatprep.subr.bf16.mxu0 0
  %925 = vmatpush1.bf16.msra.mxu0 0
  %926 = vmatprep.mubr.bf16.mxu0 0
  %927 = vmatmul.mubr.bf16.gmra.mrb[0].mxu0 %v321
  %v928 = vpop.f32.mrb[0].mxu0
  %v929 = vadd.f32 0.0, %v928
  %v930 = vpop.f32.mrb[0].mxu0
  %v931 = vpop.f32.mrb[0].mxu0
  %v932 = vpop.f32.mrb[0].mxu0
  %933 = vdwg.mxu0
  %s934 = scalar_lea.vmem %s0, 400
  %v935 = vld [vmem:[%s934] sm:$0xff]
  %v936 = vld [vmem:[%s934 + $0x8] sm:$0xff]
  %v937 = vld [vmem:[%s934 + $0x10] sm:$0xff]
  %v938 = vld [vmem:[%s934 + $0x18] sm:$0xff]
  %v939 = vld [vmem:[%s934 + $0x20] sm:$0xff]
  %v940 = vld [vmem:[%s934 + $0x28] sm:$0xff]
  %v941 = vld [vmem:[%s934 + $0x30] sm:$0xff]
  %v942 = vld [vmem:[%s934 + $0x38] sm:$0xff]
  %v943 = vld [vmem:[%s934 + $0x40] sm:$0xff]
  %v944 = vld [vmem:[%s934 + $0x48] sm:$0xff]
  %v945 = vld [vmem:[%s934 + $0x50] sm:$0xff]
  %v946 = vld [vmem:[%s934 + $0x58] sm:$0xff]
  %v947 = vld [vmem:[%s934 + $0x60] sm:$0xf]
  %v948 = vld [vmem:[%s934 + $0x64] sm:$0xff]
  %v949 = vld [vmem:[%s934 + $0x6c] sm:$0xff]
  %v950 = vld [vmem:[%s934 + $0x74] sm:$0xff]
  %v951 = vld [vmem:[%s934 + $0x7c] sm:$0xff]
  %v952 = vld [vmem:[%s934 + $0x84] sm:$0xff]
  %v953 = vld [vmem:[%s934 + $0x8c] sm:$0xff]
  %v954 = vld [vmem:[%s934 + $0x94] sm:$0xff]
  %v955 = vld [vmem:[%s934 + $0x9c] sm:$0xff]
  %v956 = vld [vmem:[%s934 + $0xa4] sm:$0xff]
  %v957 = vld [vmem:[%s934 + $0xac] sm:$0xff]
  %v958 = vld [vmem:[%s934 + $0xb4] sm:$0xff]
  %v959 = vld [vmem:[%s934 + $0xbc] sm:$0xff]
  %v960 = vld [vmem:[%s934 + $0xc4] sm:$0xf]
  %v961 = vld [vmem:[%s934 + $0xc8] sm:$0xff]
  %v962 = vld [vmem:[%s934 + $0xd0] sm:$0xff]
  %v963 = vld [vmem:[%s934 + $0xd8] sm:$0xff]
  %v964 = vld [vmem:[%s934 + $0xe0] sm:$0xff]
  %v965 = vld [vmem:[%s934 + $0xe8] sm:$0xff]
  %v966 = vld [vmem:[%s934 + $0xf0] sm:$0xff]
  %v967 = vld [vmem:[%s934 + $0xf8] sm:$0xff]
  %v968 = vld [vmem:[%s934 + $0x100] sm:$0xff]
  %v969 = vld [vmem:[%s934 + $0x108] sm:$0xff]
  %v970 = vld [vmem:[%s934 + $0x110] sm:$0xff]
  %v971 = vld [vmem:[%s934 + $0x118] sm:$0xff]
  %v972 = vld [vmem:[%s934 + $0x120] sm:$0xff]
  %v973 = vld [vmem:[%s934 + $0x128] sm:$0xf]
  %v974 = vld [vmem:[%s934 + $0x12c] sm:$0x11]
  %v975 = vld [vmem:[%s934 + $0x134] sm:$0x11]
  %v976 = vld [vmem:[%s934 + $0x13c] sm:$0x11]
  %v977 = vld [vmem:[%s934 + $0x144] sm:$0x11]
  %v978 = vld [vmem:[%s934 + $0x14c] sm:$0x11]
  %v979 = vld [vmem:[%s934 + $0x154] sm:$0x11]
  %v980 = vld [vmem:[%s934 + $0x15c] sm:$0x11]
  %v981 = vld [vmem:[%s934 + $0x164] sm:$0x11]
  %v982 = vld [vmem:[%s934 + $0x16c] sm:$0x11]
  %v983 = vld [vmem:[%s934 + $0x174] sm:$0x11]
  %v984 = vld [vmem:[%s934 + $0x17c] sm:$0x11]
  %v985 = vld [vmem:[%s934 + $0x184] sm:$0x11]
  %v986 = vld [vmem:[%s934 + $0x18c] sm:$0x1]
  %v1039 = vunpack.c.l.b16 %v935
  %v1040 = vunpack.c.h.b16 %v935
  %v1041 = vunpack.c.l.b16 %v936
  %v1042 = vunpack.c.h.b16 %v936
  %v1043 = vunpack.c.l.b16 %v937
  %v1044 = vunpack.c.h.b16 %v937
  %v1045 = vunpack.c.l.b16 %v938
  %v1046 = vunpack.c.h.b16 %v938
  %v1047 = vunpack.c.l.b16 %v939
  %v1048 = vunpack.c.h.b16 %v939
  %v1049 = vunpack.c.l.b16 %v940
  %v1050 = vunpack.c.h.b16 %v940
  %v1051 = vunpack.c.l.b16 %v941
  %v1052 = vunpack.c.h.b16 %v941
  %v1053 = vunpack.c.l.b16 %v942
  %v1054 = vunpack.c.h.b16 %v942
  %v1055 = vunpack.c.l.b16 %v943
  %v1056 = vunpack.c.h.b16 %v943
  %v1057 = vunpack.c.l.b16 %v944
  %v1058 = vunpack.c.h.b16 %v944
  %v1059 = vunpack.c.l.b16 %v945
  %v1060 = vunpack.c.h.b16 %v945
  %v1061 = vunpack.c.l.b16 %v946
  %v1062 = vunpack.c.h.b16 %v946
  %v1063 = vunpack.c.l.b16 %v947
  %v1064 = vunpack.c.l.b16 %v948
  %v1065 = vunpack.c.h.b16 %v948
  %v1066 = vunpack.c.l.b16 %v949
  %v1067 = vunpack.c.h.b16 %v949
  %v1068 = vunpack.c.l.b16 %v950
  %v1069 = vunpack.c.h.b16 %v950
  %v1070 = vunpack.c.l.b16 %v951
  %v1071 = vunpack.c.h.b16 %v951
  %v1072 = vunpack.c.l.b16 %v952
  %v1073 = vunpack.c.h.b16 %v952
  %v1074 = vunpack.c.l.b16 %v953
  %v1075 = vunpack.c.h.b16 %v953
  %v1076 = vunpack.c.l.b16 %v954
  %v1077 = vunpack.c.h.b16 %v954
  %v1078 = vunpack.c.l.b16 %v955
  %v1079 = vunpack.c.h.b16 %v955
  %v1080 = vunpack.c.l.b16 %v956
  %v1081 = vunpack.c.h.b16 %v956
  %v1082 = vunpack.c.l.b16 %v957
  %v1083 = vunpack.c.h.b16 %v957
  %v1084 = vunpack.c.l.b16 %v958
  %v1085 = vunpack.c.h.b16 %v958
  %v1086 = vunpack.c.l.b16 %v959
  %v1087 = vunpack.c.h.b16 %v959
  %v1088 = vunpack.c.l.b16 %v960
  %v1089 = vunpack.c.l.b16 %v961
  %v1090 = vunpack.c.h.b16 %v961
  %v1091 = vunpack.c.l.b16 %v962
  %v1092 = vunpack.c.h.b16 %v962
  %v1093 = vunpack.c.l.b16 %v963
  %v1094 = vunpack.c.h.b16 %v963
  %v1095 = vunpack.c.l.b16 %v964
  %v1096 = vunpack.c.h.b16 %v964
  %v1097 = vunpack.c.l.b16 %v965
  %v1098 = vunpack.c.h.b16 %v965
  %v1099 = vunpack.c.l.b16 %v966
  %v1100 = vunpack.c.h.b16 %v966
  %v1101 = vunpack.c.l.b16 %v967
  %v1102 = vunpack.c.h.b16 %v967
  %v1103 = vunpack.c.l.b16 %v968
  %v1104 = vunpack.c.h.b16 %v968
  %v1105 = vunpack.c.l.b16 %v969
  %v1106 = vunpack.c.h.b16 %v969
  %v1107 = vunpack.c.l.b16 %v970
  %v1108 = vunpack.c.h.b16 %v970
  %v1109 = vunpack.c.l.b16 %v971
  %v1110 = vunpack.c.h.b16 %v971
  %v1111 = vunpack.c.l.b16 %v972
  %v1112 = vunpack.c.h.b16 %v972
  %v1113 = vunpack.c.l.b16 %v973
  %v1114 = vunpack.c.l.b16 %v974
  %v1115 = vunpack.c.h.b16 %v974
  %v1116 = vunpack.c.l.b16 %v975
  %v1117 = vunpack.c.h.b16 %v975
  %v1118 = vunpack.c.l.b16 %v976
  %v1119 = vunpack.c.h.b16 %v976
  %v1120 = vunpack.c.l.b16 %v977
  %v1121 = vunpack.c.h.b16 %v977
  %v1122 = vunpack.c.l.b16 %v978
  %v1123 = vunpack.c.h.b16 %v978
  %v1124 = vunpack.c.l.b16 %v979
  %v1125 = vunpack.c.h.b16 %v979
  %v1126 = vunpack.c.l.b16 %v980
  %v1127 = vunpack.c.h.b16 %v980
  %v1128 = vunpack.c.l.b16 %v981
  %v1129 = vunpack.c.h.b16 %v981
  %v1130 = vunpack.c.l.b16 %v982
  %v1131 = vunpack.c.h.b16 %v982
  %v1132 = vunpack.c.l.b16 %v983
  %v1133 = vunpack.c.h.b16 %v983
  %v1134 = vunpack.c.l.b16 %v984
  %v1135 = vunpack.c.h.b16 %v984
  %v1136 = vunpack.c.l.b16 %v985
  %v1137 = vunpack.c.h.b16 %v985
  %v1138 = vunpack.c.l.b16 %v986
  %v1139 = vpack.c.b16 %v1064, %v1039
  %v1140 = vpack.c.b16 %v1065, %v1040
  %v1141 = vpack.c.b16 %v1066, %v1041
  %v1142 = vpack.c.b16 %v1067, %v1042
  %v1143 = vpack.c.b16 %v1068, %v1043
  %v1144 = vpack.c.b16 %v1069, %v1044
  %v1145 = vpack.c.b16 %v1070, %v1045
  %v1146 = vpack.c.b16 %v1071, %v1046
  %v1147 = vpack.c.b16 %v1072, %v1047
  %v1148 = vpack.c.b16 %v1073, %v1048
  %v1149 = vpack.c.b16 %v1074, %v1049
  %v1150 = vpack.c.b16 %v1075, %v1050
  %v1151 = vpack.c.b16 %v1076, %v1051
  %v1152 = vpack.c.b16 %v1077, %v1052
  %v1153 = vpack.c.b16 %v1078, %v1053
  %v1154 = vpack.c.b16 %v1079, %v1054
  %v1155 = vpack.c.b16 %v1080, %v1055
  %v1156 = vpack.c.b16 %v1081, %v1056
  %v1157 = vpack.c.b16 %v1082, %v1057
  %v1158 = vpack.c.b16 %v1083, %v1058
  %v1159 = vpack.c.b16 %v1084, %v1059
  %v1160 = vpack.c.b16 %v1085, %v1060
  %v1161 = vpack.c.b16 %v1086, %v1061
  %v1162 = vpack.c.b16 %v1087, %v1062
  %v1163 = vpack.c.b16 %v1088, %v1063
  %v1164 = vpack.c.b16 %v1114, %v1089
  %v1165 = vpack.c.b16 %v1115, %v1090
  %v1166 = vpack.c.b16 %v1116, %v1091
  %v1167 = vpack.c.b16 %v1117, %v1092
  %v1168 = vpack.c.b16 %v1118, %v1093
  %v1169 = vpack.c.b16 %v1119, %v1094
  %v1170 = vpack.c.b16 %v1120, %v1095
  %v1171 = vpack.c.b16 %v1121, %v1096
  %v1172 = vpack.c.b16 %v1122, %v1097
  %v1173 = vpack.c.b16 %v1123, %v1098
  %v1174 = vpack.c.b16 %v1124, %v1099
  %v1175 = vpack.c.b16 %v1125, %v1100
  %v1176 = vpack.c.b16 %v1126, %v1101
  %v1177 = vpack.c.b16 %v1127, %v1102
  %v1178 = vpack.c.b16 %v1128, %v1103
  %v1179 = vpack.c.b16 %v1129, %v1104
  %v1180 = vpack.c.b16 %v1130, %v1105
  %v1181 = vpack.c.b16 %v1131, %v1106
  %v1182 = vpack.c.b16 %v1132, %v1107
  %v1183 = vpack.c.b16 %v1133, %v1108
  %v1184 = vpack.c.b16 %v1134, %v1109
  %v1185 = vpack.c.b16 %v1135, %v1110
  %v1186 = vpack.c.b16 %v1136, %v1111
  %v1187 = vpack.c.b16 %v1137, %v1112
  %v1188 = vpack.c.b16 %v1138, %v1113
  %v1215 = vand.u32 %v1164, %v326
  %v1218 = vand.u32 %v1165, %v326
  %v1221 = vand.u32 %v1166, %v326
  %v1224 = vand.u32 %v1167, %v326
  %v1227 = vand.u32 %v1168, %v326
  %v1230 = vand.u32 %v1169, %v326
  %v1233 = vand.u32 %v1170, %v326
  %v1236 = vand.u32 %v1171, %v326
  %v1239 = vand.u32 %v1172, %v326
  %v1242 = vand.u32 %v1173, %v326
  %v1245 = vand.u32 %v1174, %v326
  %v1248 = vand.u32 %v1175, %v326
  %v1251 = vand.u32 %v1176, %v326
  %v1254 = vand.u32 %v1177, %v326
  %v1257 = vand.u32 %v1178, %v326
  %v1260 = vand.u32 %v1179, %v326
  %v1263 = vand.u32 %v1180, %v326
  %v1266 = vand.u32 %v1181, %v326
  %v1269 = vand.u32 %v1182, %v326
  %v1272 = vand.u32 %v1183, %v326
  %v1275 = vand.u32 %v1184, %v326
  %v1278 = vand.u32 %v1185, %v326
  %v1281 = vand.u32 %v1186, %v326
  %v1284 = vand.u32 %v1187, %v326
  %v1287 = vand.u32 %v1188, %v326
  %1289 = vmatprep.subr.bf16.mxu0 %v1140
  %1290 = vmatpush1.bf16.msra.mxu0 %v1139
  %1291 = vmatprep.subr.bf16.mxu0 %v1218
  %1292 = vmatpush1.bf16.msra.mxu0 %v1215
  %1293 = vmatprep.subr.bf16.mxu0 0
  %1294 = vmatpush1.bf16.msra.mxu0 0
  %1295 = vmatprep.subr.bf16.mxu0 0
  %1296 = vmatpush1.bf16.msra.mxu0 0
  %1297 = vmatprep.subr.bf16.mxu0 0
  %1298 = vmatpush1.bf16.msra.mxu0 0
  %1299 = vmatprep.subr.bf16.mxu0 0
  %1300 = vmatpush1.bf16.msra.mxu0 0
  %1301 = vmatprep.subr.bf16.mxu0 0
  %1302 = vmatpush1.bf16.msra.mxu0 0
  %1303 = vmatprep.subr.bf16.mxu0 0
  %1304 = vmatpush1.bf16.msra.mxu0 0
  %1305 = vmatprep.subr.bf16.mxu0 0
  %1306 = vmatpush1.bf16.msra.mxu0 0
  %1307 = vmatprep.subr.bf16.mxu0 0
  %1308 = vmatpush1.bf16.msra.mxu0 0
  %1309 = vmatprep.subr.bf16.mxu0 0
  %1310 = vmatpush1.bf16.msra.mxu0 0
  %1311 = vmatprep.subr.bf16.mxu0 0
  %1312 = vmatpush1.bf16.msra.mxu0 0
  %1313 = vmatprep.subr.bf16.mxu0 0
  %1314 = vmatpush1.bf16.msra.mxu0 0
  %1315 = vmatprep.subr.bf16.mxu0 0
  %1316 = vmatpush1.bf16.msra.mxu0 0
  %1317 = vmatprep.subr.bf16.mxu0 0
  %1318 = vmatpush1.bf16.msra.mxu0 0
  %1319 = vmatprep.subr.bf16.mxu0 0
  %1320 = vmatpush1.bf16.msra.mxu0 0
  %1321 = vmatprep.mubr.bf16.mxu0 0
  %1322 = vmatmul.mubr.bf16.gmra.mrb[0].mxu0 %v321
  %v1323 = vpop.f32.mrb[0].mxu0
  %v1324 = vadd.f32 0.0, %v1323
  %v1325 = vpop.f32.mrb[0].mxu0
  %v1326 = vadd.f32 0.0, %v1325
  %v1327 = vpop.f32.mrb[0].mxu0
  %v1328 = vpop.f32.mrb[0].mxu0
  %1329 = vdwg.mxu0
  %1330 = vmatprep.subr.bf16.mxu0 %v1142
  %1331 = vmatpush1.bf16.msra.mxu0 %v1141
  %1332 = vmatprep.subr.bf16.mxu0 %v1224
  %1333 = vmatpush1.bf16.msra.mxu0 %v1221
  %1334 = vmatprep.subr.bf16.mxu0 0
  %1335 = vmatpush1.bf16.msra.mxu0 0
  %1336 = vmatprep.subr.bf16.mxu0 0
  %1337 = vmatpush1.bf16.msra.mxu0 0
  %1338 = vmatprep.subr.bf16.mxu0 0
  %1339 = vmatpush1.bf16.msra.mxu0 0
  %1340 = vmatprep.subr.bf16.mxu0 0
  %1341 = vmatpush1.bf16.msra.mxu0 0
  %1342 = vmatprep.subr.bf16.mxu0 0
  %1343 = vmatpush1.bf16.msra.mxu0 0
  %1344 = vmatprep.subr.bf16.mxu0 0
  %1345 = vmatpush1.bf16.msra.mxu0 0
  %1346 = vmatprep.subr.bf16.mxu0 0
  %1347 = vmatpush1.bf16.msra.mxu0 0
  %1348 = vmatprep.subr.bf16.mxu0 0
  %1349 = vmatpush1.bf16.msra.mxu0 0
  %1350 = vmatprep.subr.bf16.mxu0 0
  %1351 = vmatpush1.bf16.msra.mxu0 0
  %1352 = vmatprep.subr.bf16.mxu0 0
  %1353 = vmatpush1.bf16.msra.mxu0 0
  %1354 = vmatprep.subr.bf16.mxu0 0
  %1355 = vmatpush1.bf16.msra.mxu0 0
  %1356 = vmatprep.subr.bf16.mxu0 0
  %1357 = vmatpush1.bf16.msra.mxu0 0
  %1358 = vmatprep.subr.bf16.mxu0 0
  %1359 = vmatpush1.bf16.msra.mxu0 0
  %1360 = vmatprep.subr.bf16.mxu0 0
  %1361 = vmatpush1.bf16.msra.mxu0 0
  %1362 = vmatprep.mubr.bf16.mxu0 0
  %1363 = vmatmul.mubr.bf16.gmra.mrb[0].mxu0 %v321
  %v1364 = vpop.f32.mrb[0].mxu0
  %v1365 = vadd.f32 0.0, %v1364
  %v1366 = vpop.f32.mrb[0].mxu0
  %v1367 = vadd.f32 0.0, %v1366
  %v1368 = vpop.f32.mrb[0].mxu0
  %v1369 = vpop.f32.mrb[0].mxu0
  %1370 = vdwg.mxu0
  %1371 = vmatprep.subr.bf16.mxu0 %v1144
  %1372 = vmatpush1.bf16.msra.mxu0 %v1143
  %1373 = vmatprep.subr.bf16.mxu0 %v1230
  %1374 = vmatpush1.bf16.msra.mxu0 %v1227
  %1375 = vmatprep.subr.bf16.mxu0 0
  %1376 = vmatpush1.bf16.msra.mxu0 0
  %1377 = vmatprep.subr.bf16.mxu0 0
  %1378 = vmatpush1.bf16.msra.mxu0 0
  %1379 = vmatprep.subr.bf16.mxu0 0
  %1380 = vmatpush1.bf16.msra.mxu0 0
  %1381 = vmatprep.subr.bf16.mxu0 0
  %1382 = vmatpush1.bf16.msra.mxu0 0
  %1383 = vmatprep.subr.bf16.mxu0 0
  %1384 = vmatpush1.bf16.msra.mxu0 0
  %1385 = vmatprep.subr.bf16.mxu0 0
  %1386 = vmatpush1.bf16.msra.mxu0 0
  %1387 = vmatprep.subr.bf16.mxu0 0
  %1388 = vmatpush1.bf16.msra.mxu0 0
  %1389 = vmatprep.subr.bf16.mxu0 0
  %1390 = vmatpush1.bf16.msra.mxu0 0
  %1391 = vmatprep.subr.bf16.mxu0 0
  %1392 = vmatpush1.bf16.msra.mxu0 0
  %1393 = vmatprep.subr.bf16.mxu0 0
  %1394 = vmatpush1.bf16.msra.mxu0 0
  %1395 = vmatprep.subr.bf16.mxu0 0
  %1396 = vmatpush1.bf16.msra.mxu0 0
  %1397 = vmatprep.subr.bf16.mxu0 0
  %1398 = vmatpush1.bf16.msra.mxu0 0
  %1399 = vmatprep.subr.bf16.mxu0 0
  %1400 = vmatpush1.bf16.msra.mxu0 0
  %1401 = vmatprep.subr.bf16.mxu0 0
  %1402 = vmatpush1.bf16.msra.mxu0 0
  %1403 = vmatprep.mubr.bf16.mxu0 0
  %1404 = vmatmul.mubr.bf16.gmra.mrb[0].mxu0 %v321
  %v1405 = vpop.f32.mrb[0].mxu0
  %v1406 = vadd.f32 0.0, %v1405
  %v1407 = vpop.f32.mrb[0].mxu0
  %v1408 = vadd.f32 0.0, %v1407
  %v1409 = vpop.f32.mrb[0].mxu0
  %v1410 = vpop.f32.mrb[0].mxu0
  %1411 = vdwg.mxu0
  %1412 = vmatprep.subr.bf16.mxu0 %v1146
  %1413 = vmatpush1.bf16.msra.mxu0 %v1145
  %1414 = vmatprep.subr.bf16.mxu0 %v1236
  %1415 = vmatpush1.bf16.msra.mxu0 %v1233
  %1416 = vmatprep.subr.bf16.mxu0 0
  %1417 = vmatpush1.bf16.msra.mxu0 0
  %1418 = vmatprep.subr.bf16.mxu0 0
  %1419 = vmatpush1.bf16.msra.mxu0 0
  %1420 = vmatprep.subr.bf16.mxu0 0
  %1421 = vmatpush1.bf16.msra.mxu0 0
  %1422 = vmatprep.subr.bf16.mxu0 0
  %1423 = vmatpush1.bf16.msra.mxu0 0
  %1424 = vmatprep.subr.bf16.mxu0 0
  %1425 = vmatpush1.bf16.msra.mxu0 0
  %1426 = vmatprep.subr.bf16.mxu0 0
  %1427 = vmatpush1.bf16.msra.mxu0 0
  %1428 = vmatprep.subr.bf16.mxu0 0
  %1429 = vmatpush1.bf16.msra.mxu0 0
  %1430 = vmatprep.subr.bf16.mxu0 0
  %1431 = vmatpush1.bf16.msra.mxu0 0
  %1432 = vmatprep.subr.bf16.mxu0 0
  %1433 = vmatpush1.bf16.msra.mxu0 0
  %1434 = vmatprep.subr.bf16.mxu0 0
  %1435 = vmatpush1.bf16.msra.mxu0 0
  %1436 = vmatprep.subr.bf16.mxu0 0
  %1437 = vmatpush1.bf16.msra.mxu0 0
  %1438 = vmatprep.subr.bf16.mxu0 0
  %1439 = vmatpush1.bf16.msra.mxu0 0
  %1440 = vmatprep.subr.bf16.mxu0 0
  %1441 = vmatpush1.bf16.msra.mxu0 0
  %1442 = vmatprep.subr.bf16.mxu0 0
  %1443 = vmatpush1.bf16.msra.mxu0 0
  %1444 = vmatprep.mubr.bf16.mxu0 0
  %1445 = vmatmul.mubr.bf16.gmra.mrb[0].mxu0 %v321
  %v1446 = vpop.f32.mrb[0].mxu0
  %v1447 = vadd.f32 0.0, %v1446
  %v1448 = vpop.f32.mrb[0].mxu0
  %v1449 = vadd.f32 0.0, %v1448
  %v1450 = vpop.f32.mrb[0].mxu0
  %v1451 = vpop.f32.mrb[0].mxu0
  %1452 = vdwg.mxu0
  %1453 = vmatprep.subr.bf16.mxu0 %v1148
  %1454 = vmatpush1.bf16.msra.mxu0 %v1147
  %1455 = vmatprep.subr.bf16.mxu0 %v1242
  %1456 = vmatpush1.bf16.msra.mxu0 %v1239
  %1457 = vmatprep.subr.bf16.mxu0 0
  %1458 = vmatpush1.bf16.msra.mxu0 0
  %1459 = vmatprep.subr.bf16.mxu0 0
  %1460 = vmatpush1.bf16.msra.mxu0 0
  %1461 = vmatprep.subr.bf16.mxu0 0
  %1462 = vmatpush1.bf16.msra.mxu0 0
  %1463 = vmatprep.subr.bf16.mxu0 0
  %1464 = vmatpush1.bf16.msra.mxu0 0
  %1465 = vmatprep.subr.bf16.mxu0 0
  %1466 = vmatpush1.bf16.msra.mxu0 0
  %1467 = vmatprep.subr.bf16.mxu0 0
  %1468 = vmatpush1.bf16.msra.mxu0 0
  %1469 = vmatprep.subr.bf16.mxu0 0
  %1470 = vmatpush1.bf16.msra.mxu0 0
  %1471 = vmatprep.subr.bf16.mxu0 0
  %1472 = vmatpush1.bf16.msra.mxu0 0
  %1473 = vmatprep.subr.bf16.mxu0 0
  %1474 = vmatpush1.bf16.msra.mxu0 0
  %1475 = vmatprep.subr.bf16.mxu0 0
  %1476 = vmatpush1.bf16.msra.mxu0 0
  %1477 = vmatprep.subr.bf16.mxu0 0
  %1478 = vmatpush1.bf16.msra.mxu0 0
  %1479 = vmatprep.subr.bf16.mxu0 0
  %1480 = vmatpush1.bf16.msra.mxu0 0
  %1481 = vmatprep.subr.bf16.mxu0 0
  %1482 = vmatpush1.bf16.msra.mxu0 0
  %1483 = vmatprep.subr.bf16.mxu0 0
  %1484 = vmatpush1.bf16.msra.mxu0 0
  %1485 = vmatprep.mubr.bf16.mxu0 0
  %1486 = vmatmul.mubr.bf16.gmra.mrb[0].mxu0 %v321
  %v1487 = vpop.f32.mrb[0].mxu0
  %v1488 = vadd.f32 0.0, %v1487
  %v1489 = vpop.f32.mrb[0].mxu0
  %v1490 = vadd.f32 0.0, %v1489
  %v1491 = vpop.f32.mrb[0].mxu0
  %v1492 = vpop.f32.mrb[0].mxu0
  %1493 = vdwg.mxu0
  %1494 = vmatprep.subr.bf16.mxu0 %v1150
  %1495 = vmatpush1.bf16.msra.mxu0 %v1149
  %1496 = vmatprep.subr.bf16.mxu0 %v1248
  %1497 = vmatpush1.bf16.msra.mxu0 %v1245
  %1498 = vmatprep.subr.bf16.mxu0 0
  %1499 = vmatpush1.bf16.msra.mxu0 0
  %1500 = vmatprep.subr.bf16.mxu0 0
  %1501 = vmatpush1.bf16.msra.mxu0 0
  %1502 = vmatprep.subr.bf16.mxu0 0
  %1503 = vmatpush1.bf16.msra.mxu0 0
  %1504 = vmatprep.subr.bf16.mxu0 0
  %1505 = vmatpush1.bf16.msra.mxu0 0
  %1506 = vmatprep.subr.bf16.mxu0 0
  %1507 = vmatpush1.bf16.msra.mxu0 0
  %1508 = vmatprep.subr.bf16.mxu0 0
  %1509 = vmatpush1.bf16.msra.mxu0 0
  %1510 = vmatprep.subr.bf16.mxu0 0
  %1511 = vmatpush1.bf16.msra.mxu0 0
  %1512 = vmatprep.subr.bf16.mxu0 0
  %1513 = vmatpush1.bf16.msra.mxu0 0
  %1514 = vmatprep.subr.bf16.mxu0 0
  %1515 = vmatpush1.bf16.msra.mxu0 0
  %1516 = vmatprep.subr.bf16.mxu0 0
  %1517 = vmatpush1.bf16.msra.mxu0 0
  %1518 = vmatprep.subr.bf16.mxu0 0
  %1519 = vmatpush1.bf16.msra.mxu0 0
  %1520 = vmatprep.subr.bf16.mxu0 0
  %1521 = vmatpush1.bf16.msra.mxu0 0
  %1522 = vmatprep.subr.bf16.mxu0 0
  %1523 = vmatpush1.bf16.msra.mxu0 0
  %1524 = vmatprep.subr.bf16.mxu0 0
  %1525 = vmatpush1.bf16.msra.mxu0 0
  %1526 = vmatprep.mubr.bf16.mxu0 0
  %1527 = vmatmul.mubr.bf16.gmra.mrb[0].mxu0 %v321
  %v1528 = vpop.f32.mrb[0].mxu0
  %v1529 = vadd.f32 0.0, %v1528
  %v1530 = vpop.f32.mrb[0].mxu0
  %v1531 = vadd.f32 0.0, %v1530
  %v1532 = vpop.f32.mrb[0].mxu0
  %v1533 = vpop.f32.mrb[0].mxu0
  %1534 = vdwg.mxu0
  %1535 = vmatprep.subr.bf16.mxu0 %v1152
  %1536 = vmatpush1.bf16.msra.mxu0 %v1151
  %1537 = vmatprep.subr.bf16.mxu0 %v1254
  %1538 = vmatpush1.bf16.msra.mxu0 %v1251
  %1539 = vmatprep.subr.bf16.mxu0 0
  %1540 = vmatpush1.bf16.msra.mxu0 0
  %1541 = vmatprep.subr.bf16.mxu0 0
  %1542 = vmatpush1.bf16.msra.mxu0 0
  %1543 = vmatprep.subr.bf16.mxu0 0
  %1544 = vmatpush1.bf16.msra.mxu0 0
  %1545 = vmatprep.subr.bf16.mxu0 0
  %1546 = vmatpush1.bf16.msra.mxu0 0
  %1547 = vmatprep.subr.bf16.mxu0 0
  %1548 = vmatpush1.bf16.msra.mxu0 0
  %1549 = vmatprep.subr.bf16.mxu0 0
  %1550 = vmatpush1.bf16.msra.mxu0 0
  %1551 = vmatprep.subr.bf16.mxu0 0
  %1552 = vmatpush1.bf16.msra.mxu0 0
  %1553 = vmatprep.subr.bf16.mxu0 0
  %1554 = vmatpush1.bf16.msra.mxu0 0
  %1555 = vmatprep.subr.bf16.mxu0 0
  %1556 = vmatpush1.bf16.msra.mxu0 0
  %1557 = vmatprep.subr.bf16.mxu0 0
  %1558 = vmatpush1.bf16.msra.mxu0 0
  %1559 = vmatprep.subr.bf16.mxu0 0
  %1560 = vmatpush1.bf16.msra.mxu0 0
  %1561 = vmatprep.subr.bf16.mxu0 0
  %1562 = vmatpush1.bf16.msra.mxu0 0
  %1563 = vmatprep.subr.bf16.mxu0 0
  %1564 = vmatpush1.bf16.msra.mxu0 0
  %1565 = vmatprep.subr.bf16.mxu0 0
  %1566 = vmatpush1.bf16.msra.mxu0 0
  %1567 = vmatprep.mubr.bf16.mxu0 0
  %1568 = vmatmul.mubr.bf16.gmra.mrb[0].mxu0 %v321
  %v1569 = vpop.f32.mrb[0].mxu0
  %v1570 = vadd.f32 0.0, %v1569
  %v1571 = vpop.f32.mrb[0].mxu0
  %v1572 = vadd.f32 0.0, %v1571
  %v1573 = vpop.f32.mrb[0].mxu0
  %v1574 = vpop.f32.mrb[0].mxu0
  %1575 = vdwg.mxu0
  %1576 = vmatprep.subr.bf16.mxu0 %v1154
  %1577 = vmatpush1.bf16.msra.mxu0 %v1153
  %1578 = vmatprep.subr.bf16.mxu0 %v1260
  %1579 = vmatpush1.bf16.msra.mxu0 %v1257
  %1580 = vmatprep.subr.bf16.mxu0 0
  %1581 = vmatpush1.bf16.msra.mxu0 0
  %1582 = vmatprep.subr.bf16.mxu0 0
  %1583 = vmatpush1.bf16.msra.mxu0 0
  %1584 = vmatprep.subr.bf16.mxu0 0
  %1585 = vmatpush1.bf16.msra.mxu0 0
  %1586 = vmatprep.subr.bf16.mxu0 0
  %1587 = vmatpush1.bf16.msra.mxu0 0
  %1588 = vmatprep.subr.bf16.mxu0 0
  %1589 = vmatpush1.bf16.msra.mxu0 0
  %1590 = vmatprep.subr.bf16.mxu0 0
  %1591 = vmatpush1.bf16.msra.mxu0 0
  %1592 = vmatprep.subr.bf16.mxu0 0
  %1593 = vmatpush1.bf16.msra.mxu0 0
  %1594 = vmatprep.subr.bf16.mxu0 0
  %1595 = vmatpush1.bf16.msra.mxu0 0
  %1596 = vmatprep.subr.bf16.mxu0 0
  %1597 = vmatpush1.bf16.msra.mxu0 0
  %1598 = vmatprep.subr.bf16.mxu0 0
  %1599 = vmatpush1.bf16.msra.mxu0 0
  %1600 = vmatprep.subr.bf16.mxu0 0
  %1601 = vmatpush1.bf16.msra.mxu0 0
  %1602 = vmatprep.subr.bf16.mxu0 0
  %1603 = vmatpush1.bf16.msra.mxu0 0
  %1604 = vmatprep.subr.bf16.mxu0 0
  %1605 = vmatpush1.bf16.msra.mxu0 0
  %1606 = vmatprep.subr.bf16.mxu0 0
  %1607 = vmatpush1.bf16.msra.mxu0 0
  %1608 = vmatprep.mubr.bf16.mxu0 0
  %1609 = vmatmul.mubr.bf16.gmra.mrb[0].mxu0 %v321
  %v1610 = vpop.f32.mrb[0].mxu0
  %v1611 = vadd.f32 0.0, %v1610
  %v1612 = vpop.f32.mrb[0].mxu0
  %v1613 = vadd.f32 0.0, %v1612
  %v1614 = vpop.f32.mrb[0].mxu0
  %v1615 = vpop.f32.mrb[0].mxu0
  %1616 = vdwg.mxu0
  %1617 = vmatprep.subr.bf16.mxu0 %v1156
  %1618 = vmatpush1.bf16.msra.mxu0 %v1155
  %1619 = vmatprep.subr.bf16.mxu0 %v1266
  %1620 = vmatpush1.bf16.msra.mxu0 %v1263
  %1621 = vmatprep.subr.bf16.mxu0 0
  %1622 = vmatpush1.bf16.msra.mxu0 0
  %1623 = vmatprep.subr.bf16.mxu0 0
  %1624 = vmatpush1.bf16.msra.mxu0 0
  %1625 = vmatprep.subr.bf16.mxu0 0
  %1626 = vmatpush1.bf16.msra.mxu0 0
  %1627 = vmatprep.subr.bf16.mxu0 0
  %1628 = vmatpush1.bf16.msra.mxu0 0
  %1629 = vmatprep.subr.bf16.mxu0 0
  %1630 = vmatpush1.bf16.msra.mxu0 0
  %1631 = vmatprep.subr.bf16.mxu0 0
  %1632 = vmatpush1.bf16.msra.mxu0 0
  %1633 = vmatprep.subr.bf16.mxu0 0
  %1634 = vmatpush1.bf16.msra.mxu0 0
  %1635 = vmatprep.subr.bf16.mxu0 0
  %1636 = vmatpush1.bf16.msra.mxu0 0
  %1637 = vmatprep.subr.bf16.mxu0 0
  %1638 = vmatpush1.bf16.msra.mxu0 0
  %1639 = vmatprep.subr.bf16.mxu0 0
  %1640 = vmatpush1.bf16.msra.mxu0 0
  %1641 = vmatprep.subr.bf16.mxu0 0
  %1642 = vmatpush1.bf16.msra.mxu0 0
  %1643 = vmatprep.subr.bf16.mxu0 0
  %1644 = vmatpush1.bf16.msra.mxu0 0
  %1645 = vmatprep.subr.bf16.mxu0 0
  %1646 = vmatpush1.bf16.msra.mxu0 0
  %1647 = vmatprep.subr.bf16.mxu0 0
  %1648 = vmatpush1.bf16.msra.mxu0 0
  %1649 = vmatprep.mubr.bf16.mxu0 0
  %1650 = vmatmul.mubr.bf16.gmra.mrb[0].mxu0 %v321
  %v1651 = vpop.f32.mrb[0].mxu0
  %v1652 = vadd.f32 0.0, %v1651
  %v1653 = vpop.f32.mrb[0].mxu0
  %v1654 = vadd.f32 0.0, %v1653
  %v1655 = vpop.f32.mrb[0].mxu0
  %v1656 = vpop.f32.mrb[0].mxu0
  %1657 = vdwg.mxu0
  %1658 = vmatprep.subr.bf16.mxu0 %v1158
  %1659 = vmatpush1.bf16.msra.mxu0 %v1157
  %1660 = vmatprep.subr.bf16.mxu0 %v1272
  %1661 = vmatpush1.bf16.msra.mxu0 %v1269
  %1662 = vmatprep.subr.bf16.mxu0 0
  %1663 = vmatpush1.bf16.msra.mxu0 0
  %1664 = vmatprep.subr.bf16.mxu0 0
  %1665 = vmatpush1.bf16.msra.mxu0 0
  %1666 = vmatprep.subr.bf16.mxu0 0
  %1667 = vmatpush1.bf16.msra.mxu0 0
  %1668 = vmatprep.subr.bf16.mxu0 0
  %1669 = vmatpush1.bf16.msra.mxu0 0
  %1670 = vmatprep.subr.bf16.mxu0 0
  %1671 = vmatpush1.bf16.msra.mxu0 0
  %1672 = vmatprep.subr.bf16.mxu0 0
  %1673 = vmatpush1.bf16.msra.mxu0 0
  %1674 = vmatprep.subr.bf16.mxu0 0
  %1675 = vmatpush1.bf16.msra.mxu0 0
  %1676 = vmatprep.subr.bf16.mxu0 0
  %1677 = vmatpush1.bf16.msra.mxu0 0
  %1678 = vmatprep.subr.bf16.mxu0 0
  %1679 = vmatpush1.bf16.msra.mxu0 0
  %1680 = vmatprep.subr.bf16.mxu0 0
  %1681 = vmatpush1.bf16.msra.mxu0 0
  %1682 = vmatprep.subr.bf16.mxu0 0
  %1683 = vmatpush1.bf16.msra.mxu0 0
  %1684 = vmatprep.subr.bf16.mxu0 0
  %1685 = vmatpush1.bf16.msra.mxu0 0
  %1686 = vmatprep.subr.bf16.mxu0 0
  %1687 = vmatpush1.bf16.msra.mxu0 0
  %1688 = vmatprep.subr.bf16.mxu0 0
  %1689 = vmatpush1.bf16.msra.mxu0 0
  %1690 = vmatprep.mubr.bf16.mxu0 0
  %1691 = vmatmul.mubr.bf16.gmra.mrb[0].mxu0 %v321
  %v1692 = vpop.f32.mrb[0].mxu0
  %v1693 = vadd.f32 0.0, %v1692
  %v1694 = vpop.f32.mrb[0].mxu0
  %v1695 = vadd.f32 0.0, %v1694
  %v1696 = vpop.f32.mrb[0].mxu0
  %v1697 = vpop.f32.mrb[0].mxu0
  %1698 = vdwg.mxu0
  %1699 = vmatprep.subr.bf16.mxu0 %v1160
  %1700 = vmatpush1.bf16.msra.mxu0 %v1159
  %1701 = vmatprep.subr.bf16.mxu0 %v1278
  %1702 = vmatpush1.bf16.msra.mxu0 %v1275
  %1703 = vmatprep.subr.bf16.mxu0 0
  %1704 = vmatpush1.bf16.msra.mxu0 0
  %1705 = vmatprep.subr.bf16.mxu0 0
  %1706 = vmatpush1.bf16.msra.mxu0 0
  %1707 = vmatprep.subr.bf16.mxu0 0
  %1708 = vmatpush1.bf16.msra.mxu0 0
  %1709 = vmatprep.subr.bf16.mxu0 0
  %1710 = vmatpush1.bf16.msra.mxu0 0
  %1711 = vmatprep.subr.bf16.mxu0 0
  %1712 = vmatpush1.bf16.msra.mxu0 0
  %1713 = vmatprep.subr.bf16.mxu0 0
  %1714 = vmatpush1.bf16.msra.mxu0 0
  %1715 = vmatprep.subr.bf16.mxu0 0
  %1716 = vmatpush1.bf16.msra.mxu0 0
  %1717 = vmatprep.subr.bf16.mxu0 0
  %1718 = vmatpush1.bf16.msra.mxu0 0
  %1719 = vmatprep.subr.bf16.mxu0 0
  %1720 = vmatpush1.bf16.msra.mxu0 0
  %1721 = vmatprep.subr.bf16.mxu0 0
  %1722 = vmatpush1.bf16.msra.mxu0 0
  %1723 = vmatprep.subr.bf16.mxu0 0
  %1724 = vmatpush1.bf16.msra.mxu0 0
  %1725 = vmatprep.subr.bf16.mxu0 0
  %1726 = vmatpush1.bf16.msra.mxu0 0
  %1727 = vmatprep.subr.bf16.mxu0 0
  %1728 = vmatpush1.bf16.msra.mxu0 0
  %1729 = vmatprep.subr.bf16.mxu0 0
  %1730 = vmatpush1.bf16.msra.mxu0 0
  %1731 = vmatprep.mubr.bf16.mxu0 0
  %1732 = vmatmul.mubr.bf16.gmra.mrb[0].mxu0 %v321
  %v1733 = vpop.f32.mrb[0].mxu0
  %v1734 = vadd.f32 0.0, %v1733
  %v1735 = vpop.f32.mrb[0].mxu0
  %v1736 = vadd.f32 0.0, %v1735
  %v1737 = vpop.f32.mrb[0].mxu0
  %v1738 = vpop.f32.mrb[0].mxu0
  %1739 = vdwg.mxu0
  %1740 = vmatprep.subr.bf16.mxu0 %v1162
  %1741 = vmatpush1.bf16.msra.mxu0 %v1161
  %1742 = vmatprep.subr.bf16.mxu0 %v1284
  %1743 = vmatpush1.bf16.msra.mxu0 %v1281
  %1744 = vmatprep.subr.bf16.mxu0 0
  %1745 = vmatpush1.bf16.msra.mxu0 0
  %1746 = vmatprep.subr.bf16.mxu0 0
  %1747 = vmatpush1.bf16.msra.mxu0 0
  %1748 = vmatprep.subr.bf16.mxu0 0
  %1749 = vmatpush1.bf16.msra.mxu0 0
  %1750 = vmatprep.subr.bf16.mxu0 0
  %1751 = vmatpush1.bf16.msra.mxu0 0
  %1752 = vmatprep.subr.bf16.mxu0 0
  %1753 = vmatpush1.bf16.msra.mxu0 0
  %1754 = vmatprep.subr.bf16.mxu0 0
  %1755 = vmatpush1.bf16.msra.mxu0 0
  %1756 = vmatprep.subr.bf16.mxu0 0
  %1757 = vmatpush1.bf16.msra.mxu0 0
  %1758 = vmatprep.subr.bf16.mxu0 0
  %1759 = vmatpush1.bf16.msra.mxu0 0
  %1760 = vmatprep.subr.bf16.mxu0 0
  %1761 = vmatpush1.bf16.msra.mxu0 0
  %1762 = vmatprep.subr.bf16.mxu0 0
  %1763 = vmatpush1.bf16.msra.mxu0 0
  %1764 = vmatprep.subr.bf16.mxu0 0
  %1765 = vmatpush1.bf16.msra.mxu0 0
  %1766 = vmatprep.subr.bf16.mxu0 0
  %1767 = vmatpush1.bf16.msra.mxu0 0
  %1768 = vmatprep.subr.bf16.mxu0 0
  %1769 = vmatpush1.bf16.msra.mxu0 0
  %1770 = vmatprep.subr.bf16.mxu0 0
  %1771 = vmatpush1.bf16.msra.mxu0 0
  %1772 = vmatprep.mubr.bf16.mxu0 0
  %1773 = vmatmul.mubr.bf16.gmra.mrb[0].mxu0 %v321
  %v1774 = vpop.f32.mrb[0].mxu0
  %v1775 = vadd.f32 0.0, %v1774
  %v1776 = vpop.f32.mrb[0].mxu0
  %v1777 = vadd.f32 0.0, %v1776
  %v1778 = vpop.f32.mrb[0].mxu0
  %v1779 = vpop.f32.mrb[0].mxu0
  %1780 = vdwg.mxu0
  %1781 = vmatprep.subr.bf16.mxu0 0
  %1782 = vmatpush1.bf16.msra.mxu0 %v1163
  %1783 = vmatprep.subr.bf16.mxu0 0
  %1784 = vmatpush1.bf16.msra.mxu0 %v1287
  %1785 = vmatprep.subr.bf16.mxu0 0
  %1786 = vmatpush1.bf16.msra.mxu0 0
  %1787 = vmatprep.subr.bf16.mxu0 0
  %1788 = vmatpush1.bf16.msra.mxu0 0
  %1789 = vmatprep.subr.bf16.mxu0 0
  %1790 = vmatpush1.bf16.msra.mxu0 0
  %1791 = vmatprep.subr.bf16.mxu0 0
  %1792 = vmatpush1.bf16.msra.mxu0 0
  %1793 = vmatprep.subr.bf16.mxu0 0
  %1794 = vmatpush1.bf16.msra.mxu0 0
  %1795 = vmatprep.subr.bf16.mxu0 0
  %1796 = vmatpush1.bf16.msra.mxu0 0
  %1797 = vmatprep.subr.bf16.mxu0 0
  %1798 = vmatpush1.bf16.msra.mxu0 0
  %1799 = vmatprep.subr.bf16.mxu0 0
  %1800 = vmatpush1.bf16.msra.mxu0 0
  %1801 = vmatprep.subr.bf16.mxu0 0
  %1802 = vmatpush1.bf16.msra.mxu0 0
  %1803 = vmatprep.subr.bf16.mxu0 0
  %1804 = vmatpush1.bf16.msra.mxu0 0
  %1805 = vmatprep.subr.bf16.mxu0 0
  %1806 = vmatpush1.bf16.msra.mxu0 0
  %1807 = vmatprep.subr.bf16.mxu0 0
  %1808 = vmatpush1.bf16.msra.mxu0 0
  %1809 = vmatprep.subr.bf16.mxu0 0
  %1810 = vmatpush1.bf16.msra.mxu0 0
  %1811 = vmatprep.subr.bf16.mxu0 0
  %1812 = vmatpush1.bf16.msra.mxu0 0
  %1813 = vmatprep.mubr.bf16.mxu0 0
  %1814 = vmatmul.mubr.bf16.gmra.mrb[0].mxu0 %v321
  %v1815 = vpop.f32.mrb[0].mxu0
  %v1816 = vadd.f32 0.0, %v1815
  %v1817 = vpop.f32.mrb[0].mxu0
  %v1818 = vpop.f32.mrb[0].mxu0
  %v1819 = vpop.f32.mrb[0].mxu0
  %1820 = vdwg.mxu0
  %v1821 = vmax.f32 %v437, %v1324
  %v1822 = vmax.f32 %v439, %v1326
  %v1823 = vmax.f32 %v478, %v1365
  %v1824 = vmax.f32 %v480, %v1367
  %v1825 = vmax.f32 %v519, %v1406
  %v1826 = vmax.f32 %v521, %v1408
  %v1827 = vmax.f32 %v560, %v1447
  %v1828 = vmax.f32 %v562, %v1449
  %v1829 = vmax.f32 %v601, %v1488
  %v1830 = vmax.f32 %v603, %v1490
  %v1831 = vmax.f32 %v642, %v1529
  %v1832 = vmax.f32 %v644, %v1531
  %v1833 = vmax.f32 %v683, %v1570
  %v1834 = vmax.f32 %v685, %v1572
  %v1835 = vmax.f32 %v724, %v1611
  %v1836 = vmax.f32 %v726, %v1613
  %v1837 = vmax.f32 %v765, %v1652
  %v1838 = vmax.f32 %v767, %v1654
  %v1839 = vmax.f32 %v806, %v1693
  %v1840 = vmax.f32 %v808, %v1695
  %v1841 = vmax.f32 %v847, %v1734
  %v1842 = vmax.f32 %v849, %v1736
  %v1843 = vmax.f32 %v888, %v1775
  %v1844 = vmax.f32 %v890, %v1777
  %v1845 = vmax.f32 %v929, %v1816
  %s1846 = scalar_lea.vmem %s0, 800
  %v1847 = vld [vmem:[%s1846] sm:$0xff]
  %v1848 = vld [vmem:[%s1846 + $0x8] sm:$0xff]
  %v1849 = vld [vmem:[%s1846 + $0x10] sm:$0xff]
  %v1850 = vld [vmem:[%s1846 + $0x18] sm:$0xff]
  %v1851 = vld [vmem:[%s1846 + $0x20] sm:$0xff]
  %v1852 = vld [vmem:[%s1846 + $0x28] sm:$0xff]
  %v1853 = vld [vmem:[%s1846 + $0x30] sm:$0xff]
  %v1854 = vld [vmem:[%s1846 + $0x38] sm:$0xff]
  %v1855 = vld [vmem:[%s1846 + $0x40] sm:$0xff]
  %v1856 = vld [vmem:[%s1846 + $0x48] sm:$0xff]
  %v1857 = vld [vmem:[%s1846 + $0x50] sm:$0xff]
  %v1858 = vld [vmem:[%s1846 + $0x58] sm:$0xff]
  %v1859 = vld [vmem:[%s1846 + $0x60] sm:$0xf]
  %v1860 = vld [vmem:[%s1846 + $0x64] sm:$0xff]
  %v1861 = vld [vmem:[%s1846 + $0x6c] sm:$0xff]
  %v1862 = vld [vmem:[%s1846 + $0x74] sm:$0xff]
  %v1863 = vld [vmem:[%s1846 + $0x7c] sm:$0xff]
  %v1864 = vld [vmem:[%s1846 + $0x84] sm:$0xff]
  %v1865 = vld [vmem:[%s1846 + $0x8c] sm:$0xff]
  %v1866 = vld [vmem:[%s1846 + $0x94] sm:$0xff]
  %v1867 = vld [vmem:[%s1846 + $0x9c] sm:$0xff]
  %v1868 = vld [vmem:[%s1846 + $0xa4] sm:$0xff]
  %v1869 = vld [vmem:[%s1846 + $0xac] sm:$0xff]
  %v1870 = vld [vmem:[%s1846 + $0xb4] sm:$0xff]
  %v1871 = vld [vmem:[%s1846 + $0xbc] sm:$0xff]
  %v1872 = vld [vmem:[%s1846 + $0xc4] sm:$0xf]
  %v1873 = vld [vmem:[%s1846 + $0xc8] sm:$0xff]
  %v1874 = vld [vmem:[%s1846 + $0xd0] sm:$0xff]
  %v1875 = vld [vmem:[%s1846 + $0xd8] sm:$0xff]
  %v1876 = vld [vmem:[%s1846 + $0xe0] sm:$0xff]
  %v1877 = vld [vmem:[%s1846 + $0xe8] sm:$0xff]
  %v1878 = vld [vmem:[%s1846 + $0xf0] sm:$0xff]
  %v1879 = vld [vmem:[%s1846 + $0xf8] sm:$0xff]
  %v1880 = vld [vmem:[%s1846 + $0x100] sm:$0xff]
  %v1881 = vld [vmem:[%s1846 + $0x108] sm:$0xff]
  %v1882 = vld [vmem:[%s1846 + $0x110] sm:$0xff]
  %v1883 = vld [vmem:[%s1846 + $0x118] sm:$0xff]
  %v1884 = vld [vmem:[%s1846 + $0x120] sm:$0xff]
  %v1885 = vld [vmem:[%s1846 + $0x128] sm:$0xf]
  %v1886 = vld [vmem:[%s1846 + $0x12c] sm:$0x11]
  %v1887 = vld [vmem:[%s1846 + $0x134] sm:$0x11]
  %v1888 = vld [vmem:[%s1846 + $0x13c] sm:$0x11]
  %v1889 = vld [vmem:[%s1846 + $0x144] sm:$0x11]
  %v1890 = vld [vmem:[%s1846 + $0x14c] sm:$0x11]
  %v1891 = vld [vmem:[%s1846 + $0x154] sm:$0x11]
  %v1892 = vld [vmem:[%s1846 + $0x15c] sm:$0x11]
  %v1893 = vld [vmem:[%s1846 + $0x164] sm:$0x11]
  %v1894 = vld [vmem:[%s1846 + $0x16c] sm:$0x11]
  %v1895 = vld [vmem:[%s1846 + $0x174] sm:$0x11]
  %v1896 = vld [vmem:[%s1846 + $0x17c] sm:$0x11]
  %v1897 = vld [vmem:[%s1846 + $0x184] sm:$0x11]
  %v1898 = vld [vmem:[%s1846 + $0x18c] sm:$0x1]
  %v1951 = vunpack.c.l.b16 %v1847
  %v1952 = vunpack.c.h.b16 %v1847
  %v1953 = vunpack.c.l.b16 %v1848
  %v1954 = vunpack.c.h.b16 %v1848
  %v1955 = vunpack.c.l.b16 %v1849
  %v1956 = vunpack.c.h.b16 %v1849
  %v1957 = vunpack.c.l.b16 %v1850
  %v1958 = vunpack.c.h.b16 %v1850
  %v1959 = vunpack.c.l.b16 %v1851
  %v1960 = vunpack.c.h.b16 %v1851
  %v1961 = vunpack.c.l.b16 %v1852
  %v1962 = vunpack.c.h.b16 %v1852
  %v1963 = vunpack.c.l.b16 %v1853
  %v1964 = vunpack.c.h.b16 %v1853
  %v1965 = vunpack.c.l.b16 %v1854
  %v1966 = vunpack.c.h.b16 %v1854
  %v1967 = vunpack.c.l.b16 %v1855
  %v1968 = vunpack.c.h.b16 %v1855
  %v1969 = vunpack.c.l.b16 %v1856
  %v1970 = vunpack.c.h.b16 %v1856
  %v1971 = vunpack.c.l.b16 %v1857
  %v1972 = vunpack.c.h.b16 %v1857
  %v1973 = vunpack.c.l.b16 %v1858
  %v1974 = vunpack.c.h.b16 %v1858
  %v1975 = vunpack.c.l.b16 %v1859
  %v1976 = vunpack.c.l.b16 %v1860
  %v1977 = vunpack.c.h.b16 %v1860
  %v1978 = vunpack.c.l.b16 %v1861
  %v1979 = vunpack.c.h.b16 %v1861
  %v1980 = vunpack.c.l.b16 %v1862
  %v1981 = vunpack.c.h.b16 %v1862
  %v1982 = vunpack.c.l.b16 %v1863
  %v1983 = vunpack.c.h.b16 %v1863
  %v1984 = vunpack.c.l.b16 %v1864
  %v1985 = vunpack.c.h.b16 %v1864
  %v1986 = vunpack.c.l.b16 %v1865
  %v1987 = vunpack.c.h.b16 %v1865
  %v1988 = vunpack.c.l.b16 %v1866
  %v1989 = vunpack.c.h.b16 %v1866
  %v1990 = vunpack.c.l.b16 %v1867
  %v1991 = vunpack.c.h.b16 %v1867
  %v1992 = vunpack.c.l.b16 %v1868
  %v1993 = vunpack.c.h.b16 %v1868
  %v1994 = vunpack.c.l.b16 %v1869
  %v1995 = vunpack.c.h.b16 %v1869
  %v1996 = vunpack.c.l.b16 %v1870
  %v1997 = vunpack.c.h.b16 %v1870
  %v1998 = vunpack.c.l.b16 %v1871
  %v1999 = vunpack.c.h.b16 %v1871
  %v2000 = vunpack.c.l.b16 %v1872
  %v2001 = vunpack.c.l.b16 %v1873
  %v2002 = vunpack.c.h.b16 %v1873
  %v2003 = vunpack.c.l.b16 %v1874
  %v2004 = vunpack.c.h.b16 %v1874
  %v2005 = vunpack.c.l.b16 %v1875
  %v2006 = vunpack.c.h.b16 %v1875
  %v2007 = vunpack.c.l.b16 %v1876
  %v2008 = vunpack.c.h.b16 %v1876
  %v2009 = vunpack.c.l.b16 %v1877
  %v2010 = vunpack.c.h.b16 %v1877
  %v2011 = vunpack.c.l.b16 %v1878
  %v2012 = vunpack.c.h.b16 %v1878
  %v2013 = vunpack.c.l.b16 %v1879
  %v2014 = vunpack.c.h.b16 %v1879
  %v2015 = vunpack.c.l.b16 %v1880
  %v2016 = vunpack.c.h.b16 %v1880
  %v2017 = vunpack.c.l.b16 %v1881
  %v2018 = vunpack.c.h.b16 %v1881
  %v2019 = vunpack.c.l.b16 %v1882
  %v2020 = vunpack.c.h.b16 %v1882
  %v2021 = vunpack.c.l.b16 %v1883
  %v2022 = vunpack.c.h.b16 %v1883
  %v2023 = vunpack.c.l.b16 %v1884
  %v2024 = vunpack.c.h.b16 %v1884
  %v2025 = vunpack.c.l.b16 %v1885
  %v2026 = vunpack.c.l.b16 %v1886
  %v2027 = vunpack.c.h.b16 %v1886
  %v2028 = vunpack.c.l.b16 %v1887
  %v2029 = vunpack.c.h.b16 %v1887
  %v2030 = vunpack.c.l.b16 %v1888
  %v2031 = vunpack.c.h.b16 %v1888
  %v2032 = vunpack.c.l.b16 %v1889
  %v2033 = vunpack.c.h.b16 %v1889
  %v2034 = vunpack.c.l.b16 %v1890
  %v2035 = vunpack.c.h.b16 %v1890
  %v2036 = vunpack.c.l.b16 %v1891
  %v2037 = vunpack.c.h.b16 %v1891
  %v2038 = vunpack.c.l.b16 %v1892
  %v2039 = vunpack.c.h.b16 %v1892
  %v2040 = vunpack.c.l.b16 %v1893
  %v2041 = vunpack.c.h.b16 %v1893
  %v2042 = vunpack.c.l.b16 %v1894
  %v2043 = vunpack.c.h.b16 %v1894
  %v2044 = vunpack.c.l.b16 %v1895
  %v2045 = vunpack.c.h.b16 %v1895
  %v2046 = vunpack.c.l.b16 %v1896
  %v2047 = vunpack.c.h.b16 %v1896
  %v2048 = vunpack.c.l.b16 %v1897
  %v2049 = vunpack.c.h.b16 %v1897
  %v2050 = vunpack.c.l.b16 %v1898
  %v2051 = vpack.c.b16 %v1976, %v1951
  %v2052 = vpack.c.b16 %v1977, %v1952
  %v2053 = vpack.c.b16 %v1978, %v1953
  %v2054 = vpack.c.b16 %v1979, %v1954
  %v2055 = vpack.c.b16 %v1980, %v1955
  %v2056 = vpack.c.b16 %v1981, %v1956
  %v2057 = vpack.c.b16 %v1982, %v1957
  %v2058 = vpack.c.b16 %v1983, %v1958
  %v2059 = vpack.c.b16 %v1984, %v1959
  %v2060 = vpack.c.b16 %v1985, %v1960
  %v2061 = vpack.c.b16 %v1986, %v1961
  %v2062 = vpack.c.b16 %v1987, %v1962
  %v2063 = vpack.c.b16 %v1988, %v1963
  %v2064 = vpack.c.b16 %v1989, %v1964
  %v2065 = vpack.c.b16 %v1990, %v1965
  %v2066 = vpack.c.b16 %v1991, %v1966
  %v2067 = vpack.c.b16 %v1992, %v1967
  %v2068 = vpack.c.b16 %v1993, %v1968
  %v2069 = vpack.c.b16 %v1994, %v1969
  %v2070 = vpack.c.b16 %v1995, %v1970
  %v2071 = vpack.c.b16 %v1996, %v1971
  %v2072 = vpack.c.b16 %v1997, %v1972
  %v2073 = vpack.c.b16 %v1998, %v1973
  %v2074 = vpack.c.b16 %v1999, %v1974
  %v2075 = vpack.c.b16 %v2000, %v1975
  %v2076 = vpack.c.b16 %v2026, %v2001
  %v2077 = vpack.c.b16 %v2027, %v2002
  %v2078 = vpack.c.b16 %v2028, %v2003
  %v2079 = vpack.c.b16 %v2029, %v2004
  %v2080 = vpack.c.b16 %v2030, %v2005
  %v2081 = vpack.c.b16 %v2031, %v2006
  %v2082 = vpack.c.b16 %v2032, %v2007
  %v2083 = vpack.c.b16 %v2033, %v2008
  %v2084 = vpack.c.b16 %v2034, %v2009
  %v2085 = vpack.c.b16 %v2035, %v2010
  %v2086 = vpack.c.b16 %v2036, %v2011
  %v2087 = vpack.c.b16 %v2037, %v2012
  %v2088 = vpack.c.b16 %v2038, %v2013
  %v2089 = vpack.c.b16 %v2039, %v2014
  %v2090 = vpack.c.b16 %v2040, %v2015
  %v2091 = vpack.c.b16 %v2041, %v2016
  %v2092 = vpack.c.b16 %v2042, %v2017
  %v2093 = vpack.c.b16 %v2043, %v2018
  %v2094 = vpack.c.b16 %v2044, %v2019
  %v2095 = vpack.c.b16 %v2045, %v2020
  %v2096 = vpack.c.b16 %v2046, %v2021
  %v2097 = vpack.c.b16 %v2047, %v2022
  %v2098 = vpack.c.b16 %v2048, %v2023
  %v2099 = vpack.c.b16 %v2049, %v2024
  %v2100 = vpack.c.b16 %v2050, %v2025
  %v2127 = vand.u32 %v2076, %v326
  %v2130 = vand.u32 %v2077, %v326
  %v2133 = vand.u32 %v2078, %v326
  %v2136 = vand.u32 %v2079, %v326
  %v2139 = vand.u32 %v2080, %v326
  %v2142 = vand.u32 %v2081, %v326
  %v2145 = vand.u32 %v2082, %v326
  %v2148 = vand.u32 %v2083, %v326
  %v2151 = vand.u32 %v2084, %v326
  %v2154 = vand.u32 %v2085, %v326
  %v2157 = vand.u32 %v2086, %v326
  %v2160 = vand.u32 %v2087, %v326
  %v2163 = vand.u32 %v2088, %v326
  %v2166 = vand.u32 %v2089, %v326
  %v2169 = vand.u32 %v2090, %v326
  %v2172 = vand.u32 %v2091, %v326
  %v2175 = vand.u32 %v2092, %v326
  %v2178 = vand.u32 %v2093, %v326
  %v2181 = vand.u32 %v2094, %v326
  %v2184 = vand.u32 %v2095, %v326
  %v2187 = vand.u32 %v2096, %v326
  %v2190 = vand.u32 %v2097, %v326
  %v2193 = vand.u32 %v2098, %v326
  %v2196 = vand.u32 %v2099, %v326
  %v2199 = vand.u32 %v2100, %v326
  %2201 = vmatprep.subr.bf16.mxu0 %v2052
  %2202 = vmatpush1.bf16.msra.mxu0 %v2051
  %2203 = vmatprep.subr.bf16.mxu0 %v2130
  %2204 = vmatpush1.bf16.msra.mxu0 %v2127
  %2205 = vmatprep.subr.bf16.mxu0 0
  %2206 = vmatpush1.bf16.msra.mxu0 0
  %2207 = vmatprep.subr.bf16.mxu0 0
  %2208 = vmatpush1.bf16.msra.mxu0 0
  %2209 = vmatprep.subr.bf16.mxu0 0
  %2210 = vmatpush1.bf16.msra.mxu0 0
  %2211 = vmatprep.subr.bf16.mxu0 0
  %2212 = vmatpush1.bf16.msra.mxu0 0
  %2213 = vmatprep.subr.bf16.mxu0 0
  %2214 = vmatpush1.bf16.msra.mxu0 0
  %2215 = vmatprep.subr.bf16.mxu0 0
  %2216 = vmatpush1.bf16.msra.mxu0 0
  %2217 = vmatprep.subr.bf16.mxu0 0
  %2218 = vmatpush1.bf16.msra.mxu0 0
  %2219 = vmatprep.subr.bf16.mxu0 0
  %2220 = vmatpush1.bf16.msra.mxu0 0
  %2221 = vmatprep.subr.bf16.mxu0 0
  %2222 = vmatpush1.bf16.msra.mxu0 0
  %2223 = vmatprep.subr.bf16.mxu0 0
  %2224 = vmatpush1.bf16.msra.mxu0 0
  %2225 = vmatprep.subr.bf16.mxu0 0
  %2226 = vmatpush1.bf16.msra.mxu0 0
  %2227 = vmatprep.subr.bf16.mxu0 0
  %2228 = vmatpush1.bf16.msra.mxu0 0
  %2229 = vmatprep.subr.bf16.mxu0 0
  %2230 = vmatpush1.bf16.msra.mxu0 0
  %2231 = vmatprep.subr.bf16.mxu0 0
  %2232 = vmatpush1.bf16.msra.mxu0 0
  %2233 = vmatprep.mubr.bf16.mxu0 0
  %2234 = vmatmul.mubr.bf16.gmra.mrb[0].mxu0 %v321
  %v2235 = vpop.f32.mrb[0].mxu0
  %v2236 = vadd.f32 0.0, %v2235
  %v2237 = vpop.f32.mrb[0].mxu0
  %v2238 = vadd.f32 0.0, %v2237
  %v2239 = vpop.f32.mrb[0].mxu0
  %v2240 = vpop.f32.mrb[0].mxu0
  %2241 = vdwg.mxu0
  %2242 = vmatprep.subr.bf16.mxu0 %v2054
  %2243 = vmatpush1.bf16.msra.mxu0 %v2053
  %2244 = vmatprep.subr.bf16.mxu0 %v2136
  %2245 = vmatpush1.bf16.msra.mxu0 %v2133
  %2246 = vmatprep.subr.bf16.mxu0 0
  %2247 = vmatpush1.bf16.msra.mxu0 0
  %2248 = vmatprep.subr.bf16.mxu0 0
  %2249 = vmatpush1.bf16.msra.mxu0 0
  %2250 = vmatprep.subr.bf16.mxu0 0
  %2251 = vmatpush1.bf16.msra.mxu0 0
  %2252 = vmatprep.subr.bf16.mxu0 0
  %2253 = vmatpush1.bf16.msra.mxu0 0
  %2254 = vmatprep.subr.bf16.mxu0 0
  %2255 = vmatpush1.bf16.msra.mxu0 0
  %2256 = vmatprep.subr.bf16.mxu0 0
  %2257 = vmatpush1.bf16.msra.mxu0 0
  %2258 = vmatprep.subr.bf16.mxu0 0
  %2259 = vmatpush1.bf16.msra.mxu0 0
  %2260 = vmatprep.subr.bf16.mxu0 0
  %2261 = vmatpush1.bf16.msra.mxu0 0
  %2262 = vmatprep.subr.bf16.mxu0 0
  %2263 = vmatpush1.bf16.msra.mxu0 0
  %2264 = vmatprep.subr.bf16.mxu0 0
  %2265 = vmatpush1.bf16.msra.mxu0 0
  %2266 = vmatprep.subr.bf16.mxu0 0
  %2267 = vmatpush1.bf16.msra.mxu0 0
  %2268 = vmatprep.subr.bf16.mxu0 0
  %2269 = vmatpush1.bf16.msra.mxu0 0
  %2270 = vmatprep.subr.bf16.mxu0 0
  %2271 = vmatpush1.bf16.msra.mxu0 0
  %2272 = vmatprep.subr.bf16.mxu0 0
  %2273 = vmatpush1.bf16.msra.mxu0 0
  %2274 = vmatprep.mubr.bf16.mxu0 0
  %2275 = vmatmul.mubr.bf16.gmra.mrb[0].mxu0 %v321
  %v2276 = vpop.f32.mrb[0].mxu0
  %v2277 = vadd.f32 0.0, %v2276
  %v2278 = vpop.f32.mrb[0].mxu0
  %v2279 = vadd.f32 0.0, %v2278
  %v2280 = vpop.f32.mrb[0].mxu0
  %v2281 = vpop.f32.mrb[0].mxu0
  %2282 = vdwg.mxu0
  %2283 = vmatprep.subr.bf16.mxu0 %v2056
  %2284 = vmatpush1.bf16.msra.mxu0 %v2055
  %2285 = vmatprep.subr.bf16.mxu0 %v2142
  %2286 = vmatpush1.bf16.msra.mxu0 %v2139
  %2287 = vmatprep.subr.bf16.mxu0 0
  %2288 = vmatpush1.bf16.msra.mxu0 0
  %2289 = vmatprep.subr.bf16.mxu0 0
  %2290 = vmatpush1.bf16.msra.mxu0 0
  %2291 = vmatprep.subr.bf16.mxu0 0
  %2292 = vmatpush1.bf16.msra.mxu0 0
  %2293 = vmatprep.subr.bf16.mxu0 0
  %2294 = vmatpush1.bf16.msra.mxu0 0
  %2295 = vmatprep.subr.bf16.mxu0 0
  %2296 = vmatpush1.bf16.msra.mxu0 0
  %2297 = vmatprep.subr.bf16.mxu0 0
  %2298 = vmatpush1.bf16.msra.mxu0 0
  %2299 = vmatprep.subr.bf16.mxu0 0
  %2300 = vmatpush1.bf16.msra.mxu0 0
  %2301 = vmatprep.subr.bf16.mxu0 0
  %2302 = vmatpush1.bf16.msra.mxu0 0
  %2303 = vmatprep.subr.bf16.mxu0 0
  %2304 = vmatpush1.bf16.msra.mxu0 0
  %2305 = vmatprep.subr.bf16.mxu0 0
  %2306 = vmatpush1.bf16.msra.mxu0 0
  %2307 = vmatprep.subr.bf16.mxu0 0
  %2308 = vmatpush1.bf16.msra.mxu0 0
  %2309 = vmatprep.subr.bf16.mxu0 0
  %2310 = vmatpush1.bf16.msra.mxu0 0
  %2311 = vmatprep.subr.bf16.mxu0 0
  %2312 = vmatpush1.bf16.msra.mxu0 0
  %2313 = vmatprep.subr.bf16.mxu0 0
  %2314 = vmatpush1.bf16.msra.mxu0 0
  %2315 = vmatprep.mubr.bf16.mxu0 0
  %2316 = vmatmul.mubr.bf16.gmra.mrb[0].mxu0 %v321
  %v2317 = vpop.f32.mrb[0].mxu0
  %v2318 = vadd.f32 0.0, %v2317
  %v2319 = vpop.f32.mrb[0].mxu0
  %v2320 = vadd.f32 0.0, %v2319
  %v2321 = vpop.f32.mrb[0].mxu0
  %v2322 = vpop.f32.mrb[0].mxu0
  %2323 = vdwg.mxu0
  %2324 = vmatprep.subr.bf16.mxu0 %v2058
  %2325 = vmatpush1.bf16.msra.mxu0 %v2057
  %2326 = vmatprep.subr.bf16.mxu0 %v2148
  %2327 = vmatpush1.bf16.msra.mxu0 %v2145
  %2328 = vmatprep.subr.bf16.mxu0 0
  %2329 = vmatpush1.bf16.msra.mxu0 0
  %2330 = vmatprep.subr.bf16.mxu0 0
  %2331 = vmatpush1.bf16.msra.mxu0 0
  %2332 = vmatprep.subr.bf16.mxu0 0
  %2333 = vmatpush1.bf16.msra.mxu0 0
  %2334 = vmatprep.subr.bf16.mxu0 0
  %2335 = vmatpush1.bf16.msra.mxu0 0
  %2336 = vmatprep.subr.bf16.mxu0 0
  %2337 = vmatpush1.bf16.msra.mxu0 0
  %2338 = vmatprep.subr.bf16.mxu0 0
  %2339 = vmatpush1.bf16.msra.mxu0 0
  %2340 = vmatprep.subr.bf16.mxu0 0
  %2341 = vmatpush1.bf16.msra.mxu0 0
  %2342 = vmatprep.subr.bf16.mxu0 0
  %2343 = vmatpush1.bf16.msra.mxu0 0
  %2344 = vmatprep.subr.bf16.mxu0 0
  %2345 = vmatpush1.bf16.msra.mxu0 0
  %2346 = vmatprep.subr.bf16.mxu0 0
  %2347 = vmatpush1.bf16.msra.mxu0 0
  %2348 = vmatprep.subr.bf16.mxu0 0
  %2349 = vmatpush1.bf16.msra.mxu0 0
  %2350 = vmatprep.subr.bf16.mxu0 0
  %2351 = vmatpush1.bf16.msra.mxu0 0
  %2352 = vmatprep.subr.bf16.mxu0 0
  %2353 = vmatpush1.bf16.msra.mxu0 0
  %2354 = vmatprep.subr.bf16.mxu0 0
  %2355 = vmatpush1.bf16.msra.mxu0 0
  %2356 = vmatprep.mubr.bf16.mxu0 0
  %2357 = vmatmul.mubr.bf16.gmra.mrb[0].mxu0 %v321
  %v2358 = vpop.f32.mrb[0].mxu0
  %v2359 = vadd.f32 0.0, %v2358
  %v2360 = vpop.f32.mrb[0].mxu0
  %v2361 = vadd.f32 0.0, %v2360
  %v2362 = vpop.f32.mrb[0].mxu0
  %v2363 = vpop.f32.mrb[0].mxu0
  %2364 = vdwg.mxu0
  %2365 = vmatprep.subr.bf16.mxu0 %v2060
  %2366 = vmatpush1.bf16.msra.mxu0 %v2059
  %2367 = vmatprep.subr.bf16.mxu0 %v2154
  %2368 = vmatpush1.bf16.msra.mxu0 %v2151
  %2369 = vmatprep.subr.bf16.mxu0 0
  %2370 = vmatpush1.bf16.msra.mxu0 0
  %2371 = vmatprep.subr.bf16.mxu0 0
  %2372 = vmatpush1.bf16.msra.mxu0 0
  %2373 = vmatprep.subr.bf16.mxu0 0
  %2374 = vmatpush1.bf16.msra.mxu0 0
  %2375 = vmatprep.subr.bf16.mxu0 0
  %2376 = vmatpush1.bf16.msra.mxu0 0
  %2377 = vmatprep.subr.bf16.mxu0 0
  %2378 = vmatpush1.bf16.msra.mxu0 0
  %2379 = vmatprep.subr.bf16.mxu0 0
  %2380 = vmatpush1.bf16.msra.mxu0 0
  %2381 = vmatprep.subr.bf16.mxu0 0
  %2382 = vmatpush1.bf16.msra.mxu0 0
  %2383 = vmatprep.subr.bf16.mxu0 0
  %2384 = vmatpush1.bf16.msra.mxu0 0
  %2385 = vmatprep.subr.bf16.mxu0 0
  %2386 = vmatpush1.bf16.msra.mxu0 0
  %2387 = vmatprep.subr.bf16.mxu0 0
  %2388 = vmatpush1.bf16.msra.mxu0 0
  %2389 = vmatprep.subr.bf16.mxu0 0
  %2390 = vmatpush1.bf16.msra.mxu0 0
  %2391 = vmatprep.subr.bf16.mxu0 0
  %2392 = vmatpush1.bf16.msra.mxu0 0
  %2393 = vmatprep.subr.bf16.mxu0 0
  %2394 = vmatpush1.bf16.msra.mxu0 0
  %2395 = vmatprep.subr.bf16.mxu0 0
  %2396 = vmatpush1.bf16.msra.mxu0 0
  %2397 = vmatprep.mubr.bf16.mxu0 0
  %2398 = vmatmul.mubr.bf16.gmra.mrb[0].mxu0 %v321
  %v2399 = vpop.f32.mrb[0].mxu0
  %v2400 = vadd.f32 0.0, %v2399
  %v2401 = vpop.f32.mrb[0].mxu0
  %v2402 = vadd.f32 0.0, %v2401
  %v2403 = vpop.f32.mrb[0].mxu0
  %v2404 = vpop.f32.mrb[0].mxu0
  %2405 = vdwg.mxu0
  %2406 = vmatprep.subr.bf16.mxu0 %v2062
  %2407 = vmatpush1.bf16.msra.mxu0 %v2061
  %2408 = vmatprep.subr.bf16.mxu0 %v2160
  %2409 = vmatpush1.bf16.msra.mxu0 %v2157
  %2410 = vmatprep.subr.bf16.mxu0 0
  %2411 = vmatpush1.bf16.msra.mxu0 0
  %2412 = vmatprep.subr.bf16.mxu0 0
  %2413 = vmatpush1.bf16.msra.mxu0 0
  %2414 = vmatprep.subr.bf16.mxu0 0
  %2415 = vmatpush1.bf16.msra.mxu0 0
  %2416 = vmatprep.subr.bf16.mxu0 0
  %2417 = vmatpush1.bf16.msra.mxu0 0
  %2418 = vmatprep.subr.bf16.mxu0 0
  %2419 = vmatpush1.bf16.msra.mxu0 0
  %2420 = vmatprep.subr.bf16.mxu0 0
  %2421 = vmatpush1.bf16.msra.mxu0 0
  %2422 = vmatprep.subr.bf16.mxu0 0
  %2423 = vmatpush1.bf16.msra.mxu0 0
  %2424 = vmatprep.subr.bf16.mxu0 0
  %2425 = vmatpush1.bf16.msra.mxu0 0
  %2426 = vmatprep.subr.bf16.mxu0 0
  %2427 = vmatpush1.bf16.msra.mxu0 0
  %2428 = vmatprep.subr.bf16.mxu0 0
  %2429 = vmatpush1.bf16.msra.mxu0 0
  %2430 = vmatprep.subr.bf16.mxu0 0
  %2431 = vmatpush1.bf16.msra.mxu0 0
  %2432 = vmatprep.subr.bf16.mxu0 0
  %2433 = vmatpush1.bf16.msra.mxu0 0
  %2434 = vmatprep.subr.bf16.mxu0 0
  %2435 = vmatpush1.bf16.msra.mxu0 0
  %2436 = vmatprep.subr.bf16.mxu0 0
  %2437 = vmatpush1.bf16.msra.mxu0 0
  %2438 = vmatprep.mubr.bf16.mxu0 0
  %2439 = vmatmul.mubr.bf16.gmra.mrb[0].mxu0 %v321
  %v2440 = vpop.f32.mrb[0].mxu0
  %v2441 = vadd.f32 0.0, %v2440
  %v2442 = vpop.f32.mrb[0].mxu0
  %v2443 = vadd.f32 0.0, %v2442
  %v2444 = vpop.f32.mrb[0].mxu0
  %v2445 = vpop.f32.mrb[0].mxu0
  %2446 = vdwg.mxu0
  %2447 = vmatprep.subr.bf16.mxu0 %v2064
  %2448 = vmatpush1.bf16.msra.mxu0 %v2063
  %2449 = vmatprep.subr.bf16.mxu0 %v2166
  %2450 = vmatpush1.bf16.msra.mxu0 %v2163
  %2451 = vmatprep.subr.bf16.mxu0 0
  %2452 = vmatpush1.bf16.msra.mxu0 0
  %2453 = vmatprep.subr.bf16.mxu0 0
  %2454 = vmatpush1.bf16.msra.mxu0 0
  %2455 = vmatprep.subr.bf16.mxu0 0
  %2456 = vmatpush1.bf16.msra.mxu0 0
  %2457 = vmatprep.subr.bf16.mxu0 0
  %2458 = vmatpush1.bf16.msra.mxu0 0
  %2459 = vmatprep.subr.bf16.mxu0 0
  %2460 = vmatpush1.bf16.msra.mxu0 0
  %2461 = vmatprep.subr.bf16.mxu0 0
  %2462 = vmatpush1.bf16.msra.mxu0 0
  %2463 = vmatprep.subr.bf16.mxu0 0
  %2464 = vmatpush1.bf16.msra.mxu0 0
  %2465 = vmatprep.subr.bf16.mxu0 0
  %2466 = vmatpush1.bf16.msra.mxu0 0
  %2467 = vmatprep.subr.bf16.mxu0 0
  %2468 = vmatpush1.bf16.msra.mxu0 0
  %2469 = vmatprep.subr.bf16.mxu0 0
  %2470 = vmatpush1.bf16.msra.mxu0 0
  %2471 = vmatprep.subr.bf16.mxu0 0
  %2472 = vmatpush1.bf16.msra.mxu0 0
  %2473 = vmatprep.subr.bf16.mxu0 0
  %2474 = vmatpush1.bf16.msra.mxu0 0
  %2475 = vmatprep.subr.bf16.mxu0 0
  %2476 = vmatpush1.bf16.msra.mxu0 0
  %2477 = vmatprep.subr.bf16.mxu0 0
  %2478 = vmatpush1.bf16.msra.mxu0 0
  %2479 = vmatprep.mubr.bf16.mxu0 0
  %2480 = vmatmul.mubr.bf16.gmra.mrb[0].mxu0 %v321
  %v2481 = vpop.f32.mrb[0].mxu0
  %v2482 = vadd.f32 0.0, %v2481
  %v2483 = vpop.f32.mrb[0].mxu0
  %v2484 = vadd.f32 0.0, %v2483
  %v2485 = vpop.f32.mrb[0].mxu0
  %v2486 = vpop.f32.mrb[0].mxu0
  %2487 = vdwg.mxu0
  %2488 = vmatprep.subr.bf16.mxu0 %v2066
  %2489 = vmatpush1.bf16.msra.mxu0 %v2065
  %2490 = vmatprep.subr.bf16.mxu0 %v2172
  %2491 = vmatpush1.bf16.msra.mxu0 %v2169
  %2492 = vmatprep.subr.bf16.mxu0 0
  %2493 = vmatpush1.bf16.msra.mxu0 0
  %2494 = vmatprep.subr.bf16.mxu0 0
  %2495 = vmatpush1.bf16.msra.mxu0 0
  %2496 = vmatprep.subr.bf16.mxu0 0
  %2497 = vmatpush1.bf16.msra.mxu0 0
  %2498 = vmatprep.subr.bf16.mxu0 0
  %2499 = vmatpush1.bf16.msra.mxu0 0
  %2500 = vmatprep.subr.bf16.mxu0 0
  %2501 = vmatpush1.bf16.msra.mxu0 0
  %2502 = vmatprep.subr.bf16.mxu0 0
  %2503 = vmatpush1.bf16.msra.mxu0 0
  %2504 = vmatprep.subr.bf16.mxu0 0
  %2505 = vmatpush1.bf16.msra.mxu0 0
  %2506 = vmatprep.subr.bf16.mxu0 0
  %2507 = vmatpush1.bf16.msra.mxu0 0
  %2508 = vmatprep.subr.bf16.mxu0 0
  %2509 = vmatpush1.bf16.msra.mxu0 0
  %2510 = vmatprep.subr.bf16.mxu0 0
  %2511 = vmatpush1.bf16.msra.mxu0 0
  %2512 = vmatprep.subr.bf16.mxu0 0
  %2513 = vmatpush1.bf16.msra.mxu0 0
  %2514 = vmatprep.subr.bf16.mxu0 0
  %2515 = vmatpush1.bf16.msra.mxu0 0
  %2516 = vmatprep.subr.bf16.mxu0 0
  %2517 = vmatpush1.bf16.msra.mxu0 0
  %2518 = vmatprep.subr.bf16.mxu0 0
  %2519 = vmatpush1.bf16.msra.mxu0 0
  %2520 = vmatprep.mubr.bf16.mxu0 0
  %2521 = vmatmul.mubr.bf16.gmra.mrb[0].mxu0 %v321
  %v2522 = vpop.f32.mrb[0].mxu0
  %v2523 = vadd.f32 0.0, %v2522
  %v2524 = vpop.f32.mrb[0].mxu0
  %v2525 = vadd.f32 0.0, %v2524
  %v2526 = vpop.f32.mrb[0].mxu0
  %v2527 = vpop.f32.mrb[0].mxu0
  %2528 = vdwg.mxu0
  %2529 = vmatprep.subr.bf16.mxu0 %v2068
  %2530 = vmatpush1.bf16.msra.mxu0 %v2067
  %2531 = vmatprep.subr.bf16.mxu0 %v2178
  %2532 = vmatpush1.bf16.msra.mxu0 %v2175
  %2533 = vmatprep.subr.bf16.mxu0 0
  %2534 = vmatpush1.bf16.msra.mxu0 0
  %2535 = vmatprep.subr.bf16.mxu0 0
  %2536 = vmatpush1.bf16.msra.mxu0 0
  %2537 = vmatprep.subr.bf16.mxu0 0
  %2538 = vmatpush1.bf16.msra.mxu0 0
  %2539 = vmatprep.subr.bf16.mxu0 0
  %2540 = vmatpush1.bf16.msra.mxu0 0
  %2541 = vmatprep.subr.bf16.mxu0 0
  %2542 = vmatpush1.bf16.msra.mxu0 0
  %2543 = vmatprep.subr.bf16.mxu0 0
  %2544 = vmatpush1.bf16.msra.mxu0 0
  %2545 = vmatprep.subr.bf16.mxu0 0
  %2546 = vmatpush1.bf16.msra.mxu0 0
  %2547 = vmatprep.subr.bf16.mxu0 0
  %2548 = vmatpush1.bf16.msra.mxu0 0
  %2549 = vmatprep.subr.bf16.mxu0 0
  %2550 = vmatpush1.bf16.msra.mxu0 0
  %2551 = vmatprep.subr.bf16.mxu0 0
  %2552 = vmatpush1.bf16.msra.mxu0 0
  %2553 = vmatprep.subr.bf16.mxu0 0
  %2554 = vmatpush1.bf16.msra.mxu0 0
  %2555 = vmatprep.subr.bf16.mxu0 0
  %2556 = vmatpush1.bf16.msra.mxu0 0
  %2557 = vmatprep.subr.bf16.mxu0 0
  %2558 = vmatpush1.bf16.msra.mxu0 0
  %2559 = vmatprep.subr.bf16.mxu0 0
  %2560 = vmatpush1.bf16.msra.mxu0 0
  %2561 = vmatprep.mubr.bf16.mxu0 0
  %2562 = vmatmul.mubr.bf16.gmra.mrb[0].mxu0 %v321
  %v2563 = vpop.f32.mrb[0].mxu0
  %v2564 = vadd.f32 0.0, %v2563
  %v2565 = vpop.f32.mrb[0].mxu0
  %v2566 = vadd.f32 0.0, %v2565
  %v2567 = vpop.f32.mrb[0].mxu0
  %v2568 = vpop.f32.mrb[0].mxu0
  %2569 = vdwg.mxu0
  %2570 = vmatprep.subr.bf16.mxu0 %v2070
  %2571 = vmatpush1.bf16.msra.mxu0 %v2069
  %2572 = vmatprep.subr.bf16.mxu0 %v2184
  %2573 = vmatpush1.bf16.msra.mxu0 %v2181
  %2574 = vmatprep.subr.bf16.mxu0 0
  %2575 = vmatpush1.bf16.msra.mxu0 0
  %2576 = vmatprep.subr.bf16.mxu0 0
  %2577 = vmatpush1.bf16.msra.mxu0 0
  %2578 = vmatprep.subr.bf16.mxu0 0
  %2579 = vmatpush1.bf16.msra.mxu0 0
  %2580 = vmatprep.subr.bf16.mxu0 0
  %2581 = vmatpush1.bf16.msra.mxu0 0
  %2582 = vmatprep.subr.bf16.mxu0 0
  %2583 = vmatpush1.bf16.msra.mxu0 0
  %2584 = vmatprep.subr.bf16.mxu0 0
  %2585 = vmatpush1.bf16.msra.mxu0 0
  %2586 = vmatprep.subr.bf16.mxu0 0
  %2587 = vmatpush1.bf16.msra.mxu0 0
  %2588 = vmatprep.subr.bf16.mxu0 0
  %2589 = vmatpush1.bf16.msra.mxu0 0
  %2590 = vmatprep.subr.bf16.mxu0 0
  %2591 = vmatpush1.bf16.msra.mxu0 0
  %2592 = vmatprep.subr.bf16.mxu0 0
  %2593 = vmatpush1.bf16.msra.mxu0 0
  %2594 = vmatprep.subr.bf16.mxu0 0
  %2595 = vmatpush1.bf16.msra.mxu0 0
  %2596 = vmatprep.subr.bf16.mxu0 0
  %2597 = vmatpush1.bf16.msra.mxu0 0
  %2598 = vmatprep.subr.bf16.mxu0 0
  %2599 = vmatpush1.bf16.msra.mxu0 0
  %2600 = vmatprep.subr.bf16.mxu0 0
  %2601 = vmatpush1.bf16.msra.mxu0 0
  %2602 = vmatprep.mubr.bf16.mxu0 0
  %2603 = vmatmul.mubr.bf16.gmra.mrb[0].mxu0 %v321
  %v2604 = vpop.f32.mrb[0].mxu0
  %v2605 = vadd.f32 0.0, %v2604
  %v2606 = vpop.f32.mrb[0].mxu0
  %v2607 = vadd.f32 0.0, %v2606
  %v2608 = vpop.f32.mrb[0].mxu0
  %v2609 = vpop.f32.mrb[0].mxu0
  %2610 = vdwg.mxu0
  %2611 = vmatprep.subr.bf16.mxu0 %v2072
  %2612 = vmatpush1.bf16.msra.mxu0 %v2071
  %2613 = vmatprep.subr.bf16.mxu0 %v2190
  %2614 = vmatpush1.bf16.msra.mxu0 %v2187
  %2615 = vmatprep.subr.bf16.mxu0 0
  %2616 = vmatpush1.bf16.msra.mxu0 0
  %2617 = vmatprep.subr.bf16.mxu0 0
  %2618 = vmatpush1.bf16.msra.mxu0 0
  %2619 = vmatprep.subr.bf16.mxu0 0
  %2620 = vmatpush1.bf16.msra.mxu0 0
  %2621 = vmatprep.subr.bf16.mxu0 0
  %2622 = vmatpush1.bf16.msra.mxu0 0
  %2623 = vmatprep.subr.bf16.mxu0 0
  %2624 = vmatpush1.bf16.msra.mxu0 0
  %2625 = vmatprep.subr.bf16.mxu0 0
  %2626 = vmatpush1.bf16.msra.mxu0 0
  %2627 = vmatprep.subr.bf16.mxu0 0
  %2628 = vmatpush1.bf16.msra.mxu0 0
  %2629 = vmatprep.subr.bf16.mxu0 0
  %2630 = vmatpush1.bf16.msra.mxu0 0
  %2631 = vmatprep.subr.bf16.mxu0 0
  %2632 = vmatpush1.bf16.msra.mxu0 0
  %2633 = vmatprep.subr.bf16.mxu0 0
  %2634 = vmatpush1.bf16.msra.mxu0 0
  %2635 = vmatprep.subr.bf16.mxu0 0
  %2636 = vmatpush1.bf16.msra.mxu0 0
  %2637 = vmatprep.subr.bf16.mxu0 0
  %2638 = vmatpush1.bf16.msra.mxu0 0
  %2639 = vmatprep.subr.bf16.mxu0 0
  %2640 = vmatpush1.bf16.msra.mxu0 0
  %2641 = vmatprep.subr.bf16.mxu0 0
  %2642 = vmatpush1.bf16.msra.mxu0 0
  %2643 = vmatprep.mubr.bf16.mxu0 0
  %2644 = vmatmul.mubr.bf16.gmra.mrb[0].mxu0 %v321
  %v2645 = vpop.f32.mrb[0].mxu0
  %v2646 = vadd.f32 0.0, %v2645
  %v2647 = vpop.f32.mrb[0].mxu0
  %v2648 = vadd.f32 0.0, %v2647
  %v2649 = vpop.f32.mrb[0].mxu0
  %v2650 = vpop.f32.mrb[0].mxu0
  %2651 = vdwg.mxu0
  %2652 = vmatprep.subr.bf16.mxu0 %v2074
  %2653 = vmatpush1.bf16.msra.mxu0 %v2073
  %2654 = vmatprep.subr.bf16.mxu0 %v2196
  %2655 = vmatpush1.bf16.msra.mxu0 %v2193
  %2656 = vmatprep.subr.bf16.mxu0 0
  %2657 = vmatpush1.bf16.msra.mxu0 0
  %2658 = vmatprep.subr.bf16.mxu0 0
  %2659 = vmatpush1.bf16.msra.mxu0 0
  %2660 = vmatprep.subr.bf16.mxu0 0
  %2661 = vmatpush1.bf16.msra.mxu0 0
  %2662 = vmatprep.subr.bf16.mxu0 0
  %2663 = vmatpush1.bf16.msra.mxu0 0
  %2664 = vmatprep.subr.bf16.mxu0 0
  %2665 = vmatpush1.bf16.msra.mxu0 0
  %2666 = vmatprep.subr.bf16.mxu0 0
  %2667 = vmatpush1.bf16.msra.mxu0 0
  %2668 = vmatprep.subr.bf16.mxu0 0
  %2669 = vmatpush1.bf16.msra.mxu0 0
  %2670 = vmatprep.subr.bf16.mxu0 0
  %2671 = vmatpush1.bf16.msra.mxu0 0
  %2672 = vmatprep.subr.bf16.mxu0 0
  %2673 = vmatpush1.bf16.msra.mxu0 0
  %2674 = vmatprep.subr.bf16.mxu0 0
  %2675 = vmatpush1.bf16.msra.mxu0 0
  %2676 = vmatprep.subr.bf16.mxu0 0
  %2677 = vmatpush1.bf16.msra.mxu0 0
  %2678 = vmatprep.subr.bf16.mxu0 0
  %2679 = vmatpush1.bf16.msra.mxu0 0
  %2680 = vmatprep.subr.bf16.mxu0 0
  %2681 = vmatpush1.bf16.msra.mxu0 0
  %2682 = vmatprep.subr.bf16.mxu0 0
  %2683 = vmatpush1.bf16.msra.mxu0 0
  %2684 = vmatprep.mubr.bf16.mxu0 0
  %2685 = vmatmul.mubr.bf16.gmra.mrb[0].mxu0 %v321
  %v2686 = vpop.f32.mrb[0].mxu0
  %v2687 = vadd.f32 0.0, %v2686
  %v2688 = vpop.f32.mrb[0].mxu0
  %v2689 = vadd.f32 0.0, %v2688
  %v2690 = vpop.f32.mrb[0].mxu0
  %v2691 = vpop.f32.mrb[0].mxu0
  %2692 = vdwg.mxu0
  %2693 = vmatprep.subr.bf16.mxu0 0
  %2694 = vmatpush1.bf16.msra.mxu0 %v2075
  %2695 = vmatprep.subr.bf16.mxu0 0
  %2696 = vmatpush1.bf16.msra.mxu0 %v2199
  %2697 = vmatprep.subr.bf16.mxu0 0
  %2698 = vmatpush1.bf16.msra.mxu0 0
  %2699 = vmatprep.subr.bf16.mxu0 0
  %2700 = vmatpush1.bf16.msra.mxu0 0
  %2701 = vmatprep.subr.bf16.mxu0 0
  %2702 = vmatpush1.bf16.msra.mxu0 0
  %2703 = vmatprep.subr.bf16.mxu0 0
  %2704 = vmatpush1.bf16.msra.mxu0 0
  %2705 = vmatprep.subr.bf16.mxu0 0
  %2706 = vmatpush1.bf16.msra.mxu0 0
  %2707 = vmatprep.subr.bf16.mxu0 0
  %2708 = vmatpush1.bf16.msra.mxu0 0
  %2709 = vmatprep.subr.bf16.mxu0 0
  %2710 = vmatpush1.bf16.msra.mxu0 0
  %2711 = vmatprep.subr.bf16.mxu0 0
  %2712 = vmatpush1.bf16.msra.mxu0 0
  %2713 = vmatprep.subr.bf16.mxu0 0
  %2714 = vmatpush1.bf16.msra.mxu0 0
  %2715 = vmatprep.subr.bf16.mxu0 0
  %2716 = vmatpush1.bf16.msra.mxu0 0
  %2717 = vmatprep.subr.bf16.mxu0 0
  %2718 = vmatpush1.bf16.msra.mxu0 0
  %2719 = vmatprep.subr.bf16.mxu0 0
  %2720 = vmatpush1.bf16.msra.mxu0 0
  %2721 = vmatprep.subr.bf16.mxu0 0
  %2722 = vmatpush1.bf16.msra.mxu0 0
  %2723 = vmatprep.subr.bf16.mxu0 0
  %2724 = vmatpush1.bf16.msra.mxu0 0
  %2725 = vmatprep.mubr.bf16.mxu0 0
  %2726 = vmatmul.mubr.bf16.gmra.mrb[0].mxu0 %v321
  %v2727 = vpop.f32.mrb[0].mxu0
  %v2728 = vadd.f32 0.0, %v2727
  %v2729 = vpop.f32.mrb[0].mxu0
  %v2730 = vpop.f32.mrb[0].mxu0
  %v2731 = vpop.f32.mrb[0].mxu0
  %2732 = vdwg.mxu0
  %v2733 = vmax.f32 %v1821, %v2236
  %v2734 = vmax.f32 %v1822, %v2238
  %v2735 = vmax.f32 %v1823, %v2277
  %v2736 = vmax.f32 %v1824, %v2279
  %v2737 = vmax.f32 %v1825, %v2318
  %v2738 = vmax.f32 %v1826, %v2320
  %v2739 = vmax.f32 %v1827, %v2359
  %v2740 = vmax.f32 %v1828, %v2361
  %v2741 = vmax.f32 %v1829, %v2400
  %v2742 = vmax.f32 %v1830, %v2402
  %v2743 = vmax.f32 %v1831, %v2441
  %v2744 = vmax.f32 %v1832, %v2443
  %v2745 = vmax.f32 %v1833, %v2482
  %v2746 = vmax.f32 %v1834, %v2484
  %v2747 = vmax.f32 %v1835, %v2523
  %v2748 = vmax.f32 %v1836, %v2525
  %v2749 = vmax.f32 %v1837, %v2564
  %v2750 = vmax.f32 %v1838, %v2566
  %v2751 = vmax.f32 %v1839, %v2605
  %v2752 = vmax.f32 %v1840, %v2607
  %v2753 = vmax.f32 %v1841, %v2646
  %v2754 = vmax.f32 %v1842, %v2648
  %v2755 = vmax.f32 %v1843, %v2687
  %v2756 = vmax.f32 %v1844, %v2689
  %v2757 = vmax.f32 %v1845, %v2728
  %s2758 = scalar_lea.vmem %s0, 1200
  %v2759 = vld [vmem:[%s2758] sm:$0xff]
  %v2760 = vld [vmem:[%s2758 + $0x8] sm:$0xff]
  %v2761 = vld [vmem:[%s2758 + $0x10] sm:$0xff]
  %v2762 = vld [vmem:[%s2758 + $0x18] sm:$0xff]
  %v2763 = vld [vmem:[%s2758 + $0x20] sm:$0xff]
  %v2764 = vld [vmem:[%s2758 + $0x28] sm:$0xff]
  %v2765 = vld [vmem:[%s2758 + $0x30] sm:$0xff]
  %v2766 = vld [vmem:[%s2758 + $0x38] sm:$0xff]
  %v2767 = vld [vmem:[%s2758 + $0x40] sm:$0xff]
  %v2768 = vld [vmem:[%s2758 + $0x48] sm:$0xff]
  %v2769 = vld [vmem:[%s2758 + $0x50] sm:$0xff]
  %v2770 = vld [vmem:[%s2758 + $0x58] sm:$0xff]
  %v2771 = vld [vmem:[%s2758 + $0x60] sm:$0xf]
  %v2772 = vld [vmem:[%s2758 + $0x64] sm:$0xff]
  %v2773 = vld [vmem:[%s2758 + $0x6c] sm:$0xff]
  %v2774 = vld [vmem:[%s2758 + $0x74] sm:$0xff]
  %v2775 = vld [vmem:[%s2758 + $0x7c] sm:$0xff]
  %v2776 = vld [vmem:[%s2758 + $0x84] sm:$0xff]
  %v2777 = vld [vmem:[%s2758 + $0x8c] sm:$0xff]
  %v2778 = vld [vmem:[%s2758 + $0x94] sm:$0xff]
  %v2779 = vld [vmem:[%s2758 + $0x9c] sm:$0xff]
  %v2780 = vld [vmem:[%s2758 + $0xa4] sm:$0xff]
  %v2781 = vld [vmem:[%s2758 + $0xac] sm:$0xff]
  %v2782 = vld [vmem:[%s2758 + $0xb4] sm:$0xff]
  %v2783 = vld [vmem:[%s2758 + $0xbc] sm:$0xff]
  %v2784 = vld [vmem:[%s2758 + $0xc4] sm:$0xf]
  %v2785 = vld [vmem:[%s2758 + $0xc8] sm:$0xff]
  %v2786 = vld [vmem:[%s2758 + $0xd0] sm:$0xff]
  %v2787 = vld [vmem:[%s2758 + $0xd8] sm:$0xff]
  %v2788 = vld [vmem:[%s2758 + $0xe0] sm:$0xff]
  %v2789 = vld [vmem:[%s2758 + $0xe8] sm:$0xff]
  %v2790 = vld [vmem:[%s2758 + $0xf0] sm:$0xff]
  %v2791 = vld [vmem:[%s2758 + $0xf8] sm:$0xff]
  %v2792 = vld [vmem:[%s2758 + $0x100] sm:$0xff]
  %v2793 = vld [vmem:[%s2758 + $0x108] sm:$0xff]
  %v2794 = vld [vmem:[%s2758 + $0x110] sm:$0xff]
  %v2795 = vld [vmem:[%s2758 + $0x118] sm:$0xff]
  %v2796 = vld [vmem:[%s2758 + $0x120] sm:$0xff]
  %v2797 = vld [vmem:[%s2758 + $0x128] sm:$0xf]
  %v2798 = vld [vmem:[%s2758 + $0x12c] sm:$0x11]
  %v2799 = vld [vmem:[%s2758 + $0x134] sm:$0x11]
  %v2800 = vld [vmem:[%s2758 + $0x13c] sm:$0x11]
  %v2801 = vld [vmem:[%s2758 + $0x144] sm:$0x11]
  %v2802 = vld [vmem:[%s2758 + $0x14c] sm:$0x11]
  %v2803 = vld [vmem:[%s2758 + $0x154] sm:$0x11]
  %v2804 = vld [vmem:[%s2758 + $0x15c] sm:$0x11]
  %v2805 = vld [vmem:[%s2758 + $0x164] sm:$0x11]
  %v2806 = vld [vmem:[%s2758 + $0x16c] sm:$0x11]
  %v2807 = vld [vmem:[%s2758 + $0x174] sm:$0x11]
  %v2808 = vld [vmem:[%s2758 + $0x17c] sm:$0x11]
  %v2809 = vld [vmem:[%s2758 + $0x184] sm:$0x11]
  %v2810 = vld [vmem:[%s2758 + $0x18c] sm:$0x1]
  %v2863 = vunpack.c.l.b16 %v2759
  %v2864 = vunpack.c.h.b16 %v2759
  %v2865 = vunpack.c.l.b16 %v2760
  %v2866 = vunpack.c.h.b16 %v2760
  %v2867 = vunpack.c.l.b16 %v2761
  %v2868 = vunpack.c.h.b16 %v2761
  %v2869 = vunpack.c.l.b16 %v2762
  %v2870 = vunpack.c.h.b16 %v2762
  %v2871 = vunpack.c.l.b16 %v2763
  %v2872 = vunpack.c.h.b16 %v2763
  %v2873 = vunpack.c.l.b16 %v2764
  %v2874 = vunpack.c.h.b16 %v2764
  %v2875 = vunpack.c.l.b16 %v2765
  %v2876 = vunpack.c.h.b16 %v2765
  %v2877 = vunpack.c.l.b16 %v2766
  %v2878 = vunpack.c.h.b16 %v2766
  %v2879 = vunpack.c.l.b16 %v2767
  %v2880 = vunpack.c.h.b16 %v2767
  %v2881 = vunpack.c.l.b16 %v2768
  %v2882 = vunpack.c.h.b16 %v2768
  %v2883 = vunpack.c.l.b16 %v2769
  %v2884 = vunpack.c.h.b16 %v2769
  %v2885 = vunpack.c.l.b16 %v2770
  %v2886 = vunpack.c.h.b16 %v2770
  %v2887 = vunpack.c.l.b16 %v2771
  %v2888 = vunpack.c.l.b16 %v2772
  %v2889 = vunpack.c.h.b16 %v2772
  %v2890 = vunpack.c.l.b16 %v2773
  %v2891 = vunpack.c.h.b16 %v2773
  %v2892 = vunpack.c.l.b16 %v2774
  %v2893 = vunpack.c.h.b16 %v2774
  %v2894 = vunpack.c.l.b16 %v2775
  %v2895 = vunpack.c.h.b16 %v2775
  %v2896 = vunpack.c.l.b16 %v2776
  %v2897 = vunpack.c.h.b16 %v2776
  %v2898 = vunpack.c.l.b16 %v2777
  %v2899 = vunpack.c.h.b16 %v2777
  %v2900 = vunpack.c.l.b16 %v2778
  %v2901 = vunpack.c.h.b16 %v2778
  %v2902 = vunpack.c.l.b16 %v2779
  %v2903 = vunpack.c.h.b16 %v2779
  %v2904 = vunpack.c.l.b16 %v2780
  %v2905 = vunpack.c.h.b16 %v2780
  %v2906 = vunpack.c.l.b16 %v2781
  %v2907 = vunpack.c.h.b16 %v2781
  %v2908 = vunpack.c.l.b16 %v2782
  %v2909 = vunpack.c.h.b16 %v2782
  %v2910 = vunpack.c.l.b16 %v2783
  %v2911 = vunpack.c.h.b16 %v2783
  %v2912 = vunpack.c.l.b16 %v2784
  %v2913 = vunpack.c.l.b16 %v2785
  %v2914 = vunpack.c.h.b16 %v2785
  %v2915 = vunpack.c.l.b16 %v2786
  %v2916 = vunpack.c.h.b16 %v2786
  %v2917 = vunpack.c.l.b16 %v2787
  %v2918 = vunpack.c.h.b16 %v2787
  %v2919 = vunpack.c.l.b16 %v2788
  %v2920 = vunpack.c.h.b16 %v2788
  %v2921 = vunpack.c.l.b16 %v2789
  %v2922 = vunpack.c.h.b16 %v2789
  %v2923 = vunpack.c.l.b16 %v2790
  %v2924 = vunpack.c.h.b16 %v2790
  %v2925 = vunpack.c.l.b16 %v2791
  %v2926 = vunpack.c.h.b16 %v2791
  %v2927 = vunpack.c.l.b16 %v2792
  %v2928 = vunpack.c.h.b16 %v2792
  %v2929 = vunpack.c.l.b16 %v2793
  %v2930 = vunpack.c.h.b16 %v2793
  %v2931 = vunpack.c.l.b16 %v2794
  %v2932 = vunpack.c.h.b16 %v2794
  %v2933 = vunpack.c.l.b16 %v2795
  %v2934 = vunpack.c.h.b16 %v2795
  %v2935 = vunpack.c.l.b16 %v2796
  %v2936 = vunpack.c.h.b16 %v2796
  %v2937 = vunpack.c.l.b16 %v2797
  %v2938 = vunpack.c.l.b16 %v2798
  %v2939 = vunpack.c.h.b16 %v2798
  %v2940 = vunpack.c.l.b16 %v2799
  %v2941 = vunpack.c.h.b16 %v2799
  %v2942 = vunpack.c.l.b16 %v2800
  %v2943 = vunpack.c.h.b16 %v2800
  %v2944 = vunpack.c.l.b16 %v2801
  %v2945 = vunpack.c.h.b16 %v2801
  %v2946 = vunpack.c.l.b16 %v2802
  %v2947 = vunpack.c.h.b16 %v2802
  %v2948 = vunpack.c.l.b16 %v2803
  %v2949 = vunpack.c.h.b16 %v2803
  %v2950 = vunpack.c.l.b16 %v2804
  %v2951 = vunpack.c.h.b16 %v2804
  %v2952 = vunpack.c.l.b16 %v2805
  %v2953 = vunpack.c.h.b16 %v2805
  %v2954 = vunpack.c.l.b16 %v2806
  %v2955 = vunpack.c.h.b16 %v2806
  %v2956 = vunpack.c.l.b16 %v2807
  %v2957 = vunpack.c.h.b16 %v2807
  %v2958 = vunpack.c.l.b16 %v2808
  %v2959 = vunpack.c.h.b16 %v2808
  %v2960 = vunpack.c.l.b16 %v2809
  %v2961 = vunpack.c.h.b16 %v2809
  %v2962 = vunpack.c.l.b16 %v2810
  %v2963 = vpack.c.b16 %v2888, %v2863
  %v2964 = vpack.c.b16 %v2889, %v2864
  %v2965 = vpack.c.b16 %v2890, %v2865
  %v2966 = vpack.c.b16 %v2891, %v2866
  %v2967 = vpack.c.b16 %v2892, %v2867
  %v2968 = vpack.c.b16 %v2893, %v2868
  %v2969 = vpack.c.b16 %v2894, %v2869
  %v2970 = vpack.c.b16 %v2895, %v2870
  %v2971 = vpack.c.b16 %v2896, %v2871
  %v2972 = vpack.c.b16 %v2897, %v2872
  %v2973 = vpack.c.b16 %v2898, %v2873
  %v2974 = vpack.c.b16 %v2899, %v2874
  %v2975 = vpack.c.b16 %v2900, %v2875
  %v2976 = vpack.c.b16 %v2901, %v2876
  %v2977 = vpack.c.b16 %v2902, %v2877
  %v2978 = vpack.c.b16 %v2903, %v2878
  %v2979 = vpack.c.b16 %v2904, %v2879
  %v2980 = vpack.c.b16 %v2905, %v2880
  %v2981 = vpack.c.b16 %v2906, %v2881
  %v2982 = vpack.c.b16 %v2907, %v2882
  %v2983 = vpack.c.b16 %v2908, %v2883
  %v2984 = vpack.c.b16 %v2909, %v2884
  %v2985 = vpack.c.b16 %v2910, %v2885
  %v2986 = vpack.c.b16 %v2911, %v2886
  %v2987 = vpack.c.b16 %v2912, %v2887
  %v2988 = vpack.c.b16 %v2938, %v2913
  %v2989 = vpack.c.b16 %v2939, %v2914
  %v2990 = vpack.c.b16 %v2940, %v2915
  %v2991 = vpack.c.b16 %v2941, %v2916
  %v2992 = vpack.c.b16 %v2942, %v2917
  %v2993 = vpack.c.b16 %v2943, %v2918
  %v2994 = vpack.c.b16 %v2944, %v2919
  %v2995 = vpack.c.b16 %v2945, %v2920
  %v2996 = vpack.c.b16 %v2946, %v2921
  %v2997 = vpack.c.b16 %v2947, %v2922
  %v2998 = vpack.c.b16 %v2948, %v2923
  %v2999 = vpack.c.b16 %v2949, %v2924
  %v3000 = vpack.c.b16 %v2950, %v2925
  %v3001 = vpack.c.b16 %v2951, %v2926
  %v3002 = vpack.c.b16 %v2952, %v2927
  %v3003 = vpack.c.b16 %v2953, %v2928
  %v3004 = vpack.c.b16 %v2954, %v2929
  %v3005 = vpack.c.b16 %v2955, %v2930
  %v3006 = vpack.c.b16 %v2956, %v2931
  %v3007 = vpack.c.b16 %v2957, %v2932
  %v3008 = vpack.c.b16 %v2958, %v2933
  %v3009 = vpack.c.b16 %v2959, %v2934
  %v3010 = vpack.c.b16 %v2960, %v2935
  %v3011 = vpack.c.b16 %v2961, %v2936
  %v3012 = vpack.c.b16 %v2962, %v2937
  %v3039 = vand.u32 %v2988, %v326
  %v3042 = vand.u32 %v2989, %v326
  %v3045 = vand.u32 %v2990, %v326
  %v3048 = vand.u32 %v2991, %v326
  %v3051 = vand.u32 %v2992, %v326
  %v3054 = vand.u32 %v2993, %v326
  %v3057 = vand.u32 %v2994, %v326
  %v3060 = vand.u32 %v2995, %v326
  %v3063 = vand.u32 %v2996, %v326
  %v3066 = vand.u32 %v2997, %v326
  %v3069 = vand.u32 %v2998, %v326
  %v3072 = vand.u32 %v2999, %v326
  %v3075 = vand.u32 %v3000, %v326
  %v3078 = vand.u32 %v3001, %v326
  %v3081 = vand.u32 %v3002, %v326
  %v3084 = vand.u32 %v3003, %v326
  %v3087 = vand.u32 %v3004, %v326
  %v3090 = vand.u32 %v3005, %v326
  %v3093 = vand.u32 %v3006, %v326
  %v3096 = vand.u32 %v3007, %v326
  %v3099 = vand.u32 %v3008, %v326
  %v3102 = vand.u32 %v3009, %v326
  %v3105 = vand.u32 %v3010, %v326
  %v3108 = vand.u32 %v3011, %v326
  %v3111 = vand.u32 %v3012, %v326
  %3113 = vmatprep.subr.bf16.mxu0 %v2964
  %3114 = vmatpush1.bf16.msra.mxu0 %v2963
  %3115 = vmatprep.subr.bf16.mxu0 %v3042
  %3116 = vmatpush1.bf16.msra.mxu0 %v3039
  %3117 = vmatprep.subr.bf16.mxu0 0
  %3118 = vmatpush1.bf16.msra.mxu0 0
  %3119 = vmatprep.subr.bf16.mxu0 0
  %3120 = vmatpush1.bf16.msra.mxu0 0
  %3121 = vmatprep.subr.bf16.mxu0 0
  %3122 = vmatpush1.bf16.msra.mxu0 0
  %3123 = vmatprep.subr.bf16.mxu0 0
  %3124 = vmatpush1.bf16.msra.mxu0 0
  %3125 = vmatprep.subr.bf16.mxu0 0
  %3126 = vmatpush1.bf16.msra.mxu0 0
  %3127 = vmatprep.subr.bf16.mxu0 0
  %3128 = vmatpush1.bf16.msra.mxu0 0
  %3129 = vmatprep.subr.bf16.mxu0 0
  %3130 = vmatpush1.bf16.msra.mxu0 0
  %3131 = vmatprep.subr.bf16.mxu0 0
  %3132 = vmatpush1.bf16.msra.mxu0 0
  %3133 = vmatprep.subr.bf16.mxu0 0
  %3134 = vmatpush1.bf16.msra.mxu0 0
  %3135 = vmatprep.subr.bf16.mxu0 0
  %3136 = vmatpush1.bf16.msra.mxu0 0
  %3137 = vmatprep.subr.bf16.mxu0 0
  %3138 = vmatpush1.bf16.msra.mxu0 0
  %3139 = vmatprep.subr.bf16.mxu0 0
  %3140 = vmatpush1.bf16.msra.mxu0 0
  %3141 = vmatprep.subr.bf16.mxu0 0
  %3142 = vmatpush1.bf16.msra.mxu0 0
  %3143 = vmatprep.subr.bf16.mxu0 0
  %3144 = vmatpush1.bf16.msra.mxu0 0
  %3145 = vmatprep.mubr.bf16.mxu0 0
  %3146 = vmatmul.mubr.bf16.gmra.mrb[0].mxu0 %v321
  %v3147 = vpop.f32.mrb[0].mxu0
  %v3148 = vadd.f32 0.0, %v3147
  %v3149 = vpop.f32.mrb[0].mxu0
  %v3150 = vadd.f32 0.0, %v3149
  %v3151 = vpop.f32.mrb[0].mxu0
  %v3152 = vpop.f32.mrb[0].mxu0
  %3153 = vdwg.mxu0
  %3154 = vmatprep.subr.bf16.mxu0 %v2966
  %3155 = vmatpush1.bf16.msra.mxu0 %v2965
  %3156 = vmatprep.subr.bf16.mxu0 %v3048
  %3157 = vmatpush1.bf16.msra.mxu0 %v3045
  %3158 = vmatprep.subr.bf16.mxu0 0
  %3159 = vmatpush1.bf16.msra.mxu0 0
  %3160 = vmatprep.subr.bf16.mxu0 0
  %3161 = vmatpush1.bf16.msra.mxu0 0
  %3162 = vmatprep.subr.bf16.mxu0 0
  %3163 = vmatpush1.bf16.msra.mxu0 0
  %3164 = vmatprep.subr.bf16.mxu0 0
  %3165 = vmatpush1.bf16.msra.mxu0 0
  %3166 = vmatprep.subr.bf16.mxu0 0
  %3167 = vmatpush1.bf16.msra.mxu0 0
  %3168 = vmatprep.subr.bf16.mxu0 0
  %3169 = vmatpush1.bf16.msra.mxu0 0
  %3170 = vmatprep.subr.bf16.mxu0 0
  %3171 = vmatpush1.bf16.msra.mxu0 0
  %3172 = vmatprep.subr.bf16.mxu0 0
  %3173 = vmatpush1.bf16.msra.mxu0 0
  %3174 = vmatprep.subr.bf16.mxu0 0
  %3175 = vmatpush1.bf16.msra.mxu0 0
  %3176 = vmatprep.subr.bf16.mxu0 0
  %3177 = vmatpush1.bf16.msra.mxu0 0
  %3178 = vmatprep.subr.bf16.mxu0 0
  %3179 = vmatpush1.bf16.msra.mxu0 0
  %3180 = vmatprep.subr.bf16.mxu0 0
  %3181 = vmatpush1.bf16.msra.mxu0 0
  %3182 = vmatprep.subr.bf16.mxu0 0
  %3183 = vmatpush1.bf16.msra.mxu0 0
  %3184 = vmatprep.subr.bf16.mxu0 0
  %3185 = vmatpush1.bf16.msra.mxu0 0
  %3186 = vmatprep.mubr.bf16.mxu0 0
  %3187 = vmatmul.mubr.bf16.gmra.mrb[0].mxu0 %v321
  %v3188 = vpop.f32.mrb[0].mxu0
  %v3189 = vadd.f32 0.0, %v3188
  %v3190 = vpop.f32.mrb[0].mxu0
  %v3191 = vadd.f32 0.0, %v3190
  %v3192 = vpop.f32.mrb[0].mxu0
  %v3193 = vpop.f32.mrb[0].mxu0
  %3194 = vdwg.mxu0
  %3195 = vmatprep.subr.bf16.mxu0 %v2968
  %3196 = vmatpush1.bf16.msra.mxu0 %v2967
  %3197 = vmatprep.subr.bf16.mxu0 %v3054
  %3198 = vmatpush1.bf16.msra.mxu0 %v3051
  %3199 = vmatprep.subr.bf16.mxu0 0
  %3200 = vmatpush1.bf16.msra.mxu0 0
  %3201 = vmatprep.subr.bf16.mxu0 0
  %3202 = vmatpush1.bf16.msra.mxu0 0
  %3203 = vmatprep.subr.bf16.mxu0 0
  %3204 = vmatpush1.bf16.msra.mxu0 0
  %3205 = vmatprep.subr.bf16.mxu0 0
  %3206 = vmatpush1.bf16.msra.mxu0 0
  %3207 = vmatprep.subr.bf16.mxu0 0
  %3208 = vmatpush1.bf16.msra.mxu0 0
  %3209 = vmatprep.subr.bf16.mxu0 0
  %3210 = vmatpush1.bf16.msra.mxu0 0
  %3211 = vmatprep.subr.bf16.mxu0 0
  %3212 = vmatpush1.bf16.msra.mxu0 0
  %3213 = vmatprep.subr.bf16.mxu0 0
  %3214 = vmatpush1.bf16.msra.mxu0 0
  %3215 = vmatprep.subr.bf16.mxu0 0
  %3216 = vmatpush1.bf16.msra.mxu0 0
  %3217 = vmatprep.subr.bf16.mxu0 0
  %3218 = vmatpush1.bf16.msra.mxu0 0
  %3219 = vmatprep.subr.bf16.mxu0 0
  %3220 = vmatpush1.bf16.msra.mxu0 0
  %3221 = vmatprep.subr.bf16.mxu0 0
  %3222 = vmatpush1.bf16.msra.mxu0 0
  %3223 = vmatprep.subr.bf16.mxu0 0
  %3224 = vmatpush1.bf16.msra.mxu0 0
  %3225 = vmatprep.subr.bf16.mxu0 0
  %3226 = vmatpush1.bf16.msra.mxu0 0
  %3227 = vmatprep.mubr.bf16.mxu0 0
  %3228 = vmatmul.mubr.bf16.gmra.mrb[0].mxu0 %v321
  %v3229 = vpop.f32.mrb[0].mxu0
  %v3230 = vadd.f32 0.0, %v3229
  %v3231 = vpop.f32.mrb[0].mxu0
  %v3232 = vadd.f32 0.0, %v3231
  %v3233 = vpop.f32.mrb[0].mxu0
  %v3234 = vpop.f32.mrb[0].mxu0
  %3235 = vdwg.mxu0
  %3236 = vmatprep.subr.bf16.mxu0 %v2970
  %3237 = vmatpush1.bf16.msra.mxu0 %v2969
  %3238 = vmatprep.subr.bf16.mxu0 %v3060
  %3239 = vmatpush1.bf16.msra.mxu0 %v3057
  %3240 = vmatprep.subr.bf16.mxu0 0
  %3241 = vmatpush1.bf16.msra.mxu0 0
  %3242 = vmatprep.subr.bf16.mxu0 0
  %3243 = vmatpush1.bf16.msra.mxu0 0
  %3244 = vmatprep.subr.bf16.mxu0 0
  %3245 = vmatpush1.bf16.msra.mxu0 0
  %3246 = vmatprep.subr.bf16.mxu0 0
  %3247 = vmatpush1.bf16.msra.mxu0 0
  %3248 = vmatprep.subr.bf16.mxu0 0
  %3249 = vmatpush1.bf16.msra.mxu0 0
  %3250 = vmatprep.subr.bf16.mxu0 0
  %3251 = vmatpush1.bf16.msra.mxu0 0
  %3252 = vmatprep.subr.bf16.mxu0 0
  %3253 = vmatpush1.bf16.msra.mxu0 0
  %3254 = vmatprep.subr.bf16.mxu0 0
  %3255 = vmatpush1.bf16.msra.mxu0 0
  %3256 = vmatprep.subr.bf16.mxu0 0
  %3257 = vmatpush1.bf16.msra.mxu0 0
  %3258 = vmatprep.subr.bf16.mxu0 0
  %3259 = vmatpush1.bf16.msra.mxu0 0
  %3260 = vmatprep.subr.bf16.mxu0 0
  %3261 = vmatpush1.bf16.msra.mxu0 0
  %3262 = vmatprep.subr.bf16.mxu0 0
  %3263 = vmatpush1.bf16.msra.mxu0 0
  %3264 = vmatprep.subr.bf16.mxu0 0
  %3265 = vmatpush1.bf16.msra.mxu0 0
  %3266 = vmatprep.subr.bf16.mxu0 0
  %3267 = vmatpush1.bf16.msra.mxu0 0
  %3268 = vmatprep.mubr.bf16.mxu0 0
  %3269 = vmatmul.mubr.bf16.gmra.mrb[0].mxu0 %v321
  %v3270 = vpop.f32.mrb[0].mxu0
  %v3271 = vadd.f32 0.0, %v3270
  %v3272 = vpop.f32.mrb[0].mxu0
  %v3273 = vadd.f32 0.0, %v3272
  %v3274 = vpop.f32.mrb[0].mxu0
  %v3275 = vpop.f32.mrb[0].mxu0
  %3276 = vdwg.mxu0
  %3277 = vmatprep.subr.bf16.mxu0 %v2972
  %3278 = vmatpush1.bf16.msra.mxu0 %v2971
  %3279 = vmatprep.subr.bf16.mxu0 %v3066
  %3280 = vmatpush1.bf16.msra.mxu0 %v3063
  %3281 = vmatprep.subr.bf16.mxu0 0
  %3282 = vmatpush1.bf16.msra.mxu0 0
  %3283 = vmatprep.subr.bf16.mxu0 0
  %3284 = vmatpush1.bf16.msra.mxu0 0
  %3285 = vmatprep.subr.bf16.mxu0 0
  %3286 = vmatpush1.bf16.msra.mxu0 0
  %3287 = vmatprep.subr.bf16.mxu0 0
  %3288 = vmatpush1.bf16.msra.mxu0 0
  %3289 = vmatprep.subr.bf16.mxu0 0
  %3290 = vmatpush1.bf16.msra.mxu0 0
  %3291 = vmatprep.subr.bf16.mxu0 0
  %3292 = vmatpush1.bf16.msra.mxu0 0
  %3293 = vmatprep.subr.bf16.mxu0 0
  %3294 = vmatpush1.bf16.msra.mxu0 0
  %3295 = vmatprep.subr.bf16.mxu0 0
  %3296 = vmatpush1.bf16.msra.mxu0 0
  %3297 = vmatprep.subr.bf16.mxu0 0
  %3298 = vmatpush1.bf16.msra.mxu0 0
  %3299 = vmatprep.subr.bf16.mxu0 0
  %3300 = vmatpush1.bf16.msra.mxu0 0
  %3301 = vmatprep.subr.bf16.mxu0 0
  %3302 = vmatpush1.bf16.msra.mxu0 0
  %3303 = vmatprep.subr.bf16.mxu0 0
  %3304 = vmatpush1.bf16.msra.mxu0 0
  %3305 = vmatprep.subr.bf16.mxu0 0
  %3306 = vmatpush1.bf16.msra.mxu0 0
  %3307 = vmatprep.subr.bf16.mxu0 0
  %3308 = vmatpush1.bf16.msra.mxu0 0
  %3309 = vmatprep.mubr.bf16.mxu0 0
  %3310 = vmatmul.mubr.bf16.gmra.mrb[0].mxu0 %v321
  %v3311 = vpop.f32.mrb[0].mxu0
  %v3312 = vadd.f32 0.0, %v3311
  %v3313 = vpop.f32.mrb[0].mxu0
  %v3314 = vadd.f32 0.0, %v3313
  %v3315 = vpop.f32.mrb[0].mxu0
  %v3316 = vpop.f32.mrb[0].mxu0
  %3317 = vdwg.mxu0
  %3318 = vmatprep.subr.bf16.mxu0 %v2974
  %3319 = vmatpush1.bf16.msra.mxu0 %v2973
  %3320 = vmatprep.subr.bf16.mxu0 %v3072
  %3321 = vmatpush1.bf16.msra.mxu0 %v3069
  %3322 = vmatprep.subr.bf16.mxu0 0
  %3323 = vmatpush1.bf16.msra.mxu0 0
  %3324 = vmatprep.subr.bf16.mxu0 0
  %3325 = vmatpush1.bf16.msra.mxu0 0
  %3326 = vmatprep.subr.bf16.mxu0 0
  %3327 = vmatpush1.bf16.msra.mxu0 0
  %3328 = vmatprep.subr.bf16.mxu0 0
  %3329 = vmatpush1.bf16.msra.mxu0 0
  %3330 = vmatprep.subr.bf16.mxu0 0
  %3331 = vmatpush1.bf16.msra.mxu0 0
  %3332 = vmatprep.subr.bf16.mxu0 0
  %3333 = vmatpush1.bf16.msra.mxu0 0
  %3334 = vmatprep.subr.bf16.mxu0 0
  %3335 = vmatpush1.bf16.msra.mxu0 0
  %3336 = vmatprep.subr.bf16.mxu0 0
  %3337 = vmatpush1.bf16.msra.mxu0 0
  %3338 = vmatprep.subr.bf16.mxu0 0
  %3339 = vmatpush1.bf16.msra.mxu0 0
  %3340 = vmatprep.subr.bf16.mxu0 0
  %3341 = vmatpush1.bf16.msra.mxu0 0
  %3342 = vmatprep.subr.bf16.mxu0 0
  %3343 = vmatpush1.bf16.msra.mxu0 0
  %3344 = vmatprep.subr.bf16.mxu0 0
  %3345 = vmatpush1.bf16.msra.mxu0 0
  %3346 = vmatprep.subr.bf16.mxu0 0
  %3347 = vmatpush1.bf16.msra.mxu0 0
  %3348 = vmatprep.subr.bf16.mxu0 0
  %3349 = vmatpush1.bf16.msra.mxu0 0
  %3350 = vmatprep.mubr.bf16.mxu0 0
  %3351 = vmatmul.mubr.bf16.gmra.mrb[0].mxu0 %v321
  %v3352 = vpop.f32.mrb[0].mxu0
  %v3353 = vadd.f32 0.0, %v3352
  %v3354 = vpop.f32.mrb[0].mxu0
  %v3355 = vadd.f32 0.0, %v3354
  %v3356 = vpop.f32.mrb[0].mxu0
  %v3357 = vpop.f32.mrb[0].mxu0
  %3358 = vdwg.mxu0
  %3359 = vmatprep.subr.bf16.mxu0 %v2976
  %3360 = vmatpush1.bf16.msra.mxu0 %v2975
  %3361 = vmatprep.subr.bf16.mxu0 %v3078
  %3362 = vmatpush1.bf16.msra.mxu0 %v3075
  %3363 = vmatprep.subr.bf16.mxu0 0
  %3364 = vmatpush1.bf16.msra.mxu0 0
  %3365 = vmatprep.subr.bf16.mxu0 0
  %3366 = vmatpush1.bf16.msra.mxu0 0
  %3367 = vmatprep.subr.bf16.mxu0 0
  %3368 = vmatpush1.bf16.msra.mxu0 0
  %3369 = vmatprep.subr.bf16.mxu0 0
  %3370 = vmatpush1.bf16.msra.mxu0 0
  %3371 = vmatprep.subr.bf16.mxu0 0
  %3372 = vmatpush1.bf16.msra.mxu0 0
  %3373 = vmatprep.subr.bf16.mxu0 0
  %3374 = vmatpush1.bf16.msra.mxu0 0
  %3375 = vmatprep.subr.bf16.mxu0 0
  %3376 = vmatpush1.bf16.msra.mxu0 0
  %3377 = vmatprep.subr.bf16.mxu0 0
  %3378 = vmatpush1.bf16.msra.mxu0 0
  %3379 = vmatprep.subr.bf16.mxu0 0
  %3380 = vmatpush1.bf16.msra.mxu0 0
  %3381 = vmatprep.subr.bf16.mxu0 0
  %3382 = vmatpush1.bf16.msra.mxu0 0
  %3383 = vmatprep.subr.bf16.mxu0 0
  %3384 = vmatpush1.bf16.msra.mxu0 0
  %3385 = vmatprep.subr.bf16.mxu0 0
  %3386 = vmatpush1.bf16.msra.mxu0 0
  %3387 = vmatprep.subr.bf16.mxu0 0
  %3388 = vmatpush1.bf16.msra.mxu0 0
  %3389 = vmatprep.subr.bf16.mxu0 0
  %3390 = vmatpush1.bf16.msra.mxu0 0
  %3391 = vmatprep.mubr.bf16.mxu0 0
  %3392 = vmatmul.mubr.bf16.gmra.mrb[0].mxu0 %v321
  %v3393 = vpop.f32.mrb[0].mxu0
  %v3394 = vadd.f32 0.0, %v3393
  %v3395 = vpop.f32.mrb[0].mxu0
  %v3396 = vadd.f32 0.0, %v3395
  %v3397 = vpop.f32.mrb[0].mxu0
  %v3398 = vpop.f32.mrb[0].mxu0
  %3399 = vdwg.mxu0
  %3400 = vmatprep.subr.bf16.mxu0 %v2978
  %3401 = vmatpush1.bf16.msra.mxu0 %v2977
  %3402 = vmatprep.subr.bf16.mxu0 %v3084
  %3403 = vmatpush1.bf16.msra.mxu0 %v3081
  %3404 = vmatprep.subr.bf16.mxu0 0
  %3405 = vmatpush1.bf16.msra.mxu0 0
  %3406 = vmatprep.subr.bf16.mxu0 0
  %3407 = vmatpush1.bf16.msra.mxu0 0
  %3408 = vmatprep.subr.bf16.mxu0 0
  %3409 = vmatpush1.bf16.msra.mxu0 0
  %3410 = vmatprep.subr.bf16.mxu0 0
  %3411 = vmatpush1.bf16.msra.mxu0 0
  %3412 = vmatprep.subr.bf16.mxu0 0
  %3413 = vmatpush1.bf16.msra.mxu0 0
  %3414 = vmatprep.subr.bf16.mxu0 0
  %3415 = vmatpush1.bf16.msra.mxu0 0
  %3416 = vmatprep.subr.bf16.mxu0 0
  %3417 = vmatpush1.bf16.msra.mxu0 0
  %3418 = vmatprep.subr.bf16.mxu0 0
  %3419 = vmatpush1.bf16.msra.mxu0 0
  %3420 = vmatprep.subr.bf16.mxu0 0
  %3421 = vmatpush1.bf16.msra.mxu0 0
  %3422 = vmatprep.subr.bf16.mxu0 0
  %3423 = vmatpush1.bf16.msra.mxu0 0
  %3424 = vmatprep.subr.bf16.mxu0 0
  %3425 = vmatpush1.bf16.msra.mxu0 0
  %3426 = vmatprep.subr.bf16.mxu0 0
  %3427 = vmatpush1.bf16.msra.mxu0 0
  %3428 = vmatprep.subr.bf16.mxu0 0
  %3429 = vmatpush1.bf16.msra.mxu0 0
  %3430 = vmatprep.subr.bf16.mxu0 0
  %3431 = vmatpush1.bf16.msra.mxu0 0
  %3432 = vmatprep.mubr.bf16.mxu0 0
  %3433 = vmatmul.mubr.bf16.gmra.mrb[0].mxu0 %v321
  %v3434 = vpop.f32.mrb[0].mxu0
  %v3435 = vadd.f32 0.0, %v3434
  %v3436 = vpop.f32.mrb[0].mxu0
  %v3437 = vadd.f32 0.0, %v3436
  %v3438 = vpop.f32.mrb[0].mxu0
  %v3439 = vpop.f32.mrb[0].mxu0
  %3440 = vdwg.mxu0
  %3441 = vmatprep.subr.bf16.mxu0 %v2980
  %3442 = vmatpush1.bf16.msra.mxu0 %v2979
  %3443 = vmatprep.subr.bf16.mxu0 %v3090
  %3444 = vmatpush1.bf16.msra.mxu0 %v3087
  %3445 = vmatprep.subr.bf16.mxu0 0
  %3446 = vmatpush1.bf16.msra.mxu0 0
  %3447 = vmatprep.subr.bf16.mxu0 0
  %3448 = vmatpush1.bf16.msra.mxu0 0
  %3449 = vmatprep.subr.bf16.mxu0 0
  %3450 = vmatpush1.bf16.msra.mxu0 0
  %3451 = vmatprep.subr.bf16.mxu0 0
  %3452 = vmatpush1.bf16.msra.mxu0 0
  %3453 = vmatprep.subr.bf16.mxu0 0
  %3454 = vmatpush1.bf16.msra.mxu0 0
  %3455 = vmatprep.subr.bf16.mxu0 0
  %3456 = vmatpush1.bf16.msra.mxu0 0
  %3457 = vmatprep.subr.bf16.mxu0 0
  %3458 = vmatpush1.bf16.msra.mxu0 0
  %3459 = vmatprep.subr.bf16.mxu0 0
  %3460 = vmatpush1.bf16.msra.mxu0 0
  %3461 = vmatprep.subr.bf16.mxu0 0
  %3462 = vmatpush1.bf16.msra.mxu0 0
  %3463 = vmatprep.subr.bf16.mxu0 0
  %3464 = vmatpush1.bf16.msra.mxu0 0
  %3465 = vmatprep.subr.bf16.mxu0 0
  %3466 = vmatpush1.bf16.msra.mxu0 0
  %3467 = vmatprep.subr.bf16.mxu0 0
  %3468 = vmatpush1.bf16.msra.mxu0 0
  %3469 = vmatprep.subr.bf16.mxu0 0
  %3470 = vmatpush1.bf16.msra.mxu0 0
  %3471 = vmatprep.subr.bf16.mxu0 0
  %3472 = vmatpush1.bf16.msra.mxu0 0
  %3473 = vmatprep.mubr.bf16.mxu0 0
  %3474 = vmatmul.mubr.bf16.gmra.mrb[0].mxu0 %v321
  %v3475 = vpop.f32.mrb[0].mxu0
  %v3476 = vadd.f32 0.0, %v3475
  %v3477 = vpop.f32.mrb[0].mxu0
  %v3478 = vadd.f32 0.0, %v3477
  %v3479 = vpop.f32.mrb[0].mxu0
  %v3480 = vpop.f32.mrb[0].mxu0
  %3481 = vdwg.mxu0
  %3482 = vmatprep.subr.bf16.mxu0 %v2982
  %3483 = vmatpush1.bf16.msra.mxu0 %v2981
  %3484 = vmatprep.subr.bf16.mxu0 %v3096
  %3485 = vmatpush1.bf16.msra.mxu0 %v3093
  %3486 = vmatprep.subr.bf16.mxu0 0
  %3487 = vmatpush1.bf16.msra.mxu0 0
  %3488 = vmatprep.subr.bf16.mxu0 0
  %3489 = vmatpush1.bf16.msra.mxu0 0
  %3490 = vmatprep.subr.bf16.mxu0 0
  %3491 = vmatpush1.bf16.msra.mxu0 0
  %3492 = vmatprep.subr.bf16.mxu0 0
  %3493 = vmatpush1.bf16.msra.mxu0 0
  %3494 = vmatprep.subr.bf16.mxu0 0
  %3495 = vmatpush1.bf16.msra.mxu0 0
  %3496 = vmatprep.subr.bf16.mxu0 0
  %3497 = vmatpush1.bf16.msra.mxu0 0
  %3498 = vmatprep.subr.bf16.mxu0 0
  %3499 = vmatpush1.bf16.msra.mxu0 0
  %3500 = vmatprep.subr.bf16.mxu0 0
  %3501 = vmatpush1.bf16.msra.mxu0 0
  %3502 = vmatprep.subr.bf16.mxu0 0
  %3503 = vmatpush1.bf16.msra.mxu0 0
  %3504 = vmatprep.subr.bf16.mxu0 0
  %3505 = vmatpush1.bf16.msra.mxu0 0
  %3506 = vmatprep.subr.bf16.mxu0 0
  %3507 = vmatpush1.bf16.msra.mxu0 0
  %3508 = vmatprep.subr.bf16.mxu0 0
  %3509 = vmatpush1.bf16.msra.mxu0 0
  %3510 = vmatprep.subr.bf16.mxu0 0
  %3511 = vmatpush1.bf16.msra.mxu0 0
  %3512 = vmatprep.subr.bf16.mxu0 0
  %3513 = vmatpush1.bf16.msra.mxu0 0
  %3514 = vmatprep.mubr.bf16.mxu0 0
  %3515 = vmatmul.mubr.bf16.gmra.mrb[0].mxu0 %v321
  %v3516 = vpop.f32.mrb[0].mxu0
  %v3517 = vadd.f32 0.0, %v3516
  %v3518 = vpop.f32.mrb[0].mxu0
  %v3519 = vadd.f32 0.0, %v3518
  %v3520 = vpop.f32.mrb[0].mxu0
  %v3521 = vpop.f32.mrb[0].mxu0
  %3522 = vdwg.mxu0
  %3523 = vmatprep.subr.bf16.mxu0 %v2984
  %3524 = vmatpush1.bf16.msra.mxu0 %v2983
  %3525 = vmatprep.subr.bf16.mxu0 %v3102
  %3526 = vmatpush1.bf16.msra.mxu0 %v3099
  %3527 = vmatprep.subr.bf16.mxu0 0
  %3528 = vmatpush1.bf16.msra.mxu0 0
  %3529 = vmatprep.subr.bf16.mxu0 0
  %3530 = vmatpush1.bf16.msra.mxu0 0
  %3531 = vmatprep.subr.bf16.mxu0 0
  %3532 = vmatpush1.bf16.msra.mxu0 0
  %3533 = vmatprep.subr.bf16.mxu0 0
  %3534 = vmatpush1.bf16.msra.mxu0 0
  %3535 = vmatprep.subr.bf16.mxu0 0
  %3536 = vmatpush1.bf16.msra.mxu0 0
  %3537 = vmatprep.subr.bf16.mxu0 0
  %3538 = vmatpush1.bf16.msra.mxu0 0
  %3539 = vmatprep.subr.bf16.mxu0 0
  %3540 = vmatpush1.bf16.msra.mxu0 0
  %3541 = vmatprep.subr.bf16.mxu0 0
  %3542 = vmatpush1.bf16.msra.mxu0 0
  %3543 = vmatprep.subr.bf16.mxu0 0
  %3544 = vmatpush1.bf16.msra.mxu0 0
  %3545 = vmatprep.subr.bf16.mxu0 0
  %3546 = vmatpush1.bf16.msra.mxu0 0
  %3547 = vmatprep.subr.bf16.mxu0 0
  %3548 = vmatpush1.bf16.msra.mxu0 0
  %3549 = vmatprep.subr.bf16.mxu0 0
  %3550 = vmatpush1.bf16.msra.mxu0 0
  %3551 = vmatprep.subr.bf16.mxu0 0
  %3552 = vmatpush1.bf16.msra.mxu0 0
  %3553 = vmatprep.subr.bf16.mxu0 0
  %3554 = vmatpush1.bf16.msra.mxu0 0
  %3555 = vmatprep.mubr.bf16.mxu0 0
  %3556 = vmatmul.mubr.bf16.gmra.mrb[0].mxu0 %v321
  %v3557 = vpop.f32.mrb[0].mxu0
  %v3558 = vadd.f32 0.0, %v3557
  %v3559 = vpop.f32.mrb[0].mxu0
  %v3560 = vadd.f32 0.0, %v3559
  %v3561 = vpop.f32.mrb[0].mxu0
  %v3562 = vpop.f32.mrb[0].mxu0
  %3563 = vdwg.mxu0
  %3564 = vmatprep.subr.bf16.mxu0 %v2986
  %3565 = vmatpush1.bf16.msra.mxu0 %v2985
  %3566 = vmatprep.subr.bf16.mxu0 %v3108
  %3567 = vmatpush1.bf16.msra.mxu0 %v3105
  %3568 = vmatprep.subr.bf16.mxu0 0
  %3569 = vmatpush1.bf16.msra.mxu0 0
  %3570 = vmatprep.subr.bf16.mxu0 0
  %3571 = vmatpush1.bf16.msra.mxu0 0
  %3572 = vmatprep.subr.bf16.mxu0 0
  %3573 = vmatpush1.bf16.msra.mxu0 0
  %3574 = vmatprep.subr.bf16.mxu0 0
  %3575 = vmatpush1.bf16.msra.mxu0 0
  %3576 = vmatprep.subr.bf16.mxu0 0
  %3577 = vmatpush1.bf16.msra.mxu0 0
  %3578 = vmatprep.subr.bf16.mxu0 0
  %3579 = vmatpush1.bf16.msra.mxu0 0
  %3580 = vmatprep.subr.bf16.mxu0 0
  %3581 = vmatpush1.bf16.msra.mxu0 0
  %3582 = vmatprep.subr.bf16.mxu0 0
  %3583 = vmatpush1.bf16.msra.mxu0 0
  %3584 = vmatprep.subr.bf16.mxu0 0
  %3585 = vmatpush1.bf16.msra.mxu0 0
  %3586 = vmatprep.subr.bf16.mxu0 0
  %3587 = vmatpush1.bf16.msra.mxu0 0
  %3588 = vmatprep.subr.bf16.mxu0 0
  %3589 = vmatpush1.bf16.msra.mxu0 0
  %3590 = vmatprep.subr.bf16.mxu0 0
  %3591 = vmatpush1.bf16.msra.mxu0 0
  %3592 = vmatprep.subr.bf16.mxu0 0
  %3593 = vmatpush1.bf16.msra.mxu0 0
  %3594 = vmatprep.subr.bf16.mxu0 0
  %3595 = vmatpush1.bf16.msra.mxu0 0
  %3596 = vmatprep.mubr.bf16.mxu0 0
  %3597 = vmatmul.mubr.bf16.gmra.mrb[0].mxu0 %v321
  %v3598 = vpop.f32.mrb[0].mxu0
  %v3599 = vadd.f32 0.0, %v3598
  %v3600 = vpop.f32.mrb[0].mxu0
  %v3601 = vadd.f32 0.0, %v3600
  %v3602 = vpop.f32.mrb[0].mxu0
  %v3603 = vpop.f32.mrb[0].mxu0
  %3604 = vdwg.mxu0
  %3605 = vmatprep.subr.bf16.mxu0 0
  %3606 = vmatpush1.bf16.msra.mxu0 %v2987
  %3607 = vmatprep.subr.bf16.mxu0 0
  %3608 = vmatpush1.bf16.msra.mxu0 %v3111
  %3609 = vmatprep.subr.bf16.mxu0 0
  %3610 = vmatpush1.bf16.msra.mxu0 0
  %3611 = vmatprep.subr.bf16.mxu0 0
  %3612 = vmatpush1.bf16.msra.mxu0 0
  %3613 = vmatprep.subr.bf16.mxu0 0
  %3614 = vmatpush1.bf16.msra.mxu0 0
  %3615 = vmatprep.subr.bf16.mxu0 0
  %3616 = vmatpush1.bf16.msra.mxu0 0
  %3617 = vmatprep.subr.bf16.mxu0 0
  %3618 = vmatpush1.bf16.msra.mxu0 0
  %3619 = vmatprep.subr.bf16.mxu0 0
  %3620 = vmatpush1.bf16.msra.mxu0 0
  %3621 = vmatprep.subr.bf16.mxu0 0
  %3622 = vmatpush1.bf16.msra.mxu0 0
  %3623 = vmatprep.subr.bf16.mxu0 0
  %3624 = vmatpush1.bf16.msra.mxu0 0
  %3625 = vmatprep.subr.bf16.mxu0 0
  %3626 = vmatpush1.bf16.msra.mxu0 0
  %3627 = vmatprep.subr.bf16.mxu0 0
  %3628 = vmatpush1.bf16.msra.mxu0 0
  %3629 = vmatprep.subr.bf16.mxu0 0
  %3630 = vmatpush1.bf16.msra.mxu0 0
  %3631 = vmatprep.subr.bf16.mxu0 0
  %3632 = vmatpush1.bf16.msra.mxu0 0
  %3633 = vmatprep.subr.bf16.mxu0 0
  %3634 = vmatpush1.bf16.msra.mxu0 0
  %3635 = vmatprep.subr.bf16.mxu0 0
  %3636 = vmatpush1.bf16.msra.mxu0 0
  %3637 = vmatprep.mubr.bf16.mxu0 0
  %3638 = vmatmul.mubr.bf16.gmra.mrb[0].mxu0 %v321
  %v3639 = vpop.f32.mrb[0].mxu0
  %v3640 = vadd.f32 0.0, %v3639
  %v3641 = vpop.f32.mrb[0].mxu0
  %v3642 = vpop.f32.mrb[0].mxu0
  %v3643 = vpop.f32.mrb[0].mxu0
  %3644 = vdwg.mxu0
  %v3645 = vmax.f32 %v2733, %v3148
  %v3646 = vmax.f32 %v2734, %v3150
  %v3647 = vmax.f32 %v2735, %v3189
  %v3648 = vmax.f32 %v2736, %v3191
  %v3649 = vmax.f32 %v2737, %v3230
  %v3650 = vmax.f32 %v2738, %v3232
  %v3651 = vmax.f32 %v2739, %v3271
  %v3652 = vmax.f32 %v2740, %v3273
  %v3653 = vmax.f32 %v2741, %v3312
  %v3654 = vmax.f32 %v2742, %v3314
  %v3655 = vmax.f32 %v2743, %v3353
  %v3656 = vmax.f32 %v2744, %v3355
  %v3657 = vmax.f32 %v2745, %v3394
  %v3658 = vmax.f32 %v2746, %v3396
  %v3659 = vmax.f32 %v2747, %v3435
  %v3660 = vmax.f32 %v2748, %v3437
  %v3661 = vmax.f32 %v2749, %v3476
  %v3662 = vmax.f32 %v2750, %v3478
  %v3663 = vmax.f32 %v2751, %v3517
  %v3664 = vmax.f32 %v2752, %v3519
  %v3665 = vmax.f32 %v2753, %v3558
  %v3666 = vmax.f32 %v2754, %v3560
  %v3667 = vmax.f32 %v2755, %v3599
  %v3668 = vmax.f32 %v2756, %v3601
  %v3669 = vmax.f32 %v2757, %v3640
  %v3670 = vld [vmem:[%s2] sm:$0xff]
  %3672 = vset.pattern.permute.xlu0 0
  %3673 = vperm.xlu0 %3672, %v3670
  %v3674 = vpop.permute.xlu0 %3673
  %v3676 = vadd.f32 %v3645, %v3674
  %v3677 = vadd.f32 %v3646, %v3674
  %v3678 = vadd.f32 %v3647, %v3674
  %v3679 = vadd.f32 %v3648, %v3674
  %v3680 = vadd.f32 %v3649, %v3674
  %v3681 = vadd.f32 %v3650, %v3674
  %v3682 = vadd.f32 %v3651, %v3674
  %v3683 = vadd.f32 %v3652, %v3674
  %v3684 = vadd.f32 %v3653, %v3674
  %v3685 = vadd.f32 %v3654, %v3674
  %v3686 = vadd.f32 %v3655, %v3674
  %v3687 = vadd.f32 %v3656, %v3674
  %v3688 = vadd.f32 %v3657, %v3674
  %v3689 = vadd.f32 %v3658, %v3674
  %v3690 = vadd.f32 %v3659, %v3674
  %v3691 = vadd.f32 %v3660, %v3674
  %v3692 = vadd.f32 %v3661, %v3674
  %v3693 = vadd.f32 %v3662, %v3674
  %v3694 = vadd.f32 %v3663, %v3674
  %v3695 = vadd.f32 %v3664, %v3674
  %v3696 = vadd.f32 %v3665, %v3674
  %v3697 = vadd.f32 %v3666, %v3674
  %v3698 = vadd.f32 %v3667, %v3674
  %v3699 = vadd.f32 %v3668, %v3674
  %v3700 = vadd.f32 %v3669, %v3674
  %v3701 = vmul.f32 %v3676, 0.5
  %v3702 = vmul.f32 %v3677, 0.5
  %v3703 = vmul.f32 %v3678, 0.5
  %v3704 = vmul.f32 %v3679, 0.5
  %v3705 = vmul.f32 %v3680, 0.5
  %v3706 = vmul.f32 %v3681, 0.5
  %v3707 = vmul.f32 %v3682, 0.5
  %v3708 = vmul.f32 %v3683, 0.5
  %v3709 = vmul.f32 %v3684, 0.5
  %v3710 = vmul.f32 %v3685, 0.5
  %v3711 = vmul.f32 %v3686, 0.5
  %v3712 = vmul.f32 %v3687, 0.5
  %v3713 = vmul.f32 %v3688, 0.5
  %v3714 = vmul.f32 %v3689, 0.5
  %v3715 = vmul.f32 %v3690, 0.5
  %v3716 = vmul.f32 %v3691, 0.5
  %v3717 = vmul.f32 %v3692, 0.5
  %v3718 = vmul.f32 %v3693, 0.5
  %v3719 = vmul.f32 %v3694, 0.5
  %v3720 = vmul.f32 %v3695, 0.5
  %v3721 = vmul.f32 %v3696, 0.5
  %v3722 = vmul.f32 %v3697, 0.5
  %v3723 = vmul.f32 %v3698, 0.5
  %v3724 = vmul.f32 %v3699, 0.5
  %v3725 = vmul.f32 %v3700, 0.5
  %v3726 = vtanh.pop %v3701
  %v3727 = vtanh.pop %v3702
  %v3728 = vtanh.pop %v3703
  %v3729 = vtanh.pop %v3704
  %v3730 = vtanh.pop %v3705
  %v3731 = vtanh.pop %v3706
  %v3732 = vtanh.pop %v3707
  %v3733 = vtanh.pop %v3708
  %v3734 = vtanh.pop %v3709
  %v3735 = vtanh.pop %v3710
  %v3736 = vtanh.pop %v3711
  %v3737 = vtanh.pop %v3712
  %v3738 = vtanh.pop %v3713
  %v3739 = vtanh.pop %v3714
  %v3740 = vtanh.pop %v3715
  %v3741 = vtanh.pop %v3716
  %v3742 = vtanh.pop %v3717
  %v3743 = vtanh.pop %v3718
  %v3744 = vtanh.pop %v3719
  %v3745 = vtanh.pop %v3720
  %v3746 = vtanh.pop %v3721
  %v3747 = vtanh.pop %v3722
  %v3748 = vtanh.pop %v3723
  %v3749 = vtanh.pop %v3724
  %v3750 = vtanh.pop %v3725
  %v3751 = vmul.f32 %v3726, 0.5
  %v3752 = vmul.f32 %v3727, 0.5
  %v3753 = vmul.f32 %v3728, 0.5
  %v3754 = vmul.f32 %v3729, 0.5
  %v3755 = vmul.f32 %v3730, 0.5
  %v3756 = vmul.f32 %v3731, 0.5
  %v3757 = vmul.f32 %v3732, 0.5
  %v3758 = vmul.f32 %v3733, 0.5
  %v3759 = vmul.f32 %v3734, 0.5
  %v3760 = vmul.f32 %v3735, 0.5
  %v3761 = vmul.f32 %v3736, 0.5
  %v3762 = vmul.f32 %v3737, 0.5
  %v3763 = vmul.f32 %v3738, 0.5
  %v3764 = vmul.f32 %v3739, 0.5
  %v3765 = vmul.f32 %v3740, 0.5
  %v3766 = vmul.f32 %v3741, 0.5
  %v3767 = vmul.f32 %v3742, 0.5
  %v3768 = vmul.f32 %v3743, 0.5
  %v3769 = vmul.f32 %v3744, 0.5
  %v3770 = vmul.f32 %v3745, 0.5
  %v3771 = vmul.f32 %v3746, 0.5
  %v3772 = vmul.f32 %v3747, 0.5
  %v3773 = vmul.f32 %v3748, 0.5
  %v3774 = vmul.f32 %v3749, 0.5
  %v3775 = vmul.f32 %v3750, 0.5
  %v3776 = vadd.f32 %v3751, 0.5
  %v3777 = vadd.f32 %v3752, 0.5
  %v3778 = vadd.f32 %v3753, 0.5
  %v3779 = vadd.f32 %v3754, 0.5
  %v3780 = vadd.f32 %v3755, 0.5
  %v3781 = vadd.f32 %v3756, 0.5
  %v3782 = vadd.f32 %v3757, 0.5
  %v3783 = vadd.f32 %v3758, 0.5
  %v3784 = vadd.f32 %v3759, 0.5
  %v3785 = vadd.f32 %v3760, 0.5
  %v3786 = vadd.f32 %v3761, 0.5
  %v3787 = vadd.f32 %v3762, 0.5
  %v3788 = vadd.f32 %v3763, 0.5
  %v3789 = vadd.f32 %v3764, 0.5
  %v3790 = vadd.f32 %v3765, 0.5
  %v3791 = vadd.f32 %v3766, 0.5
  %v3792 = vadd.f32 %v3767, 0.5
  %v3793 = vadd.f32 %v3768, 0.5
  %v3794 = vadd.f32 %v3769, 0.5
  %v3795 = vadd.f32 %v3770, 0.5
  %v3796 = vadd.f32 %v3771, 0.5
  %v3797 = vadd.f32 %v3772, 0.5
  %v3798 = vadd.f32 %v3773, 0.5
  %v3799 = vadd.f32 %v3774, 0.5
  %v3800 = vadd.f32 %v3775, 0.5
  %v3801 = vpack.c.bf16 %v3776, %v3776
  %v3802 = vpack.c.bf16 %v3777, %v3777
  %v3803 = vpack.c.bf16 %v3778, %v3778
  %v3804 = vpack.c.bf16 %v3779, %v3779
  %v3805 = vpack.c.bf16 %v3780, %v3780
  %v3806 = vpack.c.bf16 %v3781, %v3781
  %v3807 = vpack.c.bf16 %v3782, %v3782
  %v3808 = vpack.c.bf16 %v3783, %v3783
  %v3809 = vpack.c.bf16 %v3784, %v3784
  %v3810 = vpack.c.bf16 %v3785, %v3785
  %v3811 = vpack.c.bf16 %v3786, %v3786
  %v3812 = vpack.c.bf16 %v3787, %v3787
  %v3813 = vpack.c.bf16 %v3788, %v3788
  %v3814 = vpack.c.bf16 %v3789, %v3789
  %v3815 = vpack.c.bf16 %v3790, %v3790
  %v3816 = vpack.c.bf16 %v3791, %v3791
  %v3817 = vpack.c.bf16 %v3792, %v3792
  %v3818 = vpack.c.bf16 %v3793, %v3793
  %v3819 = vpack.c.bf16 %v3794, %v3794
  %v3820 = vpack.c.bf16 %v3795, %v3795
  %v3821 = vpack.c.bf16 %v3796, %v3796
  %v3822 = vpack.c.bf16 %v3797, %v3797
  %v3823 = vpack.c.bf16 %v3798, %v3798
  %v3824 = vpack.c.bf16 %v3799, %v3799
  %v3825 = vpack.c.bf16 %v3800, %v3800
  %3826 = vst [vmem:[#allocation2] sm:$0xf] %v3801
  %3827 = vst [vmem:[#allocation2 + $0x4] sm:$0xf] %v3802
  %3828 = vst [vmem:[#allocation2 + $0x8] sm:$0xf] %v3803
  %3829 = vst [vmem:[#allocation2 + $0xc] sm:$0xf] %v3804
  %3830 = vst [vmem:[#allocation2 + $0x10] sm:$0xf] %v3805
  %3831 = vst [vmem:[#allocation2 + $0x14] sm:$0xf] %v3806
  %3832 = vst [vmem:[#allocation2 + $0x18] sm:$0xf] %v3807
  %3833 = vst [vmem:[#allocation2 + $0x1c] sm:$0xf] %v3808
  %3834 = vst [vmem:[#allocation2 + $0x20] sm:$0xf] %v3809
  %3835 = vst [vmem:[#allocation2 + $0x24] sm:$0xf] %v3810
  %3836 = vst [vmem:[#allocation2 + $0x28] sm:$0xf] %v3811
  %3837 = vst [vmem:[#allocation2 + $0x2c] sm:$0xf] %v3812
  %3838 = vst [vmem:[#allocation2 + $0x30] sm:$0xf] %v3813
  %3839 = vst [vmem:[#allocation2 + $0x34] sm:$0xf] %v3814
  %3840 = vst [vmem:[#allocation2 + $0x38] sm:$0xf] %v3815
  %3841 = vst [vmem:[#allocation2 + $0x3c] sm:$0xf] %v3816
  %3842 = vst [vmem:[#allocation2 + $0x40] sm:$0xf] %v3817
  %3843 = vst [vmem:[#allocation2 + $0x44] sm:$0xf] %v3818
  %3844 = vst [vmem:[#allocation2 + $0x48] sm:$0xf] %v3819
  %3845 = vst [vmem:[#allocation2 + $0x4c] sm:$0xf] %v3820
  %3846 = vst [vmem:[#allocation2 + $0x50] sm:$0xf] %v3821
  %3847 = vst [vmem:[#allocation2 + $0x54] sm:$0xf] %v3822
  %3848 = vst [vmem:[#allocation2 + $0x58] sm:$0xf] %v3823
  %3849 = vst [vmem:[#allocation2 + $0x5c] sm:$0xf] %v3824
  %3850 = vst [vmem:[#allocation2 + $0x60] sm:$0xf] %v3825
  %v3851 = vld [vmem:[%s3] sm:$0xff]
  %v3852 = vld [vmem:[%s3 + $0x8] sm:$0xff]
  %v3853 = vld [vmem:[#allocation2] sm:$0xf]
  %v3854 = vld [vmem:[#allocation2 + $0x4] sm:$0xf]
  %v3855 = vld [vmem:[#allocation2 + $0x8] sm:$0xf]
  %v3856 = vld [vmem:[#allocation2 + $0xc] sm:$0xf]
  %v3857 = vld [vmem:[#allocation2 + $0x10] sm:$0xf]
  %v3858 = vld [vmem:[#allocation2 + $0x14] sm:$0xf]
  %v3859 = vld [vmem:[#allocation2 + $0x18] sm:$0xf]
  %v3860 = vld [vmem:[#allocation2 + $0x1c] sm:$0xf]
  %v3861 = vld [vmem:[#allocation2 + $0x20] sm:$0xf]
  %v3862 = vld [vmem:[#allocation2 + $0x24] sm:$0xf]
  %v3863 = vld [vmem:[#allocation2 + $0x28] sm:$0xf]
  %v3864 = vld [vmem:[#allocation2 + $0x2c] sm:$0xf]
  %v3865 = vld [vmem:[#allocation2 + $0x30] sm:$0xf]
  %v3866 = vld [vmem:[#allocation2 + $0x34] sm:$0xf]
  %v3867 = vld [vmem:[#allocation2 + $0x38] sm:$0xf]
  %v3868 = vld [vmem:[#allocation2 + $0x3c] sm:$0xf]
  %v3869 = vld [vmem:[#allocation2 + $0x40] sm:$0xf]
  %v3870 = vld [vmem:[#allocation2 + $0x44] sm:$0xf]
  %v3871 = vld [vmem:[#allocation2 + $0x48] sm:$0xf]
  %v3872 = vld [vmem:[#allocation2 + $0x4c] sm:$0xf]
  %v3873 = vld [vmem:[#allocation2 + $0x50] sm:$0xf]
  %v3874 = vld [vmem:[#allocation2 + $0x54] sm:$0xf]
  %v3875 = vld [vmem:[#allocation2 + $0x58] sm:$0xf]
  %v3876 = vld [vmem:[#allocation2 + $0x5c] sm:$0xf]
  %v3877 = vld [vmem:[#allocation2 + $0x60] sm:$0xf]
  %v3880 = vunpack.c.l.b16 %v3851
  %v3881 = vunpack.c.h.b16 %v3851
  %v3882 = vunpack.c.l.b16 %v3852
  %v3883 = vunpack.c.h.b16 %v3852
  %v3884 = vpack.c.b16 %v3882, %v3880
  %v3885 = vpack.c.b16 %v3883, %v3881
  %v3912 = vunpack.c.l.b16 %v3853
  %v3913 = vunpack.c.l.b16 %v3854
  %v3914 = vunpack.c.l.b16 %v3855
  %v3915 = vunpack.c.l.b16 %v3856
  %v3916 = vunpack.c.l.b16 %v3857
  %v3917 = vunpack.c.l.b16 %v3858
  %v3918 = vunpack.c.l.b16 %v3859
  %v3919 = vunpack.c.l.b16 %v3860
  %v3920 = vunpack.c.l.b16 %v3861
  %v3921 = vunpack.c.l.b16 %v3862
  %v3922 = vunpack.c.l.b16 %v3863
  %v3923 = vunpack.c.l.b16 %v3864
  %v3924 = vunpack.c.l.b16 %v3865
  %v3925 = vunpack.c.l.b16 %v3866
  %v3926 = vunpack.c.l.b16 %v3867
  %v3927 = vunpack.c.l.b16 %v3868
  %v3928 = vunpack.c.l.b16 %v3869
  %v3929 = vunpack.c.l.b16 %v3870
  %v3930 = vunpack.c.l.b16 %v3871
  %v3931 = vunpack.c.l.b16 %v3872
  %v3932 = vunpack.c.l.b16 %v3873
  %v3933 = vunpack.c.l.b16 %v3874
  %v3934 = vunpack.c.l.b16 %v3875
  %v3935 = vunpack.c.l.b16 %v3876
  %v3936 = vunpack.c.l.b16 %v3877
  %v3937 = vpack.c.b16 %v3913, %v3912
  %v3938 = vpack.c.b16 %v3915, %v3914
  %v3939 = vpack.c.b16 %v3917, %v3916
  %v3940 = vpack.c.b16 %v3919, %v3918
  %v3941 = vpack.c.b16 %v3921, %v3920
  %v3942 = vpack.c.b16 %v3923, %v3922
  %v3943 = vpack.c.b16 %v3925, %v3924
  %v3944 = vpack.c.b16 %v3927, %v3926
  %v3945 = vpack.c.b16 %v3929, %v3928
  %v3946 = vpack.c.b16 %v3931, %v3930
  %v3947 = vpack.c.b16 %v3933, %v3932
  %v3948 = vpack.c.b16 %v3935, %v3934
  %v3949 = vpack.c.b16 %v3936, %v3936
  %vm3962 = vcmask 588800
  %v3964 = vsel %vm3962, %v3885, 0
  %v3967 = vsel %vm323, %v3949, 0
  %3969 = vmatprep.subr.bf16.mxu0 0
  %3970 = vmatpush1.bf16.msra.mxu0 %v3937
  %3971 = vmatprep.subr.bf16.mxu0 0
  %3972 = vmatpush1.bf16.msra.mxu0 %v3938
  %3973 = vmatprep.subr.bf16.mxu0 0
  %3974 = vmatpush1.bf16.msra.mxu0 %v3939
  %3975 = vmatprep.subr.bf16.mxu0 0
  %3976 = vmatpush1.bf16.msra.mxu0 %v3940
  %3977 = vmatprep.subr.bf16.mxu0 0
  %3978 = vmatpush1.bf16.msra.mxu0 %v3941
  %3979 = vmatprep.subr.bf16.mxu0 0
  %3980 = vmatpush1.bf16.msra.mxu0 %v3942
  %3981 = vmatprep.subr.bf16.mxu0 0
  %3982 = vmatpush1.bf16.msra.mxu0 %v3943
  %3983 = vmatprep.subr.bf16.mxu0 0
  %3984 = vmatpush1.bf16.msra.mxu0 %v3944
  %3985 = vmatprep.subr.bf16.mxu0 0
  %3986 = vmatpush1.bf16.msra.mxu0 %v3945
  %3987 = vmatprep.subr.bf16.mxu0 0
  %3988 = vmatpush1.bf16.msra.mxu0 %v3946
  %3989 = vmatprep.subr.bf16.mxu0 0
  %3990 = vmatpush1.bf16.msra.mxu0 %v3947
  %3991 = vmatprep.subr.bf16.mxu0 0
  %3992 = vmatpush1.bf16.msra.mxu0 %v3948
  %3993 = vmatprep.subr.bf16.mxu0 0
  %3994 = vmatpush1.bf16.msra.mxu0 %v3967
  %3995 = vmatprep.subr.bf16.mxu0 0
  %3996 = vmatpush1.bf16.msra.mxu0 0
  %3997 = vmatprep.subr.bf16.mxu0 0
  %3998 = vmatpush1.bf16.msra.mxu0 0
  %3999 = vmatprep.subr.bf16.mxu0 0
  %4000 = vmatpush1.bf16.msra.mxu0 0
  %4001 = vmatprep.mubr.bf16.mxu0 %v3964
  %4002 = vmatmul.mubr.bf16.gmra.mrb[0].mxu0 %v3884
  %v4003 = vpop.f32.mrb[0].mxu0
  %v4004 = vadd.f32 0.0, %v4003
  %v4005 = vpop.f32.mrb[0].mxu0
  %v4006 = vpop.f32.mrb[0].mxu0
  %v4007 = vadd.f32 0.0, %v4006
  %v4008 = vpop.f32.mrb[0].mxu0
  %4009 = vdwg.mxu0
  %4012 = vrot.lane.b32.xlu0 %v4004, 96
  %v4013 = vpop.permute.xlu0 %4012
  %4014 = vrot.lane.b32.xlu0 %v4007, 96
  %v4015 = vpop.permute.xlu0 %4014
  %v4018 = vmax.f32 %v4004, %v4013
  %v4019 = vmax.f32 %v4007, %v4015
  %4022 = vrot.lane.b32.xlu0 %v4018, 64
  %v4023 = vpop.permute.xlu0 %4022
  %4024 = vrot.lane.b32.xlu0 %v4019, 64
  %v4025 = vpop.permute.xlu0 %4024
  %v4028 = vmax.f32 %v4018, %v4023
  %v4029 = vmax.f32 %v4019, %v4025
  %v4030 = vld [vmem:[%s4] sm:$0xff]
  %v4031 = vld [vmem:[%s4 + $0x8] sm:$0xff]
  %4033 = vset.pattern.permute.xlu0 0
  %4034 = vperm.xlu0 %4033, %v4030
  %v4035 = vpop.permute.xlu0 %4034
  %4038 = vset.pattern.permute.xlu0 0
  %4039 = vperm.xlu0 %4038, %v4031
  %v4040 = vpop.permute.xlu0 %4039
  %v4042 = vadd.f32 %v4028, %v4035
  %v4043 = vadd.f32 %v4029, %v4040
  %v4044 = vmul.f32 %v4042, 0.5
  %v4045 = vmul.f32 %v4043, 0.5
  %v4046 = vtanh.pop %v4044
  %v4047 = vtanh.pop %v4045
  %v4048 = vmul.f32 %v4046, 0.5
  %v4049 = vmul.f32 %v4047, 0.5
  %v4050 = vadd.f32 %v4048, 0.5
  %v4051 = vadd.f32 %v4049, 0.5
  %v4052 = vpack.c.bf16 %v4051, %v4050
  %vm4053 = vcmask 15360
  %4054 = vst.msk [vmem:[#allocation3] sm:$0xff] %vm4053, %v4052
  %4056 = vrot.lane.b32.xlu0 %v4052, 126
  %v4057 = vpop.permute.xlu0 %4056
  %4059 = vst.msk [vmem:[#allocation3 + $0x8] sm:$0xff] %vm4053, %v4057
  %4060 = vrot.lane.b32.xlu0 %v4052, 124
  %v4061 = vpop.permute.xlu0 %4060
  %4063 = vst.msk [vmem:[#allocation3 + $0x10] sm:$0xff] %vm4053, %v4061
  %4064 = vrot.lane.b32.xlu0 %v4052, 122
  %v4065 = vpop.permute.xlu0 %4064
  %4067 = vst.msk [vmem:[#allocation3 + $0x18] sm:$0xff] %vm4053, %v4065
  %4068 = vrot.lane.b32.xlu0 %v4052, 120
  %v4069 = vpop.permute.xlu0 %4068
  %4071 = vst.msk [vmem:[#allocation3 + $0x20] sm:$0xff] %vm4053, %v4069
  %4072 = vrot.lane.b32.xlu0 %v4052, 118
  %v4073 = vpop.permute.xlu0 %4072
  %4075 = vst.msk [vmem:[#allocation3 + $0x28] sm:$0xff] %vm4053, %v4073
  %4076 = vrot.lane.b32.xlu0 %v4052, 116
  %v4077 = vpop.permute.xlu0 %4076
  %4079 = vst.msk [vmem:[#allocation3 + $0x30] sm:$0xff] %vm4053, %v4077
  %4080 = vrot.lane.b32.xlu0 %v4052, 114
  %v4081 = vpop.permute.xlu0 %4080
  %4083 = vst.msk [vmem:[#allocation3 + $0x38] sm:$0xff] %vm4053, %v4081
  %4084 = vrot.lane.b32.xlu0 %v4052, 112
  %v4085 = vpop.permute.xlu0 %4084
  %4087 = vst.msk [vmem:[#allocation3 + $0x40] sm:$0xff] %vm4053, %v4085
  %4088 = vrot.lane.b32.xlu0 %v4052, 110
  %v4089 = vpop.permute.xlu0 %4088
  %4091 = vst.msk [vmem:[#allocation3 + $0x48] sm:$0xff] %vm4053, %v4089
  %4092 = vrot.lane.b32.xlu0 %v4052, 108
  %v4093 = vpop.permute.xlu0 %4092
  %4095 = vst.msk [vmem:[#allocation3 + $0x50] sm:$0xff] %vm4053, %v4093
  %4096 = vrot.lane.b32.xlu0 %v4052, 106
  %v4097 = vpop.permute.xlu0 %4096
  %4099 = vst.msk [vmem:[#allocation3 + $0x58] sm:$0xff] %vm4053, %v4097
  %4100 = vrot.lane.b32.xlu0 %v4052, 104
  %v4101 = vpop.permute.xlu0 %4100
  %4103 = vst.msk [vmem:[#allocation3 + $0x60] sm:$0xff] %vm4053, %v4101
  %4104 = vrot.lane.b32.xlu0 %v4052, 102
  %v4105 = vpop.permute.xlu0 %4104
  %4107 = vst.msk [vmem:[#allocation3 + $0x68] sm:$0xff] %vm4053, %v4105
  %4108 = vrot.lane.b32.xlu0 %v4052, 100
  %v4109 = vpop.permute.xlu0 %4108
  %4111 = vst.msk [vmem:[#allocation3 + $0x70] sm:$0xff] %vm4053, %v4109
  %4112 = vrot.lane.b32.xlu0 %v4052, 98
  %v4113 = vpop.permute.xlu0 %4112
  %4115 = vst.msk [vmem:[#allocation3 + $0x78] sm:$0xff] %vm4053, %v4113
  %v4116 = vld [vmem:[%s5] sm:$0xff]
  %v4117 = vld [vmem:[%s5 + $0x8] sm:$0xff]
  %v4118 = vld [vmem:[%s5 + $0x10] sm:$0xff]
  %v4119 = vld [vmem:[%s5 + $0x18] sm:$0xff]
  %v4120 = vld [vmem:[%s5 + $0x20] sm:$0xff]
  %v4121 = vld [vmem:[%s5 + $0x28] sm:$0xff]
  %v4122 = vld [vmem:[%s5 + $0x30] sm:$0xff]
  %v4123 = vld [vmem:[%s5 + $0x38] sm:$0xff]
  %v4124 = vld [vmem:[%s5 + $0x40] sm:$0xff]
  %v4125 = vld [vmem:[%s5 + $0x48] sm:$0xff]
  %v4126 = vld [vmem:[%s5 + $0x50] sm:$0xff]
  %v4127 = vld [vmem:[%s5 + $0x58] sm:$0xff]
  %v4128 = vld [vmem:[%s5 + $0x60] sm:$0xff]
  %v4129 = vld [vmem:[%s5 + $0x68] sm:$0xff]
  %v4130 = vld [vmem:[%s5 + $0x70] sm:$0xff]
  %v4131 = vld [vmem:[%s5 + $0x78] sm:$0xff]
  %v4132 = vld [vmem:[#allocation3] sm:$0xff]
  %v4133 = vld [vmem:[#allocation3 + $0x8] sm:$0xff]
  %v4134 = vld [vmem:[#allocation3 + $0x10] sm:$0xff]
  %v4135 = vld [vmem:[#allocation3 + $0x18] sm:$0xff]
  %v4136 = vld [vmem:[#allocation3 + $0x20] sm:$0xff]
  %v4137 = vld [vmem:[#allocation3 + $0x28] sm:$0xff]
  %v4138 = vld [vmem:[#allocation3 + $0x30] sm:$0xff]
  %v4139 = vld [vmem:[#allocation3 + $0x38] sm:$0xff]
  %v4140 = vld [vmem:[#allocation3 + $0x40] sm:$0xff]
  %v4141 = vld [vmem:[#allocation3 + $0x48] sm:$0xff]
  %v4142 = vld [vmem:[#allocation3 + $0x50] sm:$0xff]
  %v4143 = vld [vmem:[#allocation3 + $0x58] sm:$0xff]
  %v4144 = vld [vmem:[#allocation3 + $0x60] sm:$0xff]
  %v4145 = vld [vmem:[#allocation3 + $0x68] sm:$0xff]
  %v4146 = vld [vmem:[#allocation3 + $0x70] sm:$0xff]
  %v4147 = vld [vmem:[#allocation3 + $0x78] sm:$0xff]
  %v4148 = vld [vmem:[%s6] sm:$0xff]
  %v4149 = vld [vmem:[%s6 + $0x8] sm:$0xff]
  %v4150 = vld [vmem:[%s6 + $0x10] sm:$0xff]
  %v4151 = vld [vmem:[%s6 + $0x18] sm:$0xff]
  %v4152 = vld [vmem:[%s6 + $0x20] sm:$0xff]
  %v4153 = vld [vmem:[%s6 + $0x28] sm:$0xff]
  %v4154 = vld [vmem:[%s6 + $0x30] sm:$0xff]
  %v4155 = vld [vmem:[%s6 + $0x38] sm:$0xff]
  %v4156 = vld [vmem:[%s6 + $0x40] sm:$0xff]
  %v4157 = vld [vmem:[%s6 + $0x48] sm:$0xff]
  %v4158 = vld [vmem:[%s6 + $0x50] sm:$0xff]
  %v4159 = vld [vmem:[%s6 + $0x58] sm:$0xff]
  %v4160 = vld [vmem:[%s6 + $0x60] sm:$0xff]
  %v4161 = vld [vmem:[%s6 + $0x68] sm:$0xff]
  %v4162 = vld [vmem:[%s6 + $0x70] sm:$0xff]
  %v4163 = vld [vmem:[%s6 + $0x78] sm:$0xff]
  %4165 = vset.pattern.permute.xlu0 0
  %4166 = vperm.xlu0 %4165, %v4148
  %v4167 = vpop.permute.xlu0 %4166
  %4170 = vset.pattern.permute.xlu0 0
  %4171 = vperm.xlu0 %4170, %v4149
  %v4172 = vpop.permute.xlu0 %4171
  %4175 = vset.pattern.permute.xlu0 0
  %4176 = vperm.xlu0 %4175, %v4150
  %v4177 = vpop.permute.xlu0 %4176
  %4180 = vset.pattern.permute.xlu0 0
  %4181 = vperm.xlu0 %4180, %v4151
  %v4182 = vpop.permute.xlu0 %4181
  %4185 = vset.pattern.permute.xlu0 0
  %4186 = vperm.xlu0 %4185, %v4152
  %v4187 = vpop.permute.xlu0 %4186
  %4190 = vset.pattern.permute.xlu0 0
  %4191 = vperm.xlu0 %4190, %v4153
  %v4192 = vpop.permute.xlu0 %4191
  %4195 = vset.pattern.permute.xlu0 0
  %4196 = vperm.xlu0 %4195, %v4154
  %v4197 = vpop.permute.xlu0 %4196
  %4200 = vset.pattern.permute.xlu0 0
  %4201 = vperm.xlu0 %4200, %v4155
  %v4202 = vpop.permute.xlu0 %4201
  %4205 = vset.pattern.permute.xlu0 0
  %4206 = vperm.xlu0 %4205, %v4156
  %v4207 = vpop.permute.xlu0 %4206
  %4210 = vset.pattern.permute.xlu0 0
  %4211 = vperm.xlu0 %4210, %v4157
  %v4212 = vpop.permute.xlu0 %4211
  %4215 = vset.pattern.permute.xlu0 0
  %4216 = vperm.xlu0 %4215, %v4158
  %v4217 = vpop.permute.xlu0 %4216
  %4220 = vset.pattern.permute.xlu0 0
  %4221 = vperm.xlu0 %4220, %v4159
  %v4222 = vpop.permute.xlu0 %4221
  %4225 = vset.pattern.permute.xlu0 0
  %4226 = vperm.xlu0 %4225, %v4160
  %v4227 = vpop.permute.xlu0 %4226
  %4230 = vset.pattern.permute.xlu0 0
  %4231 = vperm.xlu0 %4230, %v4161
  %v4232 = vpop.permute.xlu0 %4231
  %4235 = vset.pattern.permute.xlu0 0
  %4236 = vperm.xlu0 %4235, %v4162
  %v4237 = vpop.permute.xlu0 %4236
  %4240 = vset.pattern.permute.xlu0 0
  %4241 = vperm.xlu0 %4240, %v4163
  %v4242 = vpop.permute.xlu0 %4241
  %v4260 = vunpack.c.l.b16 %v4116
  %v4261 = vunpack.c.h.b16 %v4116
  %v4262 = vunpack.c.l.b16 %v4117
  %v4263 = vunpack.c.h.b16 %v4117
  %v4264 = vunpack.c.l.b16 %v4118
  %v4265 = vunpack.c.h.b16 %v4118
  %v4266 = vunpack.c.l.b16 %v4119
  %v4267 = vunpack.c.h.b16 %v4119
  %v4268 = vunpack.c.l.b16 %v4120
  %v4269 = vunpack.c.h.b16 %v4120
  %v4270 = vunpack.c.l.b16 %v4121
  %v4271 = vunpack.c.h.b16 %v4121
  %v4272 = vunpack.c.l.b16 %v4122
  %v4273 = vunpack.c.h.b16 %v4122
  %v4274 = vunpack.c.l.b16 %v4123
  %v4275 = vunpack.c.h.b16 %v4123
  %v4276 = vunpack.c.l.b16 %v4124
  %v4277 = vunpack.c.h.b16 %v4124
  %v4278 = vunpack.c.l.b16 %v4125
  %v4279 = vunpack.c.h.b16 %v4125
  %v4280 = vunpack.c.l.b16 %v4126
  %v4281 = vunpack.c.h.b16 %v4126
  %v4282 = vunpack.c.l.b16 %v4127
  %v4283 = vunpack.c.h.b16 %v4127
  %v4284 = vunpack.c.l.b16 %v4128
  %v4285 = vunpack.c.h.b16 %v4128
  %v4286 = vunpack.c.l.b16 %v4129
  %v4287 = vunpack.c.h.b16 %v4129
  %v4288 = vunpack.c.l.b16 %v4130
  %v4289 = vunpack.c.h.b16 %v4130
  %v4290 = vunpack.c.l.b16 %v4131
  %v4291 = vunpack.c.h.b16 %v4131
  %v4292 = vpack.c.b16 %v4262, %v4260
  %v4293 = vpack.c.b16 %v4263, %v4261
  %v4294 = vpack.c.b16 %v4266, %v4264
  %v4295 = vpack.c.b16 %v4267, %v4265
  %v4296 = vpack.c.b16 %v4270, %v4268
  %v4297 = vpack.c.b16 %v4271, %v4269
  %v4298 = vpack.c.b16 %v4274, %v4272
  %v4299 = vpack.c.b16 %v4275, %v4273
  %v4300 = vpack.c.b16 %v4278, %v4276
  %v4301 = vpack.c.b16 %v4279, %v4277
  %v4302 = vpack.c.b16 %v4282, %v4280
  %v4303 = vpack.c.b16 %v4283, %v4281
  %v4304 = vpack.c.b16 %v4286, %v4284
  %v4305 = vpack.c.b16 %v4287, %v4285
  %v4306 = vpack.c.b16 %v4290, %v4288
  %v4307 = vpack.c.b16 %v4291, %v4289
  %4324 = vmatprep.subr.bf16.mxu0 0
  %4325 = vmatpush1.bf16.msra.mxu0 %v4132
  %4326 = vmatprep.subr.bf16.mxu0 0
  %4327 = vmatpush1.bf16.msra.mxu0 %v4133
  %4328 = vmatprep.subr.bf16.mxu0 0
  %4329 = vmatpush1.bf16.msra.mxu0 %v4134
  %4330 = vmatprep.subr.bf16.mxu0 0
  %4331 = vmatpush1.bf16.msra.mxu0 %v4135
  %4332 = vmatprep.subr.bf16.mxu0 0
  %4333 = vmatpush1.bf16.msra.mxu0 %v4136
  %4334 = vmatprep.subr.bf16.mxu0 0
  %4335 = vmatpush1.bf16.msra.mxu0 %v4137
  %4336 = vmatprep.subr.bf16.mxu0 0
  %4337 = vmatpush1.bf16.msra.mxu0 %v4138
  %4338 = vmatprep.subr.bf16.mxu0 0
  %4339 = vmatpush1.bf16.msra.mxu0 %v4139
  %4340 = vmatprep.subr.bf16.mxu0 0
  %4341 = vmatpush1.bf16.msra.mxu0 %v4140
  %4342 = vmatprep.subr.bf16.mxu0 0
  %4343 = vmatpush1.bf16.msra.mxu0 %v4141
  %4344 = vmatprep.subr.bf16.mxu0 0
  %4345 = vmatpush1.bf16.msra.mxu0 %v4142
  %4346 = vmatprep.subr.bf16.mxu0 0
  %4347 = vmatpush1.bf16.msra.mxu0 %v4143
  %4348 = vmatprep.subr.bf16.mxu0 0
  %4349 = vmatpush1.bf16.msra.mxu0 %v4144
  %4350 = vmatprep.subr.bf16.mxu0 0
  %4351 = vmatpush1.bf16.msra.mxu0 %v4145
  %4352 = vmatprep.subr.bf16.mxu0 0
  %4353 = vmatpush1.bf16.msra.mxu0 %v4146
  %4354 = vmatprep.subr.bf16.mxu0 0
  %4355 = vmatpush1.bf16.msra.mxu0 %v4147
  %4356 = vmatprep.mubr.bf16.mxu0 %v4293
  %4357 = vmatmul.mubr.bf16.gmra.mrb[0].mxu0 %v4292
  %v4358 = vpop.f32.mrb[0].mxu0
  %v4359 = vadd.f32 %v4167, %v4358
  %v4360 = vpop.f32.mrb[0].mxu0
  %v4361 = vpop.f32.mrb[0].mxu0
  %v4362 = vadd.f32 %v4172, %v4361
  %v4363 = vpop.f32.mrb[0].mxu0
  %4364 = vmatprep.mubr.bf16.mxu0 %v4295
  %4365 = vmatmul.mubr.bf16.gmra.mrb[0].mxu0 %v4294
  %v4366 = vpop.f32.mrb[0].mxu0
  %v4367 = vadd.f32 %v4177, %v4366
  %v4368 = vpop.f32.mrb[0].mxu0
  %v4369 = vpop.f32.mrb[0].mxu0
  %v4370 = vadd.f32 %v4182, %v4369
  %v4371 = vpop.f32.mrb[0].mxu0
  %4372 = vmatprep.mubr.bf16.mxu0 %v4297
  %4373 = vmatmul.mubr.bf16.gmra.mrb[0].mxu0 %v4296
  %v4374 = vpop.f32.mrb[0].mxu0
  %v4375 = vadd.f32 %v4187, %v4374
  %v4376 = vpop.f32.mrb[0].mxu0
  %v4377 = vpop.f32.mrb[0].mxu0
  %v4378 = vadd.f32 %v4192, %v4377
  %v4379 = vpop.f32.mrb[0].mxu0
  %4380 = vmatprep.mubr.bf16.mxu0 %v4299
  %4381 = vmatmul.mubr.bf16.gmra.mrb[0].mxu0 %v4298
  %v4382 = vpop.f32.mrb[0].mxu0
  %v4383 = vadd.f32 %v4197, %v4382
  %v4384 = vpop.f32.mrb[0].mxu0
  %v4385 = vpop.f32.mrb[0].mxu0
  %v4386 = vadd.f32 %v4202, %v4385
  %v4387 = vpop.f32.mrb[0].mxu0
  %4388 = vmatprep.mubr.bf16.mxu0 %v4301
  %4389 = vmatmul.mubr.bf16.gmra.mrb[0].mxu0 %v4300
  %v4390 = vpop.f32.mrb[0].mxu0
  %v4391 = vadd.f32 %v4207, %v4390
  %v4392 = vpop.f32.mrb[0].mxu0
  %v4393 = vpop.f32.mrb[0].mxu0
  %v4394 = vadd.f32 %v4212, %v4393
  %v4395 = vpop.f32.mrb[0].mxu0
  %4396 = vmatprep.mubr.bf16.mxu0 %v4303
  %4397 = vmatmul.mubr.bf16.gmra.mrb[0].mxu0 %v4302
  %v4398 = vpop.f32.mrb[0].mxu0
  %v4399 = vadd.f32 %v4217, %v4398
  %v4400 = vpop.f32.mrb[0].mxu0
  %v4401 = vpop.f32.mrb[0].mxu0
  %v4402 = vadd.f32 %v4222, %v4401
  %v4403 = vpop.f32.mrb[0].mxu0
  %4404 = vmatprep.mubr.bf16.mxu0 %v4305
  %4405 = vmatmul.mubr.bf16.gmra.mrb[0].mxu0 %v4304
  %v4406 = vpop.f32.mrb[0].mxu0
  %v4407 = vadd.f32 %v4227, %v4406
  %v4408 = vpop.f32.mrb[0].mxu0
  %v4409 = vpop.f32.mrb[0].mxu0
  %v4410 = vadd.f32 %v4232, %v4409
  %v4411 = vpop.f32.mrb[0].mxu0
  %4412 = vmatprep.mubr.bf16.mxu0 %v4307
  %4413 = vmatmul.mubr.bf16.gmra.mrb[0].mxu0 %v4306
  %v4414 = vpop.f32.mrb[0].mxu0
  %v4415 = vadd.f32 %v4237, %v4414
  %v4416 = vpop.f32.mrb[0].mxu0
  %v4417 = vpop.f32.mrb[0].mxu0
  %v4418 = vadd.f32 %v4242, %v4417
  %v4419 = vpop.f32.mrb[0].mxu0
  %4420 = vdwg.mxu0
  %v4421 = vmul.f32 %v4359, 0.5
  %v4422 = vmul.f32 %v4362, 0.5
  %v4423 = vmul.f32 %v4367, 0.5
  %v4424 = vmul.f32 %v4370, 0.5
  %v4425 = vmul.f32 %v4375, 0.5
  %v4426 = vmul.f32 %v4378, 0.5
  %v4427 = vmul.f32 %v4383, 0.5
  %v4428 = vmul.f32 %v4386, 0.5
  %v4429 = vmul.f32 %v4391, 0.5
  %v4430 = vmul.f32 %v4394, 0.5
  %v4431 = vmul.f32 %v4399, 0.5
  %v4432 = vmul.f32 %v4402, 0.5
  %v4433 = vmul.f32 %v4407, 0.5
  %v4434 = vmul.f32 %v4410, 0.5
  %v4435 = vmul.f32 %v4415, 0.5
  %v4436 = vmul.f32 %v4418, 0.5
  %v4437 = vtanh.pop %v4421
  %v4438 = vtanh.pop %v4422
  %v4439 = vtanh.pop %v4423
  %v4440 = vtanh.pop %v4424
  %v4441 = vtanh.pop %v4425
  %v4442 = vtanh.pop %v4426
  %v4443 = vtanh.pop %v4427
  %v4444 = vtanh.pop %v4428
  %v4445 = vtanh.pop %v4429
  %v4446 = vtanh.pop %v4430
  %v4447 = vtanh.pop %v4431
  %v4448 = vtanh.pop %v4432
  %v4449 = vtanh.pop %v4433
  %v4450 = vtanh.pop %v4434
  %v4451 = vtanh.pop %v4435
  %v4452 = vtanh.pop %v4436
  %v4453 = vmul.f32 %v4437, 0.5
  %v4454 = vmul.f32 %v4438, 0.5
  %v4455 = vmul.f32 %v4439, 0.5
  %v4456 = vmul.f32 %v4440, 0.5
  %v4457 = vmul.f32 %v4441, 0.5
  %v4458 = vmul.f32 %v4442, 0.5
  %v4459 = vmul.f32 %v4443, 0.5
  %v4460 = vmul.f32 %v4444, 0.5
  %v4461 = vmul.f32 %v4445, 0.5
  %v4462 = vmul.f32 %v4446, 0.5
  %v4463 = vmul.f32 %v4447, 0.5
  %v4464 = vmul.f32 %v4448, 0.5
  %v4465 = vmul.f32 %v4449, 0.5
  %v4466 = vmul.f32 %v4450, 0.5
  %v4467 = vmul.f32 %v4451, 0.5
  %v4468 = vmul.f32 %v4452, 0.5
  %v4469 = vadd.f32 %v4453, 0.5
  %v4470 = vadd.f32 %v4454, 0.5
  %v4471 = vadd.f32 %v4455, 0.5
  %v4472 = vadd.f32 %v4456, 0.5
  %v4473 = vadd.f32 %v4457, 0.5
  %v4474 = vadd.f32 %v4458, 0.5
  %v4475 = vadd.f32 %v4459, 0.5
  %v4476 = vadd.f32 %v4460, 0.5
  %v4477 = vadd.f32 %v4461, 0.5
  %v4478 = vadd.f32 %v4462, 0.5
  %v4479 = vadd.f32 %v4463, 0.5
  %v4480 = vadd.f32 %v4464, 0.5
  %v4481 = vadd.f32 %v4465, 0.5
  %v4482 = vadd.f32 %v4466, 0.5
  %v4483 = vadd.f32 %v4467, 0.5
  %v4484 = vadd.f32 %v4468, 0.5
  %v4485 = vpack.c.bf16 %v4470, %v4469
  %v4486 = vpack.c.bf16 %v4472, %v4471
  %v4487 = vpack.c.bf16 %v4474, %v4473
  %v4488 = vpack.c.bf16 %v4476, %v4475
  %v4489 = vpack.c.bf16 %v4478, %v4477
  %v4490 = vpack.c.bf16 %v4480, %v4479
  %v4491 = vpack.c.bf16 %v4482, %v4481
  %v4492 = vpack.c.bf16 %v4484, %v4483
  %v4493 = vld [vmem:[%s7] sm:$0xf]
  %v4494 = vld [vmem:[%s7 + $0x4] sm:$0xf]
  %v4495 = vld [vmem:[%s7 + $0x8] sm:$0xf]
  %v4496 = vld [vmem:[%s7 + $0xc] sm:$0xf]
  %v4497 = vld [vmem:[%s7 + $0x10] sm:$0xf]
  %v4498 = vld [vmem:[%s7 + $0x14] sm:$0xf]
  %v4499 = vld [vmem:[%s7 + $0x18] sm:$0xf]
  %v4500 = vld [vmem:[%s7 + $0x1c] sm:$0xf]
  %v4501 = vld [vmem:[%s7 + $0x20] sm:$0xf]
  %v4502 = vld [vmem:[%s7 + $0x24] sm:$0xf]
  %v4503 = vld [vmem:[%s7 + $0x28] sm:$0xf]
  %v4504 = vld [vmem:[%s7 + $0x2c] sm:$0xf]
  %v4505 = vld [vmem:[%s7 + $0x30] sm:$0xf]
  %v4506 = vld [vmem:[%s7 + $0x34] sm:$0xf]
  %v4507 = vld [vmem:[%s7 + $0x38] sm:$0xf]
  %v4508 = vld [vmem:[%s7 + $0x3c] sm:$0xf]
  %v4509 = vld [vmem:[%s8] sm:$0xff]
  %v4510 = vld [vmem:[%s8 + $0x8] sm:$0xff]
  %v4511 = vld [vmem:[%s8 + $0x10] sm:$0xff]
  %v4512 = vld [vmem:[%s8 + $0x18] sm:$0xff]
  %v4513 = vld [vmem:[%s8 + $0x20] sm:$0xff]
  %v4514 = vld [vmem:[%s8 + $0x28] sm:$0xff]
  %v4515 = vld [vmem:[%s8 + $0x30] sm:$0xff]
  %v4516 = vld [vmem:[%s8 + $0x38] sm:$0xff]
  %v4517 = vld [vmem:[%s8 + $0x40] sm:$0xff]
  %v4518 = vld [vmem:[%s8 + $0x48] sm:$0xff]
  %v4519 = vld [vmem:[%s8 + $0x50] sm:$0xff]
  %v4520 = vld [vmem:[%s8 + $0x58] sm:$0xff]
  %v4521 = vld [vmem:[%s8 + $0x60] sm:$0xff]
  %v4522 = vld [vmem:[%s8 + $0x68] sm:$0xff]
  %v4523 = vld [vmem:[%s8 + $0x70] sm:$0xff]
  %v4524 = vld [vmem:[%s8 + $0x78] sm:$0xff]
  %4526 = vset.pattern.permute.xlu0 0
  %4527 = vperm.xlu0 %4526, %v4509
  %v4528 = vpop.permute.xlu0 %4527
  %4531 = vset.pattern.permute.xlu0 0
  %4532 = vperm.xlu0 %4531, %v4510
  %v4533 = vpop.permute.xlu0 %4532
  %4536 = vset.pattern.permute.xlu0 0
  %4537 = vperm.xlu0 %4536, %v4511
  %v4538 = vpop.permute.xlu0 %4537
  %4541 = vset.pattern.permute.xlu0 0
  %4542 = vperm.xlu0 %4541, %v4512
  %v4543 = vpop.permute.xlu0 %4542
  %4546 = vset.pattern.permute.xlu0 0
  %4547 = vperm.xlu0 %4546, %v4513
  %v4548 = vpop.permute.xlu0 %4547
  %4551 = vset.pattern.permute.xlu0 0
  %4552 = vperm.xlu0 %4551, %v4514
  %v4553 = vpop.permute.xlu0 %4552
  %4556 = vset.pattern.permute.xlu0 0
  %4557 = vperm.xlu0 %4556, %v4515
  %v4558 = vpop.permute.xlu0 %4557
  %4561 = vset.pattern.permute.xlu0 0
  %4562 = vperm.xlu0 %4561, %v4516
  %v4563 = vpop.permute.xlu0 %4562
  %4566 = vset.pattern.permute.xlu0 0
  %4567 = vperm.xlu0 %4566, %v4517
  %v4568 = vpop.permute.xlu0 %4567
  %4571 = vset.pattern.permute.xlu0 0
  %4572 = vperm.xlu0 %4571, %v4518
  %v4573 = vpop.permute.xlu0 %4572
  %4576 = vset.pattern.permute.xlu0 0
  %4577 = vperm.xlu0 %4576, %v4519
  %v4578 = vpop.permute.xlu0 %4577
  %4581 = vset.pattern.permute.xlu0 0
  %4582 = vperm.xlu0 %4581, %v4520
  %v4583 = vpop.permute.xlu0 %4582
  %4586 = vset.pattern.permute.xlu0 0
  %4587 = vperm.xlu0 %4586, %v4521
  %v4588 = vpop.permute.xlu0 %4587
  %4591 = vset.pattern.permute.xlu0 0
  %4592 = vperm.xlu0 %4591, %v4522
  %v4593 = vpop.permute.xlu0 %4592
  %4596 = vset.pattern.permute.xlu0 0
  %4597 = vperm.xlu0 %4596, %v4523
  %v4598 = vpop.permute.xlu0 %4597
  %4601 = vset.pattern.permute.xlu0 0
  %4602 = vperm.xlu0 %4601, %v4524
  %v4603 = vpop.permute.xlu0 %4602
  %v4621 = vunpack.c.l.b16 %v4493
  %v4622 = vunpack.c.l.b16 %v4494
  %v4623 = vunpack.c.l.b16 %v4495
  %v4624 = vunpack.c.l.b16 %v4496
  %v4625 = vunpack.c.l.b16 %v4497
  %v4626 = vunpack.c.l.b16 %v4498
  %v4627 = vunpack.c.l.b16 %v4499
  %v4628 = vunpack.c.l.b16 %v4500
  %v4629 = vunpack.c.l.b16 %v4501
  %v4630 = vunpack.c.l.b16 %v4502
  %v4631 = vunpack.c.l.b16 %v4503
  %v4632 = vunpack.c.l.b16 %v4504
  %v4633 = vunpack.c.l.b16 %v4505
  %v4634 = vunpack.c.l.b16 %v4506
  %v4635 = vunpack.c.l.b16 %v4507
  %v4636 = vunpack.c.l.b16 %v4508
  %v4637 = vpack.c.b16 %v4622, %v4621
  %v4638 = vpack.c.b16 %v4624, %v4623
  %v4639 = vpack.c.b16 %v4626, %v4625
  %v4640 = vpack.c.b16 %v4628, %v4627
  %v4641 = vpack.c.b16 %v4630, %v4629
  %v4642 = vpack.c.b16 %v4632, %v4631
  %v4643 = vpack.c.b16 %v4634, %v4633
  %v4644 = vpack.c.b16 %v4636, %v4635
  %4653 = vmatprep.subr.bf16.mxu0 0
  %4654 = vmatpush1.bf16.msra.mxu0 %v4485
  %4655 = vmatprep.subr.bf16.mxu0 0
  %4656 = vmatpush1.bf16.msra.mxu0 %v4486
  %4657 = vmatprep.subr.bf16.mxu0 0
  %4658 = vmatpush1.bf16.msra.mxu0 %v4487
  %4659 = vmatprep.subr.bf16.mxu0 0
  %4660 = vmatpush1.bf16.msra.mxu0 %v4488
  %4661 = vmatprep.subr.bf16.mxu0 0
  %4662 = vmatpush1.bf16.msra.mxu0 %v4489
  %4663 = vmatprep.subr.bf16.mxu0 0
  %4664 = vmatpush1.bf16.msra.mxu0 %v4490
  %4665 = vmatprep.subr.bf16.mxu0 0
  %4666 = vmatpush1.bf16.msra.mxu0 %v4491
  %4667 = vmatprep.subr.bf16.mxu0 0
  %4668 = vmatpush1.bf16.msra.mxu0 %v4492
  %4669 = vmatprep.subr.bf16.mxu0 0
  %4670 = vmatpush1.bf16.msra.mxu0 0
  %4671 = vmatprep.subr.bf16.mxu0 0
  %4672 = vmatpush1.bf16.msra.mxu0 0
  %4673 = vmatprep.subr.bf16.mxu0 0
  %4674 = vmatpush1.bf16.msra.mxu0 0
  %4675 = vmatprep.subr.bf16.mxu0 0
  %4676 = vmatpush1.bf16.msra.mxu0 0
  %4677 = vmatprep.subr.bf16.mxu0 0
  %4678 = vmatpush1.bf16.msra.mxu0 0
  %4679 = vmatprep.subr.bf16.mxu0 0
  %4680 = vmatpush1.bf16.msra.mxu0 0
  %4681 = vmatprep.subr.bf16.mxu0 0
  %4682 = vmatpush1.bf16.msra.mxu0 0
  %4683 = vmatprep.subr.bf16.mxu0 0
  %4684 = vmatpush1.bf16.msra.mxu0 0
  %4685 = vmatprep.mubr.bf16.mxu0 0
  %4686 = vmatmul.mubr.bf16.gmra.mrb[0].mxu0 %v4637
  %v4687 = vpop.f32.mrb[0].mxu0
  %v4688 = vadd.f32 %v4528, %v4687
  %v4689 = vpop.f32.mrb[0].mxu0
  %v4690 = vpop.f32.mrb[0].mxu0
  %v4691 = vadd.f32 %v4533, %v4690
  %v4692 = vpop.f32.mrb[0].mxu0
  %4693 = vmatprep.mubr.bf16.mxu0 0
  %4694 = vmatmul.mubr.bf16.gmra.mrb[0].mxu0 %v4638
  %v4695 = vpop.f32.mrb[0].mxu0
  %v4696 = vadd.f32 %v4538, %v4695
  %v4697 = vpop.f32.mrb[0].mxu0
  %v4698 = vpop.f32.mrb[0].mxu0
  %v4699 = vadd.f32 %v4543, %v4698
  %v4700 = vpop.f32.mrb[0].mxu0
  %4701 = vmatprep.mubr.bf16.mxu0 0
  %4702 = vmatmul.mubr.bf16.gmra.mrb[0].mxu0 %v4639
  %v4703 = vpop.f32.mrb[0].mxu0
  %v4704 = vadd.f32 %v4548, %v4703
  %v4705 = vpop.f32.mrb[0].mxu0
  %v4706 = vpop.f32.mrb[0].mxu0
  %v4707 = vadd.f32 %v4553, %v4706
  %v4708 = vpop.f32.mrb[0].mxu0
  %4709 = vmatprep.mubr.bf16.mxu0 0
  %4710 = vmatmul.mubr.bf16.gmra.mrb[0].mxu0 %v4640
  %v4711 = vpop.f32.mrb[0].mxu0
  %v4712 = vadd.f32 %v4558, %v4711
  %v4713 = vpop.f32.mrb[0].mxu0
  %v4714 = vpop.f32.mrb[0].mxu0
  %v4715 = vadd.f32 %v4563, %v4714
  %v4716 = vpop.f32.mrb[0].mxu0
  %4717 = vmatprep.mubr.bf16.mxu0 0
  %4718 = vmatmul.mubr.bf16.gmra.mrb[0].mxu0 %v4641
  %v4719 = vpop.f32.mrb[0].mxu0
  %v4720 = vadd.f32 %v4568, %v4719
  %v4721 = vpop.f32.mrb[0].mxu0
  %v4722 = vpop.f32.mrb[0].mxu0
  %v4723 = vadd.f32 %v4573, %v4722
  %v4724 = vpop.f32.mrb[0].mxu0
  %4725 = vmatprep.mubr.bf16.mxu0 0
  %4726 = vmatmul.mubr.bf16.gmra.mrb[0].mxu0 %v4642
  %v4727 = vpop.f32.mrb[0].mxu0
  %v4728 = vadd.f32 %v4578, %v4727
  %v4729 = vpop.f32.mrb[0].mxu0
  %v4730 = vpop.f32.mrb[0].mxu0
  %v4731 = vadd.f32 %v4583, %v4730
  %v4732 = vpop.f32.mrb[0].mxu0
  %4733 = vmatprep.mubr.bf16.mxu0 0
  %4734 = vmatmul.mubr.bf16.gmra.mrb[0].mxu0 %v4643
  %v4735 = vpop.f32.mrb[0].mxu0
  %v4736 = vadd.f32 %v4588, %v4735
  %v4737 = vpop.f32.mrb[0].mxu0
  %v4738 = vpop.f32.mrb[0].mxu0
  %v4739 = vadd.f32 %v4593, %v4738
  %v4740 = vpop.f32.mrb[0].mxu0
  %4741 = vmatprep.mubr.bf16.mxu0 0
  %4742 = vmatmul.mubr.bf16.gmra.mrb[0].mxu0 %v4644
  %v4743 = vpop.f32.mrb[0].mxu0
  %v4744 = vadd.f32 %v4598, %v4743
  %v4745 = vpop.f32.mrb[0].mxu0
  %v4746 = vpop.f32.mrb[0].mxu0
  %v4747 = vadd.f32 %v4603, %v4746
  %v4748 = vpop.f32.mrb[0].mxu0
  %4749 = vdwg.mxu0
  %v4750 = vmul.f32 %v4688, 0.5
  %v4751 = vmul.f32 %v4691, 0.5
  %v4752 = vmul.f32 %v4696, 0.5
  %v4753 = vmul.f32 %v4699, 0.5
  %v4754 = vmul.f32 %v4704, 0.5
  %v4755 = vmul.f32 %v4707, 0.5
  %v4756 = vmul.f32 %v4712, 0.5
  %v4757 = vmul.f32 %v4715, 0.5
  %v4758 = vmul.f32 %v4720, 0.5
  %v4759 = vmul.f32 %v4723, 0.5
  %v4760 = vmul.f32 %v4728, 0.5
  %v4761 = vmul.f32 %v4731, 0.5
  %v4762 = vmul.f32 %v4736, 0.5
  %v4763 = vmul.f32 %v4739, 0.5
  %v4764 = vmul.f32 %v4744, 0.5
  %v4765 = vmul.f32 %v4747, 0.5
  %v4766 = vtanh.pop %v4750
  %v4767 = vtanh.pop %v4751
  %v4768 = vtanh.pop %v4752
  %v4769 = vtanh.pop %v4753
  %v4770 = vtanh.pop %v4754
  %v4771 = vtanh.pop %v4755
  %v4772 = vtanh.pop %v4756
  %v4773 = vtanh.pop %v4757
  %v4774 = vtanh.pop %v4758
  %v4775 = vtanh.pop %v4759
  %v4776 = vtanh.pop %v4760
  %v4777 = vtanh.pop %v4761
  %v4778 = vtanh.pop %v4762
  %v4779 = vtanh.pop %v4763
  %v4780 = vtanh.pop %v4764
  %v4781 = vtanh.pop %v4765
  %v4782 = vmul.f32 %v4766, 0.5
  %v4783 = vmul.f32 %v4767, 0.5
  %v4784 = vmul.f32 %v4768, 0.5
  %v4785 = vmul.f32 %v4769, 0.5
  %v4786 = vmul.f32 %v4770, 0.5
  %v4787 = vmul.f32 %v4771, 0.5
  %v4788 = vmul.f32 %v4772, 0.5
  %v4789 = vmul.f32 %v4773, 0.5
  %v4790 = vmul.f32 %v4774, 0.5
  %v4791 = vmul.f32 %v4775, 0.5
  %v4792 = vmul.f32 %v4776, 0.5
  %v4793 = vmul.f32 %v4777, 0.5
  %v4794 = vmul.f32 %v4778, 0.5
  %v4795 = vmul.f32 %v4779, 0.5
  %v4796 = vmul.f32 %v4780, 0.5
  %v4797 = vmul.f32 %v4781, 0.5
  %v4798 = vadd.f32 %v4782, 0.5
  %v4799 = vadd.f32 %v4783, 0.5
  %v4800 = vadd.f32 %v4784, 0.5
  %v4801 = vadd.f32 %v4785, 0.5
  %v4802 = vadd.f32 %v4786, 0.5
  %v4803 = vadd.f32 %v4787, 0.5
  %v4804 = vadd.f32 %v4788, 0.5
  %v4805 = vadd.f32 %v4789, 0.5
  %v4806 = vadd.f32 %v4790, 0.5
  %v4807 = vadd.f32 %v4791, 0.5
  %v4808 = vadd.f32 %v4792, 0.5
  %v4809 = vadd.f32 %v4793, 0.5
  %v4810 = vadd.f32 %v4794, 0.5
  %v4811 = vadd.f32 %v4795, 0.5
  %v4812 = vadd.f32 %v4796, 0.5
  %v4813 = vadd.f32 %v4797, 0.5
  %v4814 = vpack.c.bf16 %v4799, %v4798
  %v4815 = vpack.c.bf16 %v4801, %v4800
  %v4816 = vpack.c.bf16 %v4803, %v4802
  %v4817 = vpack.c.bf16 %v4805, %v4804
  %v4818 = vpack.c.bf16 %v4807, %v4806
  %v4819 = vpack.c.bf16 %v4809, %v4808
  %v4820 = vpack.c.bf16 %v4811, %v4810
  %v4821 = vpack.c.bf16 %v4813, %v4812
  %v4822 = vld [vmem:[%s9] sm:$0xf]
  %v4823 = vld [vmem:[%s9 + $0x4] sm:$0xf]
  %v4824 = vld [vmem:[%s9 + $0x8] sm:$0xf]
  %v4825 = vld [vmem:[%s9 + $0xc] sm:$0xf]
  %v4826 = vld [vmem:[%s9 + $0x10] sm:$0xf]
  %v4827 = vld [vmem:[%s9 + $0x14] sm:$0xf]
  %v4828 = vld [vmem:[%s9 + $0x18] sm:$0xf]
  %v4829 = vld [vmem:[%s9 + $0x1c] sm:$0xf]
  %v4830 = vld [vmem:[%s9 + $0x20] sm:$0xf]
  %v4831 = vld [vmem:[%s9 + $0x24] sm:$0xf]
  %v4832 = vld [vmem:[%s9 + $0x28] sm:$0xf]
  %v4833 = vld [vmem:[%s9 + $0x2c] sm:$0xf]
  %v4834 = vld [vmem:[%s9 + $0x30] sm:$0xf]
  %v4835 = vld [vmem:[%s9 + $0x34] sm:$0xf]
  %v4836 = vld [vmem:[%s9 + $0x38] sm:$0xf]
  %v4837 = vld [vmem:[%s9 + $0x3c] sm:$0xf]
  %v4838 = vld [vmem:[%s10] sm:$0xff]
  %v4839 = vld [vmem:[%s10 + $0x8] sm:$0xff]
  %v4840 = vld [vmem:[%s10 + $0x10] sm:$0xff]
  %v4841 = vld [vmem:[%s10 + $0x18] sm:$0xff]
  %v4842 = vld [vmem:[%s10 + $0x20] sm:$0xff]
  %v4843 = vld [vmem:[%s10 + $0x28] sm:$0xff]
  %v4844 = vld [vmem:[%s10 + $0x30] sm:$0xff]
  %v4845 = vld [vmem:[%s10 + $0x38] sm:$0xff]
  %v4846 = vld [vmem:[%s10 + $0x40] sm:$0xff]
  %v4847 = vld [vmem:[%s10 + $0x48] sm:$0xff]
  %v4848 = vld [vmem:[%s10 + $0x50] sm:$0xff]
  %v4849 = vld [vmem:[%s10 + $0x58] sm:$0xff]
  %v4850 = vld [vmem:[%s10 + $0x60] sm:$0xff]
  %v4851 = vld [vmem:[%s10 + $0x68] sm:$0xff]
  %v4852 = vld [vmem:[%s10 + $0x70] sm:$0xff]
  %v4853 = vld [vmem:[%s10 + $0x78] sm:$0xff]
  %4855 = vset.pattern.permute.xlu0 0
  %4856 = vperm.xlu0 %4855, %v4838
  %v4857 = vpop.permute.xlu0 %4856
  %4860 = vset.pattern.permute.xlu0 0
  %4861 = vperm.xlu0 %4860, %v4839
  %v4862 = vpop.permute.xlu0 %4861
  %4865 = vset.pattern.permute.xlu0 0
  %4866 = vperm.xlu0 %4865, %v4840
  %v4867 = vpop.permute.xlu0 %4866
  %4870 = vset.pattern.permute.xlu0 0
  %4871 = vperm.xlu0 %4870, %v4841
  %v4872 = vpop.permute.xlu0 %4871
  %4875 = vset.pattern.permute.xlu0 0
  %4876 = vperm.xlu0 %4875, %v4842
  %v4877 = vpop.permute.xlu0 %4876
  %4880 = vset.pattern.permute.xlu0 0
  %4881 = vperm.xlu0 %4880, %v4843
  %v4882 = vpop.permute.xlu0 %4881
  %4885 = vset.pattern.permute.xlu0 0
  %4886 = vperm.xlu0 %4885, %v4844
  %v4887 = vpop.permute.xlu0 %4886
  %4890 = vset.pattern.permute.xlu0 0
  %4891 = vperm.xlu0 %4890, %v4845
  %v4892 = vpop.permute.xlu0 %4891
  %4895 = vset.pattern.permute.xlu0 0
  %4896 = vperm.xlu0 %4895, %v4846
  %v4897 = vpop.permute.xlu0 %4896
  %4900 = vset.pattern.permute.xlu0 0
  %4901 = vperm.xlu0 %4900, %v4847
  %v4902 = vpop.permute.xlu0 %4901
  %4905 = vset.pattern.permute.xlu0 0
  %4906 = vperm.xlu0 %4905, %v4848
  %v4907 = vpop.permute.xlu0 %4906
  %4910 = vset.pattern.permute.xlu0 0
  %4911 = vperm.xlu0 %4910, %v4849
  %v4912 = vpop.permute.xlu0 %4911
  %4915 = vset.pattern.permute.xlu0 0
  %4916 = vperm.xlu0 %4915, %v4850
  %v4917 = vpop.permute.xlu0 %4916
  %4920 = vset.pattern.permute.xlu0 0
  %4921 = vperm.xlu0 %4920, %v4851
  %v4922 = vpop.permute.xlu0 %4921
  %4925 = vset.pattern.permute.xlu0 0
  %4926 = vperm.xlu0 %4925, %v4852
  %v4927 = vpop.permute.xlu0 %4926
  %4930 = vset.pattern.permute.xlu0 0
  %4931 = vperm.xlu0 %4930, %v4853
  %v4932 = vpop.permute.xlu0 %4931
  %v4950 = vunpack.c.l.b16 %v4822
  %v4951 = vunpack.c.l.b16 %v4823
  %v4952 = vunpack.c.l.b16 %v4824
  %v4953 = vunpack.c.l.b16 %v4825
  %v4954 = vunpack.c.l.b16 %v4826
  %v4955 = vunpack.c.l.b16 %v4827
  %v4956 = vunpack.c.l.b16 %v4828
  %v4957 = vunpack.c.l.b16 %v4829
  %v4958 = vunpack.c.l.b16 %v4830
  %v4959 = vunpack.c.l.b16 %v4831
  %v4960 = vunpack.c.l.b16 %v4832
  %v4961 = vunpack.c.l.b16 %v4833
  %v4962 = vunpack.c.l.b16 %v4834
  %v4963 = vunpack.c.l.b16 %v4835
  %v4964 = vunpack.c.l.b16 %v4836
  %v4965 = vunpack.c.l.b16 %v4837
  %v4966 = vpack.c.b16 %v4951, %v4950
  %v4967 = vpack.c.b16 %v4953, %v4952
  %v4968 = vpack.c.b16 %v4955, %v4954
  %v4969 = vpack.c.b16 %v4957, %v4956
  %v4970 = vpack.c.b16 %v4959, %v4958
  %v4971 = vpack.c.b16 %v4961, %v4960
  %v4972 = vpack.c.b16 %v4963, %v4962
  %v4973 = vpack.c.b16 %v4965, %v4964
  %4982 = vmatprep.subr.bf16.mxu0 0
  %4983 = vmatpush1.bf16.msra.mxu0 %v4814
  %4984 = vmatprep.subr.bf16.mxu0 0
  %4985 = vmatpush1.bf16.msra.mxu0 %v4815
  %4986 = vmatprep.subr.bf16.mxu0 0
  %4987 = vmatpush1.bf16.msra.mxu0 %v4816
  %4988 = vmatprep.subr.bf16.mxu0 0
  %4989 = vmatpush1.bf16.msra.mxu0 %v4817
  %4990 = vmatprep.subr.bf16.mxu0 0
  %4991 = vmatpush1.bf16.msra.mxu0 %v4818
  %4992 = vmatprep.subr.bf16.mxu0 0
  %4993 = vmatpush1.bf16.msra.mxu0 %v4819
  %4994 = vmatprep.subr.bf16.mxu0 0
  %4995 = vmatpush1.bf16.msra.mxu0 %v4820
  %4996 = vmatprep.subr.bf16.mxu0 0
  %4997 = vmatpush1.bf16.msra.mxu0 %v4821
  %4998 = vmatprep.subr.bf16.mxu0 0
  %4999 = vmatpush1.bf16.msra.mxu0 0
  %5000 = vmatprep.subr.bf16.mxu0 0
  %5001 = vmatpush1.bf16.msra.mxu0 0
  %5002 = vmatprep.subr.bf16.mxu0 0
  %5003 = vmatpush1.bf16.msra.mxu0 0
  %5004 = vmatprep.subr.bf16.mxu0 0
  %5005 = vmatpush1.bf16.msra.mxu0 0
  %5006 = vmatprep.subr.bf16.mxu0 0
  %5007 = vmatpush1.bf16.msra.mxu0 0
  %5008 = vmatprep.subr.bf16.mxu0 0
  %5009 = vmatpush1.bf16.msra.mxu0 0
  %5010 = vmatprep.subr.bf16.mxu0 0
  %5011 = vmatpush1.bf16.msra.mxu0 0
  %5012 = vmatprep.subr.bf16.mxu0 0
  %5013 = vmatpush1.bf16.msra.mxu0 0
  %5014 = vmatprep.mubr.bf16.mxu0 0
  %5015 = vmatmul.mubr.bf16.gmra.mrb[0].mxu0 %v4966
  %v5016 = vpop.f32.mrb[0].mxu0
  %v5017 = vadd.f32 %v4857, %v5016
  %v5018 = vpop.f32.mrb[0].mxu0
  %v5019 = vpop.f32.mrb[0].mxu0
  %v5020 = vadd.f32 %v4862, %v5019
  %v5021 = vpop.f32.mrb[0].mxu0
  %5022 = vmatprep.mubr.bf16.mxu0 0
  %5023 = vmatmul.mubr.bf16.gmra.mrb[0].mxu0 %v4967
  %v5024 = vpop.f32.mrb[0].mxu0
  %v5025 = vadd.f32 %v4867, %v5024
  %v5026 = vpop.f32.mrb[0].mxu0
  %v5027 = vpop.f32.mrb[0].mxu0
  %v5028 = vadd.f32 %v4872, %v5027
  %v5029 = vpop.f32.mrb[0].mxu0
  %5030 = vmatprep.mubr.bf16.mxu0 0
  %5031 = vmatmul.mubr.bf16.gmra.mrb[0].mxu0 %v4968
  %v5032 = vpop.f32.mrb[0].mxu0
  %v5033 = vadd.f32 %v4877, %v5032
  %v5034 = vpop.f32.mrb[0].mxu0
  %v5035 = vpop.f32.mrb[0].mxu0
  %v5036 = vadd.f32 %v4882, %v5035
  %v5037 = vpop.f32.mrb[0].mxu0
  %5038 = vmatprep.mubr.bf16.mxu0 0
  %5039 = vmatmul.mubr.bf16.gmra.mrb[0].mxu0 %v4969
  %v5040 = vpop.f32.mrb[0].mxu0
  %v5041 = vadd.f32 %v4887, %v5040
  %v5042 = vpop.f32.mrb[0].mxu0
  %v5043 = vpop.f32.mrb[0].mxu0
  %v5044 = vadd.f32 %v4892, %v5043
  %v5045 = vpop.f32.mrb[0].mxu0
  %5046 = vmatprep.mubr.bf16.mxu0 0
  %5047 = vmatmul.mubr.bf16.gmra.mrb[0].mxu0 %v4970
  %v5048 = vpop.f32.mrb[0].mxu0
  %v5049 = vadd.f32 %v4897, %v5048
  %v5050 = vpop.f32.mrb[0].mxu0
  %v5051 = vpop.f32.mrb[0].mxu0
  %v5052 = vadd.f32 %v4902, %v5051
  %v5053 = vpop.f32.mrb[0].mxu0
  %5054 = vmatprep.mubr.bf16.mxu0 0
  %5055 = vmatmul.mubr.bf16.gmra.mrb[0].mxu0 %v4971
  %v5056 = vpop.f32.mrb[0].mxu0
  %v5057 = vadd.f32 %v4907, %v5056
  %v5058 = vpop.f32.mrb[0].mxu0
  %v5059 = vpop.f32.mrb[0].mxu0
  %v5060 = vadd.f32 %v4912, %v5059
  %v5061 = vpop.f32.mrb[0].mxu0
  %5062 = vmatprep.mubr.bf16.mxu0 0
  %5063 = vmatmul.mubr.bf16.gmra.mrb[0].mxu0 %v4972
  %v5064 = vpop.f32.mrb[0].mxu0
  %v5065 = vadd.f32 %v4917, %v5064
  %v5066 = vpop.f32.mrb[0].mxu0
  %v5067 = vpop.f32.mrb[0].mxu0
  %v5068 = vadd.f32 %v4922, %v5067
  %v5069 = vpop.f32.mrb[0].mxu0
  %5070 = vmatprep.mubr.bf16.mxu0 0
  %5071 = vmatmul.mubr.bf16.gmra.mrb[0].mxu0 %v4973
  %v5072 = vpop.f32.mrb[0].mxu0
  %v5073 = vadd.f32 %v4927, %v5072
  %v5074 = vpop.f32.mrb[0].mxu0
  %v5075 = vpop.f32.mrb[0].mxu0
  %v5076 = vadd.f32 %v4932, %v5075
  %v5077 = vpop.f32.mrb[0].mxu0
  %5078 = vdwg.mxu0
  %5079 = vst.msk [vmem:[%s11] sm:$0xff] %vm4053, %v5017
  %5080 = vst.msk [vmem:[%s11 + $0x8] sm:$0xff] %vm4053, %v5020
  %5081 = vst.msk [vmem:[%s11 + $0x10] sm:$0xff] %vm4053, %v5025
  %5082 = vst.msk [vmem:[%s11 + $0x18] sm:$0xff] %vm4053, %v5028
  %5083 = vst.msk [vmem:[%s11 + $0x20] sm:$0xff] %vm4053, %v5033
  %5084 = vst.msk [vmem:[%s11 + $0x28] sm:$0xff] %vm4053, %v5036
  %5085 = vst.msk [vmem:[%s11 + $0x30] sm:$0xff] %vm4053, %v5041
  %5086 = vst.msk [vmem:[%s11 + $0x38] sm:$0xff] %vm4053, %v5044
  %5087 = vst.msk [vmem:[%s11 + $0x40] sm:$0xff] %vm4053, %v5049
  %5088 = vst.msk [vmem:[%s11 + $0x48] sm:$0xff] %vm4053, %v5052
  %5089 = vst.msk [vmem:[%s11 + $0x50] sm:$0xff] %vm4053, %v5057
  %5090 = vst.msk [vmem:[%s11 + $0x58] sm:$0xff] %vm4053, %v5060
  %5091 = vst.msk [vmem:[%s11 + $0x60] sm:$0xff] %vm4053, %v5065
  %5092 = vst.msk [vmem:[%s11 + $0x68] sm:$0xff] %vm4053, %v5068
  %5093 = vst.msk [vmem:[%s11 + $0x70] sm:$0xff] %vm4053, %v5073
  %5094 = vst.msk [vmem:[%s11 + $0x78] sm:$0xff] %vm4053, %v5076
  // Predicated region
  $region46: #{lenet_forward.1} parent=0 // pred_check
    _
  $region47: #{lenet_forward.1} parent=0 // pred_check_branch
    %5096 = sbr.rel (0) target = $region49
  $region48: #{lenet_forward.1} parent=0 // pred_region
    _
  $region49: #{lenet_forward.1} parent=0 // pred_fallthru
    _
  // Predicated region
  $region50: #{lenet_forward.1} parent=0 // pred_check
    _
  $region51: #{lenet_forward.1} parent=0 // pred_check_branch
    %5098 = sbr.rel (0) target = $region53
  $region52: #{lenet_forward.1} parent=0 // pred_region
    _
  $region53: #{lenet_forward.1} parent=0 // pred_fallthru
    _

</llo_original>
